<compile_context>
chip_gen: v5e
topology: v5e:2x2
jax: 0.10.0
libtpu: 0.0.40
codegen_flags: <defaults>
</compile_context>

<pallas_src>
import math

import jax
import jax.numpy as jnp
from jax.experimental import pallas as pl
from jax.experimental.pallas import tpu as pltpu

# ----------------------------- config ---------------------------------------
VOCAB = 100
MAX_POS = 32
HIDDEN = 32
N_HEADS = 4
HEAD_DIM = HIDDEN // N_HEADS
FFN = 64
N_LAYERS_BERT = 2
N_LAYERS_GPT2 = 2
NUM_LABELS = 3
BERT_EPS = 1e-12
GPT2_EPS = 1e-5


# --------------------------- in-kernel math helpers --------------------------
def _gelu_erf(x):
    # BERT "gelu" (exact, erf-based)
    return x * 0.5 * (1.0 + jax.lax.erf(x / jnp.sqrt(jnp.float32(2.0))))


def _gelu_new(x):
    # GPT2 "gelu_new" (tanh approximation)
    c = jnp.sqrt(jnp.float32(2.0 / jnp.pi))
    return 0.5 * x * (1.0 + jnp.tanh(c * (x + 0.044715 * x * x * x)))


# ----------------------------- fused kernel ----------------------------------
def _fused_forward_kernel(
    # per-batch inputs
    mask_ref, emb_ref,
    # shared
    wpe_ref, emb_ln_g_ref, emb_ln_b_ref,
    # BERT stacks  [L, ...]
    bqkv_w_ref, bqkv_b_ref, bao_w_ref, bao_b_ref, battn_ln_g_ref, battn_ln_b_ref,
    bi_w_ref, bi_b_ref, bo_w_ref, bo_b_ref, bout_ln_g_ref, bout_ln_b_ref,
    # GPT2 stacks [L, ...]
    gln1_g_ref, gln1_b_ref, gattn_w_ref, gattn_b_ref, gproj_w_ref, gproj_b_ref,
    gln2_g_ref, gln2_b_ref, gfc_w_ref, gfc_b_ref, gmproj_w_ref, gmproj_b_ref,
    # final LN + classifier
    lnf_g_ref, lnf_b_ref, cls_w_ref, cls_b_ref,
    # output
    out_ref,
):
    S = emb_ref.shape[0]
    scale = 1.0 / math.sqrt(HEAD_DIM)

    def ln(x, g, b, eps):
        mean = jnp.mean(x, axis=-1, keepdims=True)
        var = jnp.mean(jnp.square(x - mean), axis=-1, keepdims=True)
        return (x - mean) * jax.lax.rsqrt(var + eps) * g + b

    def mm(x, w, b):
        return jnp.dot(x, w, preferred_element_type=jnp.float32) + b

    def mha_proj(qkv, bias, w_out, b_out):
        """Multi-head attention + output projection, heads unrolled in-kernel.

        qkv: [S, 3H] (fused Q|K|V columns); bias broadcastable to [S, S];
        w_out: [H, H].  The head-concat is folded into the output projection
        as a sum of per-head block matmuls (no reshape/transpose/concat).
        """
        out = None
        for h in range(N_HEADS):
            lo = h * HEAD_DIM
            hi = lo + HEAD_DIM
            q_h = qkv[:, lo:hi]
            k_h = qkv[:, HIDDEN + lo:HIDDEN + hi]
            v_h = qkv[:, 2 * HIDDEN + lo:2 * HIDDEN + hi]
            # contract last dims directly -> no materialized K transpose
            s = jax.lax.dot_general(
                q_h, k_h, (((1,), (1,)), ((), ())),
                preferred_element_type=jnp.float32) * scale + bias
            s = s - jnp.max(s, axis=-1, keepdims=True)
            p = jnp.exp(s)
            # reciprocal on the EUP slot instead of a VALU divide
            p = p * pl.reciprocal(jnp.sum(p, axis=-1, keepdims=True), approx=True)
            ctx_h = jnp.dot(p, v_h, preferred_element_type=jnp.float32)       # [S, Dh]
            part = jnp.dot(ctx_h, w_out[lo:hi, :],
                           preferred_element_type=jnp.float32)                # [S, H]
            out = part if out is None else out + part
        return out + b_out

    # small parameter stacks, loaded once into values
    bqkv_b = bqkv_b_ref[...]
    bao_b = bao_b_ref[...]
    battn_ln_g = battn_ln_g_ref[...]
    battn_ln_b = battn_ln_b_ref[...]
    bi_b = bi_b_ref[...]
    bo_b = bo_b_ref[...]
    bout_ln_g = bout_ln_g_ref[...]
    bout_ln_b = bout_ln_b_ref[...]
    gln1_g = gln1_g_ref[...]
    gln1_b = gln1_b_ref[...]
    gattn_b = gattn_b_ref[...]
    gproj_b = gproj_b_ref[...]
    gln2_g = gln2_g_ref[...]
    gln2_b = gln2_b_ref[...]
    gfc_b = gfc_b_ref[...]
    gmproj_b = gmproj_b_ref[...]

    # ---------------- BERT encoder ----------------
    x = ln(emb_ref[...], emb_ln_g_ref[...], emb_ln_b_ref[...], BERT_EPS)     # [S, H]
    # extended attention mask built in-kernel from the [1, S] padding mask
    pad_bias = (1.0 - mask_ref[...]) * -10000.0                              # [1, S]

    for l in range(N_LAYERS_BERT):
        qkv = mm(x, bqkv_w_ref[l], bqkv_b[l:l + 1, :])                       # fused Q/K/V
        attn_out = mha_proj(qkv, pad_bias, bao_w_ref[l], bao_b[l:l + 1, :])
        x = ln(attn_out + x, battn_ln_g[l:l + 1, :], battn_ln_b[l:l + 1, :], BERT_EPS)
        inter = _gelu_erf(mm(x, bi_w_ref[l], bi_b[l:l + 1, :]))
        ffn_out = mm(inter, bo_w_ref[l], bo_b[l:l + 1, :])
        x = ln(ffn_out + x, bout_ln_g[l:l + 1, :], bout_ln_b[l:l + 1, :], BERT_EPS)

    # ---------------- GPT2 decoder on inputs_embeds ----------------
    x = x + wpe_ref[...]
    rows = jax.lax.broadcasted_iota(jnp.int32, (S, S), 0)
    cols = jax.lax.broadcasted_iota(jnp.int32, (S, S), 1)
    causal_bias = jnp.where(cols <= rows, jnp.float32(0.0), jnp.float32(-1e9))

    for l in range(N_LAYERS_GPT2):
        residual = x
        h = ln(x, gln1_g[l:l + 1, :], gln1_b[l:l + 1, :], GPT2_EPS)
        qkv = mm(h, gattn_w_ref[l], gattn_b[l:l + 1, :])
        attn_out = mha_proj(qkv, causal_bias, gproj_w_ref[l], gproj_b[l:l + 1, :])
        x = residual + attn_out
        residual = x
        h = ln(x, gln2_g[l:l + 1, :], gln2_b[l:l + 1, :], GPT2_EPS)
        h = _gelu_new(mm(h, gfc_w_ref[l], gfc_b[l:l + 1, :]))
        x = residual + mm(h, gmproj_w_ref[l], gmproj_b[l:l + 1, :])

    x = ln(x, lnf_g_ref[...], lnf_b_ref[...], GPT2_EPS)

    # classifier on position 0 (nn.Dropout(0.1) is identity in eval mode)
    logits_all = mm(x, cls_w_ref[...], cls_b_ref[...])                       # [S, labels]
    out_ref[...] = logits_all[0:1, :].astype(out_ref.dtype)


# --------------------------- parameter init ----------------------------------
def init_params(key):
    keys = iter(jax.random.split(key, 64))

    def norm(shape, scale=0.02):
        return (scale * jax.random.normal(next(keys), shape)).astype(jnp.float32)

    def zeros(shape):
        return jnp.zeros(shape, jnp.float32)

    def ones(shape):
        return jnp.ones(shape, jnp.float32)

    lb, lg = N_LAYERS_BERT, N_LAYERS_GPT2
    return {
        # BERT embeddings
        "word_emb": norm((VOCAB, HIDDEN)),
        "pos_emb": norm((MAX_POS, HIDDEN)),
        "tok_type_emb": norm((2, HIDDEN)),
        "emb_ln_g": ones((HIDDEN,)), "emb_ln_b": zeros((HIDDEN,)),
        # GPT2 position embeddings + final LN
        "wpe": norm((MAX_POS, HIDDEN)),
        "lnf_g": ones((HIDDEN,)), "lnf_b": zeros((HIDDEN,)),
        # classifier
        "cls_w": norm((HIDDEN, NUM_LABELS)), "cls_b": zeros((NUM_LABELS,)),
        # BERT layer stacks (Q/K/V fused into one [H, 3H] weight)
        "bert": {
            "qkv_w": norm((lb, HIDDEN, 3 * HIDDEN)), "qkv_b": zeros((lb, 3 * HIDDEN)),
            "ao_w": norm((lb, HIDDEN, HIDDEN)), "ao_b": zeros((lb, HIDDEN)),
            "attn_ln_g": ones((lb, HIDDEN)), "attn_ln_b": zeros((lb, HIDDEN)),
            "i_w": norm((lb, HIDDEN, FFN)), "i_b": zeros((lb, FFN)),
            "o_w": norm((lb, FFN, HIDDEN)), "o_b": zeros((lb, HIDDEN)),
            "out_ln_g": ones((lb, HIDDEN)), "out_ln_b": zeros((lb, HIDDEN)),
        },
        # GPT2 layer stacks
        "gpt2": {
            "ln1_g": ones((lg, HIDDEN)), "ln1_b": zeros((lg, HIDDEN)),
            "attn_w": norm((lg, HIDDEN, 3 * HIDDEN)), "attn_b": zeros((lg, 3 * HIDDEN)),
            "proj_w": norm((lg, HIDDEN, HIDDEN)), "proj_b": zeros((lg, HIDDEN)),
            "ln2_g": ones((lg, HIDDEN)), "ln2_b": zeros((lg, HIDDEN)),
            "fc_w": norm((lg, HIDDEN, FFN)), "fc_b": zeros((lg, FFN)),
            "mproj_w": norm((lg, FFN, HIDDEN)), "mproj_b": zeros((lg, HIDDEN)),
        },
    }


# ----------------------------- model forward ---------------------------------
def bert_gpt2_classifier(params, input_ids, attention_mask):
    B, S = input_ids.shape
    positions = jnp.arange(S)

    # TODO(synk): token/position embedding gathers stay in plain JAX — a tiny
    # dynamic row gather has no clean Pallas equivalent at these shapes.
    emb = (params["word_emb"][input_ids]
           + params["pos_emb"][positions][None, :, :]
           + params["tok_type_emb"][0][None, None, :])                        # [B, S, H]
    mask3 = attention_mask.astype(jnp.float32).reshape(B, 1, S)               # [B, 1, S]
    wpe = params["wpe"][:S]                                                   # [S, H]

    def v2(a):  # 1-D vector -> [1, N] (keeps everything rank>=2 in-kernel)
        return a.reshape(1, -1)

    bert, gpt2 = params["bert"], params["gpt2"]
    inputs = [
        mask3, emb, wpe,
        v2(params["emb_ln_g"]), v2(params["emb_ln_b"]),
        bert["qkv_w"], bert["qkv_b"], bert["ao_w"], bert["ao_b"],
        bert["attn_ln_g"], bert["attn_ln_b"], bert["i_w"], bert["i_b"],
        bert["o_w"], bert["o_b"], bert["out_ln_g"], bert["out_ln_b"],
        gpt2["ln1_g"], gpt2["ln1_b"], gpt2["attn_w"], gpt2["attn_b"],
        gpt2["proj_w"], gpt2["proj_b"], gpt2["ln2_g"], gpt2["ln2_b"],
        gpt2["fc_w"], gpt2["fc_b"], gpt2["mproj_w"], gpt2["mproj_b"],
        v2(params["lnf_g"]), v2(params["lnf_b"]),
        params["cls_w"], v2(params["cls_b"]),
    ]

    def full_spec(a):
        # whole array resident in VMEM; constant block index => no re-DMA
        return pl.BlockSpec(a.shape, lambda b, n=a.ndim: (0,) * n)

    in_specs = [
        pl.BlockSpec((pl.Squeezed(), 1, S), lambda b: (b, 0, 0)),             # mask
        pl.BlockSpec((pl.Squeezed(), S, HIDDEN), lambda b: (b, 0, 0)),        # embeddings
    ] + [full_spec(a) for a in inputs[2:]]

    out_spec = pl.BlockSpec((pl.Squeezed(), 1, NUM_LABELS), lambda b: (b, 0, 0))

    logits3 = pl.pallas_call(
        _fused_forward_kernel,
        grid=(B,),                                   # shards across v7x's 2 TCs
        in_specs=in_specs,
        out_specs=out_spec,
        out_shape=jax.ShapeDtypeStruct((B, 1, NUM_LABELS), jnp.float32),
        compiler_params=pltpu.CompilerParams(dimension_semantics=("parallel",)),
    )(*inputs)
    return logits3.reshape(B, NUM_LABELS)


# --------------------------------- main ---------------------------------------
if __name__ == "__main__":
    B, S = 2, 8
    key = jax.random.PRNGKey(0)
    k_ids, k_params = jax.random.split(key)

    input_ids = jax.random.randint(k_ids, (B, S), 0, VOCAB, dtype=jnp.int32)
    attention_mask = jnp.ones((B, S), dtype=jnp.int32)

    params = init_params(k_params)

    logits = jax.jit(bert_gpt2_classifier)(params, input_ids, attention_mask)
    logits = jax.block_until_ready(logits)
    assert logits.shape == (B, NUM_LABELS)
    assert bool(jnp.all(jnp.isfinite(logits)))
    print("KERNEL_OK")
</pallas_src>

<mosaic_0001>
module attributes {stable_mosaic.version = 11 : i64} {
  func.func @_fused_forward_kernel(%arg0: i32, %arg1: memref<1x1x8xf32, #tpu.memory_space<vmem>>, %arg2: memref<1x8x32xf32, #tpu.memory_space<vmem>>, %arg3: memref<8x32xf32, #tpu.memory_space<vmem>>, %arg4: memref<1x32xf32, #tpu.memory_space<vmem>>, %arg5: memref<1x32xf32, #tpu.memory_space<vmem>>, %arg6: memref<2x32x96xf32, #tpu.memory_space<vmem>>, %arg7: memref<2x96xf32, #tpu.memory_space<vmem>>, %arg8: memref<2x32x32xf32, #tpu.memory_space<vmem>>, %arg9: memref<2x32xf32, #tpu.memory_space<vmem>>, %arg10: memref<2x32xf32, #tpu.memory_space<vmem>>, %arg11: memref<2x32xf32, #tpu.memory_space<vmem>>, %arg12: memref<2x32x64xf32, #tpu.memory_space<vmem>>, %arg13: memref<2x64xf32, #tpu.memory_space<vmem>>, %arg14: memref<2x64x32xf32, #tpu.memory_space<vmem>>, %arg15: memref<2x32xf32, #tpu.memory_space<vmem>>, %arg16: memref<2x32xf32, #tpu.memory_space<vmem>>, %arg17: memref<2x32xf32, #tpu.memory_space<vmem>>, %arg18: memref<2x32xf32, #tpu.memory_space<vmem>>, %arg19: memref<2x32xf32, #tpu.memory_space<vmem>>, %arg20: memref<2x32x96xf32, #tpu.memory_space<vmem>>, %arg21: memref<2x96xf32, #tpu.memory_space<vmem>>, %arg22: memref<2x32x32xf32, #tpu.memory_space<vmem>>, %arg23: memref<2x32xf32, #tpu.memory_space<vmem>>, %arg24: memref<2x32xf32, #tpu.memory_space<vmem>>, %arg25: memref<2x32xf32, #tpu.memory_space<vmem>>, %arg26: memref<2x32x64xf32, #tpu.memory_space<vmem>>, %arg27: memref<2x64xf32, #tpu.memory_space<vmem>>, %arg28: memref<2x64x32xf32, #tpu.memory_space<vmem>>, %arg29: memref<2x32xf32, #tpu.memory_space<vmem>>, %arg30: memref<1x32xf32, #tpu.memory_space<vmem>>, %arg31: memref<1x32xf32, #tpu.memory_space<vmem>>, %arg32: memref<32x3xf32, #tpu.memory_space<vmem>>, %arg33: memref<1x3xf32, #tpu.memory_space<vmem>>, %arg34: memref<1x1x3xf32, #tpu.memory_space<vmem>>) attributes {dimension_semantics = [#tpu.dimension_semantics<parallel>], iteration_bounds = array<i64: 2>, scalar_prefetch = 0 : i64, scratch_operands = 0 : i64, tpu.core_type = #tpu.core_type<tc>, window_params = [{transform_indices = @transform_0, window_bounds = array<i64: 1, 1, 8>}, {transform_indices = @transform_1, window_bounds = array<i64: 1, 8, 32>}, {pipeline_mode = #tpu.pipeline_mode<synchronous>, transform_indices = @transform_2, window_bounds = array<i64: 8, 32>}, {pipeline_mode = #tpu.pipeline_mode<synchronous>, transform_indices = @transform_3, window_bounds = array<i64: 1, 32>}, {pipeline_mode = #tpu.pipeline_mode<synchronous>, transform_indices = @transform_4, window_bounds = array<i64: 1, 32>}, {pipeline_mode = #tpu.pipeline_mode<synchronous>, transform_indices = @transform_5, window_bounds = array<i64: 2, 32, 96>}, {pipeline_mode = #tpu.pipeline_mode<synchronous>, transform_indices = @transform_6, window_bounds = array<i64: 2, 96>}, {pipeline_mode = #tpu.pipeline_mode<synchronous>, transform_indices = @transform_7, window_bounds = array<i64: 2, 32, 32>}, {pipeline_mode = #tpu.pipeline_mode<synchronous>, transform_indices = @transform_8, window_bounds = array<i64: 2, 32>}, {pipeline_mode = #tpu.pipeline_mode<synchronous>, transform_indices = @transform_9, window_bounds = array<i64: 2, 32>}, {pipeline_mode = #tpu.pipeline_mode<synchronous>, transform_indices = @transform_10, window_bounds = array<i64: 2, 32>}, {pipeline_mode = #tpu.pipeline_mode<synchronous>, transform_indices = @transform_11, window_bounds = array<i64: 2, 32, 64>}, {pipeline_mode = #tpu.pipeline_mode<synchronous>, transform_indices = @transform_12, window_bounds = array<i64: 2, 64>}, {pipeline_mode = #tpu.pipeline_mode<synchronous>, transform_indices = @transform_13, window_bounds = array<i64: 2, 64, 32>}, {pipeline_mode = #tpu.pipeline_mode<synchronous>, transform_indices = @transform_14, window_bounds = array<i64: 2, 32>}, {pipeline_mode = #tpu.pipeline_mode<synchronous>, transform_indices = @transform_15, window_bounds = array<i64: 2, 32>}, {pipeline_mode = #tpu.pipeline_mode<synchronous>, transform_indices = @transform_16, window_bounds = array<i64: 2, 32>}, {pipeline_mode = #tpu.pipeline_mode<synchronous>, transform_indices = @transform_17, window_bounds = array<i64: 2, 32>}, {pipeline_mode = #tpu.pipeline_mode<synchronous>, transform_indices = @transform_18, window_bounds = array<i64: 2, 32>}, {pipeline_mode = #tpu.pipeline_mode<synchronous>, transform_indices = @transform_19, window_bounds = array<i64: 2, 32, 96>}, {pipeline_mode = #tpu.pipeline_mode<synchronous>, transform_indices = @transform_20, window_bounds = array<i64: 2, 96>}, {pipeline_mode = #tpu.pipeline_mode<synchronous>, transform_indices = @transform_21, window_bounds = array<i64: 2, 32, 32>}, {pipeline_mode = #tpu.pipeline_mode<synchronous>, transform_indices = @transform_22, window_bounds = array<i64: 2, 32>}, {pipeline_mode = #tpu.pipeline_mode<synchronous>, transform_indices = @transform_23, window_bounds = array<i64: 2, 32>}, {pipeline_mode = #tpu.pipeline_mode<synchronous>, transform_indices = @transform_24, window_bounds = array<i64: 2, 32>}, {pipeline_mode = #tpu.pipeline_mode<synchronous>, transform_indices = @transform_25, window_bounds = array<i64: 2, 32, 64>}, {pipeline_mode = #tpu.pipeline_mode<synchronous>, transform_indices = @transform_26, window_bounds = array<i64: 2, 64>}, {pipeline_mode = #tpu.pipeline_mode<synchronous>, transform_indices = @transform_27, window_bounds = array<i64: 2, 64, 32>}, {pipeline_mode = #tpu.pipeline_mode<synchronous>, transform_indices = @transform_28, window_bounds = array<i64: 2, 32>}, {pipeline_mode = #tpu.pipeline_mode<synchronous>, transform_indices = @transform_29, window_bounds = array<i64: 1, 32>}, {pipeline_mode = #tpu.pipeline_mode<synchronous>, transform_indices = @transform_30, window_bounds = array<i64: 1, 32>}, {pipeline_mode = #tpu.pipeline_mode<synchronous>, transform_indices = @transform_31, window_bounds = array<i64: 32, 3>}, {pipeline_mode = #tpu.pipeline_mode<synchronous>, transform_indices = @transform_32, window_bounds = array<i64: 1, 3>}, {transform_indices = @transform_33, window_bounds = array<i64: 1, 1, 3>}]} {
    %c0 = arith.constant 0 : index
    %c0_0 = arith.constant 0 : index
    %0 = vector.load %arg7[%c0, %c0_0] : memref<2x96xf32, #tpu.memory_space<vmem>>, vector<2x96xf32>
    %c0_1 = arith.constant 0 : index
    %c0_2 = arith.constant 0 : index
    %1 = vector.load %arg9[%c0_1, %c0_2] : memref<2x32xf32, #tpu.memory_space<vmem>>, vector<2x32xf32>
    %c0_3 = arith.constant 0 : index
    %c0_4 = arith.constant 0 : index
    %2 = vector.load %arg10[%c0_3, %c0_4] : memref<2x32xf32, #tpu.memory_space<vmem>>, vector<2x32xf32>
    %c0_5 = arith.constant 0 : index
    %c0_6 = arith.constant 0 : index
    %3 = vector.load %arg11[%c0_5, %c0_6] : memref<2x32xf32, #tpu.memory_space<vmem>>, vector<2x32xf32>
    %c0_7 = arith.constant 0 : index
    %c0_8 = arith.constant 0 : index
    %4 = vector.load %arg13[%c0_7, %c0_8] : memref<2x64xf32, #tpu.memory_space<vmem>>, vector<2x64xf32>
    %c0_9 = arith.constant 0 : index
    %c0_10 = arith.constant 0 : index
    %5 = vector.load %arg15[%c0_9, %c0_10] : memref<2x32xf32, #tpu.memory_space<vmem>>, vector<2x32xf32>
    %c0_11 = arith.constant 0 : index
    %c0_12 = arith.constant 0 : index
    %6 = vector.load %arg16[%c0_11, %c0_12] : memref<2x32xf32, #tpu.memory_space<vmem>>, vector<2x32xf32>
    %c0_13 = arith.constant 0 : index
    %c0_14 = arith.constant 0 : index
    %7 = vector.load %arg17[%c0_13, %c0_14] : memref<2x32xf32, #tpu.memory_space<vmem>>, vector<2x32xf32>
    %c0_15 = arith.constant 0 : index
    %c0_16 = arith.constant 0 : index
    %8 = vector.load %arg18[%c0_15, %c0_16] : memref<2x32xf32, #tpu.memory_space<vmem>>, vector<2x32xf32>
    %c0_17 = arith.constant 0 : index
    %c0_18 = arith.constant 0 : index
    %9 = vector.load %arg19[%c0_17, %c0_18] : memref<2x32xf32, #tpu.memory_space<vmem>>, vector<2x32xf32>
    %c0_19 = arith.constant 0 : index
    %c0_20 = arith.constant 0 : index
    %10 = vector.load %arg21[%c0_19, %c0_20] : memref<2x96xf32, #tpu.memory_space<vmem>>, vector<2x96xf32>
    %c0_21 = arith.constant 0 : index
    %c0_22 = arith.constant 0 : index
    %11 = vector.load %arg23[%c0_21, %c0_22] : memref<2x32xf32, #tpu.memory_space<vmem>>, vector<2x32xf32>
    %c0_23 = arith.constant 0 : index
    %c0_24 = arith.constant 0 : index
    %12 = vector.load %arg24[%c0_23, %c0_24] : memref<2x32xf32, #tpu.memory_space<vmem>>, vector<2x32xf32>
    %c0_25 = arith.constant 0 : index
    %c0_26 = arith.constant 0 : index
    %13 = vector.load %arg25[%c0_25, %c0_26] : memref<2x32xf32, #tpu.memory_space<vmem>>, vector<2x32xf32>
    %c0_27 = arith.constant 0 : index
    %c0_28 = arith.constant 0 : index
    %14 = vector.load %arg27[%c0_27, %c0_28] : memref<2x64xf32, #tpu.memory_space<vmem>>, vector<2x64xf32>
    %c0_29 = arith.constant 0 : index
    %c0_30 = arith.constant 0 : index
    %15 = vector.load %arg29[%c0_29, %c0_30] : memref<2x32xf32, #tpu.memory_space<vmem>>, vector<2x32xf32>
    %c0_31 = arith.constant 0 : index
    %c0_32 = arith.constant 0 : index
    %c0_33 = arith.constant 0 : index
    %16 = vector.load %arg2[%c0_31, %c0_32, %c0_33] : memref<1x8x32xf32, #tpu.memory_space<vmem>>, vector<1x8x32xf32>
    %17 = vector.shape_cast %16 : vector<1x8x32xf32> to vector<8x32xf32>
    %c0_34 = arith.constant 0 : index
    %c0_35 = arith.constant 0 : index
    %18 = vector.load %arg4[%c0_34, %c0_35] : memref<1x32xf32, #tpu.memory_space<vmem>>, vector<1x32xf32>
    %c0_36 = arith.constant 0 : index
    %c0_37 = arith.constant 0 : index
    %19 = vector.load %arg5[%c0_36, %c0_37] : memref<1x32xf32, #tpu.memory_space<vmem>>, vector<1x32xf32>
    %cst = arith.constant dense<0.000000e+00> : vector<8xf32>
    %20 = vector.multi_reduction <add>, %17, %cst [1] : vector<8x32xf32> to vector<8xf32>
    %21 = vector.shape_cast %20 : vector<8xf32> to vector<8x1xf32>
    %cst_38 = arith.constant 3.200000e+01 : f32
    %22 = vector.broadcast %cst_38 : f32 to vector<8x1xf32>
    %23 = arith.divf %21, %22 : vector<8x1xf32>
    %24 = vector.broadcast %23 : vector<8x1xf32> to vector<8x32xf32>
    %25 = arith.subf %17, %24 : vector<8x32xf32>
    %26 = arith.mulf %25, %25 : vector<8x32xf32>
    %cst_39 = arith.constant dense<0.000000e+00> : vector<8xf32>
    %27 = vector.multi_reduction <add>, %26, %cst_39 [1] : vector<8x32xf32> to vector<8xf32>
    %28 = vector.shape_cast %27 : vector<8xf32> to vector<8x1xf32>
    %cst_40 = arith.constant 3.200000e+01 : f32
    %29 = vector.broadcast %cst_40 : f32 to vector<8x1xf32>
    %30 = arith.divf %28, %29 : vector<8x1xf32>
    %31 = vector.broadcast %23 : vector<8x1xf32> to vector<8x32xf32>
    %32 = arith.subf %17, %31 : vector<8x32xf32>
    %cst_41 = arith.constant 9.99999996E-13 : f32
    %33 = vector.broadcast %cst_41 : f32 to vector<8x1xf32>
    %34 = arith.addf %30, %33 : vector<8x1xf32>
    %35 = math.rsqrt %34 : vector<8x1xf32>
    %36 = vector.broadcast %35 : vector<8x1xf32> to vector<8x32xf32>
    %37 = arith.mulf %32, %36 : vector<8x32xf32>
    %38 = vector.broadcast %18 : vector<1x32xf32> to vector<8x32xf32>
    %39 = arith.mulf %37, %38 : vector<8x32xf32>
    %40 = vector.broadcast %19 : vector<1x32xf32> to vector<8x32xf32>
    %41 = arith.addf %39, %40 : vector<8x32xf32>
    %c0_42 = arith.constant 0 : index
    %c0_43 = arith.constant 0 : index
    %c0_44 = arith.constant 0 : index
    %42 = vector.load %arg1[%c0_42, %c0_43, %c0_44] : memref<1x1x8xf32, #tpu.memory_space<vmem>>, vector<1x1x8xf32>
    %43 = vector.shape_cast %42 : vector<1x1x8xf32> to vector<1x8xf32>
    %cst_45 = arith.constant 1.000000e+00 : f32
    %44 = vector.broadcast %cst_45 : f32 to vector<1x8xf32>
    %45 = arith.subf %44, %43 : vector<1x8xf32>
    %cst_46 = arith.constant -1.000000e+04 : f32
    %46 = vector.broadcast %cst_46 : f32 to vector<1x8xf32>
    %47 = arith.mulf %45, %46 : vector<1x8xf32>
    %c0_47 = arith.constant 0 : index
    %c0_48 = arith.constant 0 : index
    %c0_49 = arith.constant 0 : index
    %48 = vector.load %arg6[%c0_47, %c0_48, %c0_49] : memref<2x32x96xf32, #tpu.memory_space<vmem>>, vector<1x32x96xf32>
    %49 = vector.shape_cast %48 : vector<1x32x96xf32> to vector<32x96xf32>
    %50 = vector.extract_strided_slice %0 {offsets = [0, 0], sizes = [1, 96], strides = [1, 1]} : vector<2x96xf32> to vector<1x96xf32>
    %cst_50 = arith.constant dense<0.000000e+00> : vector<8x96xf32>
    %51 = tpu.matmul %41, %49, %cst_50 {dimension_numbers = #tpu.dot_dimension_numbers<[1], [0], [0], [1], [0, 0, 1, 1], [], []>} : vector<8x32xf32>, vector<32x96xf32>, vector<8x96xf32> -> vector<8x96xf32>
    %52 = vector.broadcast %50 : vector<1x96xf32> to vector<8x96xf32>
    %53 = arith.addf %51, %52 : vector<8x96xf32>
    %c0_51 = arith.constant 0 : index
    %c0_52 = arith.constant 0 : index
    %c0_53 = arith.constant 0 : index
    %54 = vector.load %arg8[%c0_51, %c0_52, %c0_53] : memref<2x32x32xf32, #tpu.memory_space<vmem>>, vector<1x32x32xf32>
    %55 = vector.shape_cast %54 : vector<1x32x32xf32> to vector<32x32xf32>
    %56 = vector.extract_strided_slice %1 {offsets = [0, 0], sizes = [1, 32], strides = [1, 1]} : vector<2x32xf32> to vector<1x32xf32>
    %57 = vector.extract_strided_slice %53 {offsets = [0, 0], sizes = [8, 8], strides = [1, 1]} : vector<8x96xf32> to vector<8x8xf32>
    %58 = vector.extract_strided_slice %53 {offsets = [0, 32], sizes = [8, 8], strides = [1, 1]} : vector<8x96xf32> to vector<8x8xf32>
    %59 = vector.extract_strided_slice %53 {offsets = [0, 64], sizes = [8, 8], strides = [1, 1]} : vector<8x96xf32> to vector<8x8xf32>
    %cst_54 = arith.constant dense<0.000000e+00> : vector<8x8xf32>
    %60 = tpu.matmul %57, %58, %cst_54 {dimension_numbers = #tpu.dot_dimension_numbers<[1], [1], [0], [0], [0, 0, 1, 0], [], []>} : vector<8x8xf32>, vector<8x8xf32>, vector<8x8xf32> -> vector<8x8xf32>
    %cst_55 = arith.constant 0.353553385 : f32
    %61 = vector.broadcast %cst_55 : f32 to vector<8x8xf32>
    %62 = arith.mulf %60, %61 : vector<8x8xf32>
    %63 = vector.broadcast %47 : vector<1x8xf32> to vector<8x8xf32>
    %64 = arith.addf %62, %63 : vector<8x8xf32>
    %cst_56 = arith.constant dense<0xFF800000> : vector<8xf32>
    %65 = vector.multi_reduction <maximumf>, %64, %cst_56 [1] : vector<8x8xf32> to vector<8xf32>
    %66 = vector.shape_cast %65 : vector<8xf32> to vector<8x1xf32>
    %67 = vector.broadcast %66 : vector<8x1xf32> to vector<8x8xf32>
    %68 = arith.subf %64, %67 : vector<8x8xf32>
    %69 = math.exp %68 : vector<8x8xf32>
    %cst_57 = arith.constant dense<0.000000e+00> : vector<8xf32>
    %70 = vector.multi_reduction <add>, %69, %cst_57 [1] : vector<8x8xf32> to vector<8xf32>
    %71 = vector.shape_cast %70 : vector<8xf32> to vector<8x1xf32>
    %72 = tpu.reciprocal %71 {approx = true} : vector<8x1xf32> -> vector<8x1xf32>
    %73 = vector.broadcast %72 : vector<8x1xf32> to vector<8x8xf32>
    %74 = arith.mulf %69, %73 : vector<8x8xf32>
    %cst_58 = arith.constant dense<0.000000e+00> : vector<8x8xf32>
    %75 = tpu.matmul %74, %59, %cst_58 {dimension_numbers = #tpu.dot_dimension_numbers<[1], [0], [0], [1], [0, 0, 1, 1], [], []>} : vector<8x8xf32>, vector<8x8xf32>, vector<8x8xf32> -> vector<8x8xf32>
    %76 = vector.extract_strided_slice %55 {offsets = [0, 0], sizes = [8, 32], strides = [1, 1]} : vector<32x32xf32> to vector<8x32xf32>
    %cst_59 = arith.constant dense<0.000000e+00> : vector<8x32xf32>
    %77 = tpu.matmul %75, %76, %cst_59 {dimension_numbers = #tpu.dot_dimension_numbers<[1], [0], [0], [1], [0, 0, 1, 1], [], []>} : vector<8x8xf32>, vector<8x32xf32>, vector<8x32xf32> -> vector<8x32xf32>
    %78 = vector.extract_strided_slice %53 {offsets = [0, 8], sizes = [8, 8], strides = [1, 1]} : vector<8x96xf32> to vector<8x8xf32>
    %79 = vector.extract_strided_slice %53 {offsets = [0, 40], sizes = [8, 8], strides = [1, 1]} : vector<8x96xf32> to vector<8x8xf32>
    %80 = vector.extract_strided_slice %53 {offsets = [0, 72], sizes = [8, 8], strides = [1, 1]} : vector<8x96xf32> to vector<8x8xf32>
    %cst_60 = arith.constant dense<0.000000e+00> : vector<8x8xf32>
    %81 = tpu.matmul %78, %79, %cst_60 {dimension_numbers = #tpu.dot_dimension_numbers<[1], [1], [0], [0], [0, 0, 1, 0], [], []>} : vector<8x8xf32>, vector<8x8xf32>, vector<8x8xf32> -> vector<8x8xf32>
    %cst_61 = arith.constant 0.353553385 : f32
    %82 = vector.broadcast %cst_61 : f32 to vector<8x8xf32>
    %83 = arith.mulf %81, %82 : vector<8x8xf32>
    %84 = vector.broadcast %47 : vector<1x8xf32> to vector<8x8xf32>
    %85 = arith.addf %83, %84 : vector<8x8xf32>
    %cst_62 = arith.constant dense<0xFF800000> : vector<8xf32>
    %86 = vector.multi_reduction <maximumf>, %85, %cst_62 [1] : vector<8x8xf32> to vector<8xf32>
    %87 = vector.shape_cast %86 : vector<8xf32> to vector<8x1xf32>
    %88 = vector.broadcast %87 : vector<8x1xf32> to vector<8x8xf32>
    %89 = arith.subf %85, %88 : vector<8x8xf32>
    %90 = math.exp %89 : vector<8x8xf32>
    %cst_63 = arith.constant dense<0.000000e+00> : vector<8xf32>
    %91 = vector.multi_reduction <add>, %90, %cst_63 [1] : vector<8x8xf32> to vector<8xf32>
    %92 = vector.shape_cast %91 : vector<8xf32> to vector<8x1xf32>
    %93 = tpu.reciprocal %92 {approx = true} : vector<8x1xf32> -> vector<8x1xf32>
    %94 = vector.broadcast %93 : vector<8x1xf32> to vector<8x8xf32>
    %95 = arith.mulf %90, %94 : vector<8x8xf32>
    %cst_64 = arith.constant dense<0.000000e+00> : vector<8x8xf32>
    %96 = tpu.matmul %95, %80, %cst_64 {dimension_numbers = #tpu.dot_dimension_numbers<[1], [0], [0], [1], [0, 0, 1, 1], [], []>} : vector<8x8xf32>, vector<8x8xf32>, vector<8x8xf32> -> vector<8x8xf32>
    %97 = vector.extract_strided_slice %55 {offsets = [8, 0], sizes = [8, 32], strides = [1, 1]} : vector<32x32xf32> to vector<8x32xf32>
    %cst_65 = arith.constant dense<0.000000e+00> : vector<8x32xf32>
    %98 = tpu.matmul %96, %97, %cst_65 {dimension_numbers = #tpu.dot_dimension_numbers<[1], [0], [0], [1], [0, 0, 1, 1], [], []>} : vector<8x8xf32>, vector<8x32xf32>, vector<8x32xf32> -> vector<8x32xf32>
    %99 = arith.addf %77, %98 : vector<8x32xf32>
    %100 = vector.extract_strided_slice %53 {offsets = [0, 16], sizes = [8, 8], strides = [1, 1]} : vector<8x96xf32> to vector<8x8xf32>
    %101 = vector.extract_strided_slice %53 {offsets = [0, 48], sizes = [8, 8], strides = [1, 1]} : vector<8x96xf32> to vector<8x8xf32>
    %102 = vector.extract_strided_slice %53 {offsets = [0, 80], sizes = [8, 8], strides = [1, 1]} : vector<8x96xf32> to vector<8x8xf32>
    %cst_66 = arith.constant dense<0.000000e+00> : vector<8x8xf32>
    %103 = tpu.matmul %100, %101, %cst_66 {dimension_numbers = #tpu.dot_dimension_numbers<[1], [1], [0], [0], [0, 0, 1, 0], [], []>} : vector<8x8xf32>, vector<8x8xf32>, vector<8x8xf32> -> vector<8x8xf32>
    %cst_67 = arith.constant 0.353553385 : f32
    %104 = vector.broadcast %cst_67 : f32 to vector<8x8xf32>
    %105 = arith.mulf %103, %104 : vector<8x8xf32>
    %106 = vector.broadcast %47 : vector<1x8xf32> to vector<8x8xf32>
    %107 = arith.addf %105, %106 : vector<8x8xf32>
    %cst_68 = arith.constant dense<0xFF800000> : vector<8xf32>
    %108 = vector.multi_reduction <maximumf>, %107, %cst_68 [1] : vector<8x8xf32> to vector<8xf32>
    %109 = vector.shape_cast %108 : vector<8xf32> to vector<8x1xf32>
    %110 = vector.broadcast %109 : vector<8x1xf32> to vector<8x8xf32>
    %111 = arith.subf %107, %110 : vector<8x8xf32>
    %112 = math.exp %111 : vector<8x8xf32>
    %cst_69 = arith.constant dense<0.000000e+00> : vector<8xf32>
    %113 = vector.multi_reduction <add>, %112, %cst_69 [1] : vector<8x8xf32> to vector<8xf32>
    %114 = vector.shape_cast %113 : vector<8xf32> to vector<8x1xf32>
    %115 = tpu.reciprocal %114 {approx = true} : vector<8x1xf32> -> vector<8x1xf32>
    %116 = vector.broadcast %115 : vector<8x1xf32> to vector<8x8xf32>
    %117 = arith.mulf %112, %116 : vector<8x8xf32>
    %cst_70 = arith.constant dense<0.000000e+00> : vector<8x8xf32>
    %118 = tpu.matmul %117, %102, %cst_70 {dimension_numbers = #tpu.dot_dimension_numbers<[1], [0], [0], [1], [0, 0, 1, 1], [], []>} : vector<8x8xf32>, vector<8x8xf32>, vector<8x8xf32> -> vector<8x8xf32>
    %119 = vector.extract_strided_slice %55 {offsets = [16, 0], sizes = [8, 32], strides = [1, 1]} : vector<32x32xf32> to vector<8x32xf32>
    %cst_71 = arith.constant dense<0.000000e+00> : vector<8x32xf32>
    %120 = tpu.matmul %118, %119, %cst_71 {dimension_numbers = #tpu.dot_dimension_numbers<[1], [0], [0], [1], [0, 0, 1, 1], [], []>} : vector<8x8xf32>, vector<8x32xf32>, vector<8x32xf32> -> vector<8x32xf32>
    %121 = arith.addf %99, %120 : vector<8x32xf32>
    %122 = vector.extract_strided_slice %53 {offsets = [0, 24], sizes = [8, 8], strides = [1, 1]} : vector<8x96xf32> to vector<8x8xf32>
    %123 = vector.extract_strided_slice %53 {offsets = [0, 56], sizes = [8, 8], strides = [1, 1]} : vector<8x96xf32> to vector<8x8xf32>
    %124 = vector.extract_strided_slice %53 {offsets = [0, 88], sizes = [8, 8], strides = [1, 1]} : vector<8x96xf32> to vector<8x8xf32>
    %cst_72 = arith.constant dense<0.000000e+00> : vector<8x8xf32>
    %125 = tpu.matmul %122, %123, %cst_72 {dimension_numbers = #tpu.dot_dimension_numbers<[1], [1], [0], [0], [0, 0, 1, 0], [], []>} : vector<8x8xf32>, vector<8x8xf32>, vector<8x8xf32> -> vector<8x8xf32>
    %cst_73 = arith.constant 0.353553385 : f32
    %126 = vector.broadcast %cst_73 : f32 to vector<8x8xf32>
    %127 = arith.mulf %125, %126 : vector<8x8xf32>
    %128 = vector.broadcast %47 : vector<1x8xf32> to vector<8x8xf32>
    %129 = arith.addf %127, %128 : vector<8x8xf32>
    %cst_74 = arith.constant dense<0xFF800000> : vector<8xf32>
    %130 = vector.multi_reduction <maximumf>, %129, %cst_74 [1] : vector<8x8xf32> to vector<8xf32>
    %131 = vector.shape_cast %130 : vector<8xf32> to vector<8x1xf32>
    %132 = vector.broadcast %131 : vector<8x1xf32> to vector<8x8xf32>
    %133 = arith.subf %129, %132 : vector<8x8xf32>
    %134 = math.exp %133 : vector<8x8xf32>
    %cst_75 = arith.constant dense<0.000000e+00> : vector<8xf32>
    %135 = vector.multi_reduction <add>, %134, %cst_75 [1] : vector<8x8xf32> to vector<8xf32>
    %136 = vector.shape_cast %135 : vector<8xf32> to vector<8x1xf32>
    %137 = tpu.reciprocal %136 {approx = true} : vector<8x1xf32> -> vector<8x1xf32>
    %138 = vector.broadcast %137 : vector<8x1xf32> to vector<8x8xf32>
    %139 = arith.mulf %134, %138 : vector<8x8xf32>
    %cst_76 = arith.constant dense<0.000000e+00> : vector<8x8xf32>
    %140 = tpu.matmul %139, %124, %cst_76 {dimension_numbers = #tpu.dot_dimension_numbers<[1], [0], [0], [1], [0, 0, 1, 1], [], []>} : vector<8x8xf32>, vector<8x8xf32>, vector<8x8xf32> -> vector<8x8xf32>
    %141 = vector.extract_strided_slice %55 {offsets = [24, 0], sizes = [8, 32], strides = [1, 1]} : vector<32x32xf32> to vector<8x32xf32>
    %cst_77 = arith.constant dense<0.000000e+00> : vector<8x32xf32>
    %142 = tpu.matmul %140, %141, %cst_77 {dimension_numbers = #tpu.dot_dimension_numbers<[1], [0], [0], [1], [0, 0, 1, 1], [], []>} : vector<8x8xf32>, vector<8x32xf32>, vector<8x32xf32> -> vector<8x32xf32>
    %143 = arith.addf %121, %142 : vector<8x32xf32>
    %144 = vector.broadcast %56 : vector<1x32xf32> to vector<8x32xf32>
    %145 = arith.addf %143, %144 : vector<8x32xf32>
    %146 = arith.addf %145, %41 : vector<8x32xf32>
    %147 = vector.extract_strided_slice %2 {offsets = [0, 0], sizes = [1, 32], strides = [1, 1]} : vector<2x32xf32> to vector<1x32xf32>
    %148 = vector.extract_strided_slice %3 {offsets = [0, 0], sizes = [1, 32], strides = [1, 1]} : vector<2x32xf32> to vector<1x32xf32>
    %cst_78 = arith.constant dense<0.000000e+00> : vector<8xf32>
    %149 = vector.multi_reduction <add>, %146, %cst_78 [1] : vector<8x32xf32> to vector<8xf32>
    %150 = vector.shape_cast %149 : vector<8xf32> to vector<8x1xf32>
    %cst_79 = arith.constant 3.200000e+01 : f32
    %151 = vector.broadcast %cst_79 : f32 to vector<8x1xf32>
    %152 = arith.divf %150, %151 : vector<8x1xf32>
    %153 = vector.broadcast %152 : vector<8x1xf32> to vector<8x32xf32>
    %154 = arith.subf %146, %153 : vector<8x32xf32>
    %155 = arith.mulf %154, %154 : vector<8x32xf32>
    %cst_80 = arith.constant dense<0.000000e+00> : vector<8xf32>
    %156 = vector.multi_reduction <add>, %155, %cst_80 [1] : vector<8x32xf32> to vector<8xf32>
    %157 = vector.shape_cast %156 : vector<8xf32> to vector<8x1xf32>
    %cst_81 = arith.constant 3.200000e+01 : f32
    %158 = vector.broadcast %cst_81 : f32 to vector<8x1xf32>
    %159 = arith.divf %157, %158 : vector<8x1xf32>
    %160 = vector.broadcast %152 : vector<8x1xf32> to vector<8x32xf32>
    %161 = arith.subf %146, %160 : vector<8x32xf32>
    %cst_82 = arith.constant 9.99999996E-13 : f32
    %162 = vector.broadcast %cst_82 : f32 to vector<8x1xf32>
    %163 = arith.addf %159, %162 : vector<8x1xf32>
    %164 = math.rsqrt %163 : vector<8x1xf32>
    %165 = vector.broadcast %164 : vector<8x1xf32> to vector<8x32xf32>
    %166 = arith.mulf %161, %165 : vector<8x32xf32>
    %167 = vector.broadcast %147 : vector<1x32xf32> to vector<8x32xf32>
    %168 = arith.mulf %166, %167 : vector<8x32xf32>
    %169 = vector.broadcast %148 : vector<1x32xf32> to vector<8x32xf32>
    %170 = arith.addf %168, %169 : vector<8x32xf32>
    %c0_83 = arith.constant 0 : index
    %c0_84 = arith.constant 0 : index
    %c0_85 = arith.constant 0 : index
    %171 = vector.load %arg12[%c0_83, %c0_84, %c0_85] : memref<2x32x64xf32, #tpu.memory_space<vmem>>, vector<1x32x64xf32>
    %172 = vector.shape_cast %171 : vector<1x32x64xf32> to vector<32x64xf32>
    %173 = vector.extract_strided_slice %4 {offsets = [0, 0], sizes = [1, 64], strides = [1, 1]} : vector<2x64xf32> to vector<1x64xf32>
    %cst_86 = arith.constant dense<0.000000e+00> : vector<8x64xf32>
    %174 = tpu.matmul %170, %172, %cst_86 {dimension_numbers = #tpu.dot_dimension_numbers<[1], [0], [0], [1], [0, 0, 1, 1], [], []>} : vector<8x32xf32>, vector<32x64xf32>, vector<8x64xf32> -> vector<8x64xf32>
    %175 = vector.broadcast %173 : vector<1x64xf32> to vector<8x64xf32>
    %176 = arith.addf %174, %175 : vector<8x64xf32>
    %cst_87 = arith.constant 5.000000e-01 : f32
    %177 = vector.broadcast %cst_87 : f32 to vector<8x64xf32>
    %178 = arith.mulf %176, %177 : vector<8x64xf32>
    %cst_88 = arith.constant 2.000000e+00 : f32
    %179 = math.sqrt %cst_88 : f32
    %180 = vector.broadcast %179 : f32 to vector<8x64xf32>
    %181 = arith.divf %176, %180 : vector<8x64xf32>
    %182 = math.erf %181 : vector<8x64xf32>
    %cst_89 = arith.constant 1.000000e+00 : f32
    %183 = vector.broadcast %cst_89 : f32 to vector<8x64xf32>
    %184 = arith.addf %183, %182 : vector<8x64xf32>
    %185 = arith.mulf %178, %184 : vector<8x64xf32>
    %c0_90 = arith.constant 0 : index
    %c0_91 = arith.constant 0 : index
    %c0_92 = arith.constant 0 : index
    %186 = vector.load %arg14[%c0_90, %c0_91, %c0_92] : memref<2x64x32xf32, #tpu.memory_space<vmem>>, vector<1x64x32xf32>
    %187 = vector.shape_cast %186 : vector<1x64x32xf32> to vector<64x32xf32>
    %188 = vector.extract_strided_slice %5 {offsets = [0, 0], sizes = [1, 32], strides = [1, 1]} : vector<2x32xf32> to vector<1x32xf32>
    %cst_93 = arith.constant dense<0.000000e+00> : vector<8x32xf32>
    %189 = tpu.matmul %185, %187, %cst_93 {dimension_numbers = #tpu.dot_dimension_numbers<[1], [0], [0], [1], [0, 0, 1, 1], [], []>} : vector<8x64xf32>, vector<64x32xf32>, vector<8x32xf32> -> vector<8x32xf32>
    %190 = vector.broadcast %188 : vector<1x32xf32> to vector<8x32xf32>
    %191 = arith.addf %189, %190 : vector<8x32xf32>
    %192 = arith.addf %191, %170 : vector<8x32xf32>
    %193 = vector.extract_strided_slice %6 {offsets = [0, 0], sizes = [1, 32], strides = [1, 1]} : vector<2x32xf32> to vector<1x32xf32>
    %194 = vector.extract_strided_slice %7 {offsets = [0, 0], sizes = [1, 32], strides = [1, 1]} : vector<2x32xf32> to vector<1x32xf32>
    %cst_94 = arith.constant dense<0.000000e+00> : vector<8xf32>
    %195 = vector.multi_reduction <add>, %192, %cst_94 [1] : vector<8x32xf32> to vector<8xf32>
    %196 = vector.shape_cast %195 : vector<8xf32> to vector<8x1xf32>
    %cst_95 = arith.constant 3.200000e+01 : f32
    %197 = vector.broadcast %cst_95 : f32 to vector<8x1xf32>
    %198 = arith.divf %196, %197 : vector<8x1xf32>
    %199 = vector.broadcast %198 : vector<8x1xf32> to vector<8x32xf32>
    %200 = arith.subf %192, %199 : vector<8x32xf32>
    %201 = arith.mulf %200, %200 : vector<8x32xf32>
    %cst_96 = arith.constant dense<0.000000e+00> : vector<8xf32>
    %202 = vector.multi_reduction <add>, %201, %cst_96 [1] : vector<8x32xf32> to vector<8xf32>
    %203 = vector.shape_cast %202 : vector<8xf32> to vector<8x1xf32>
    %cst_97 = arith.constant 3.200000e+01 : f32
    %204 = vector.broadcast %cst_97 : f32 to vector<8x1xf32>
    %205 = arith.divf %203, %204 : vector<8x1xf32>
    %206 = vector.broadcast %198 : vector<8x1xf32> to vector<8x32xf32>
    %207 = arith.subf %192, %206 : vector<8x32xf32>
    %cst_98 = arith.constant 9.99999996E-13 : f32
    %208 = vector.broadcast %cst_98 : f32 to vector<8x1xf32>
    %209 = arith.addf %205, %208 : vector<8x1xf32>
    %210 = math.rsqrt %209 : vector<8x1xf32>
    %211 = vector.broadcast %210 : vector<8x1xf32> to vector<8x32xf32>
    %212 = arith.mulf %207, %211 : vector<8x32xf32>
    %213 = vector.broadcast %193 : vector<1x32xf32> to vector<8x32xf32>
    %214 = arith.mulf %212, %213 : vector<8x32xf32>
    %215 = vector.broadcast %194 : vector<1x32xf32> to vector<8x32xf32>
    %216 = arith.addf %214, %215 : vector<8x32xf32>
    %c1 = arith.constant 1 : index
    %c0_99 = arith.constant 0 : index
    %c0_100 = arith.constant 0 : index
    %217 = vector.load %arg6[%c1, %c0_99, %c0_100] : memref<2x32x96xf32, #tpu.memory_space<vmem>>, vector<1x32x96xf32>
    %218 = vector.shape_cast %217 : vector<1x32x96xf32> to vector<32x96xf32>
    %219 = vector.extract_strided_slice %0 {offsets = [1, 0], sizes = [1, 96], strides = [1, 1]} : vector<2x96xf32> to vector<1x96xf32>
    %cst_101 = arith.constant dense<0.000000e+00> : vector<8x96xf32>
    %220 = tpu.matmul %216, %218, %cst_101 {dimension_numbers = #tpu.dot_dimension_numbers<[1], [0], [0], [1], [0, 0, 1, 1], [], []>} : vector<8x32xf32>, vector<32x96xf32>, vector<8x96xf32> -> vector<8x96xf32>
    %221 = vector.broadcast %219 : vector<1x96xf32> to vector<8x96xf32>
    %222 = arith.addf %220, %221 : vector<8x96xf32>
    %c1_102 = arith.constant 1 : index
    %c0_103 = arith.constant 0 : index
    %c0_104 = arith.constant 0 : index
    %223 = vector.load %arg8[%c1_102, %c0_103, %c0_104] : memref<2x32x32xf32, #tpu.memory_space<vmem>>, vector<1x32x32xf32>
    %224 = vector.shape_cast %223 : vector<1x32x32xf32> to vector<32x32xf32>
    %225 = vector.extract_strided_slice %1 {offsets = [1, 0], sizes = [1, 32], strides = [1, 1]} : vector<2x32xf32> to vector<1x32xf32>
    %226 = vector.extract_strided_slice %222 {offsets = [0, 0], sizes = [8, 8], strides = [1, 1]} : vector<8x96xf32> to vector<8x8xf32>
    %227 = vector.extract_strided_slice %222 {offsets = [0, 32], sizes = [8, 8], strides = [1, 1]} : vector<8x96xf32> to vector<8x8xf32>
    %228 = vector.extract_strided_slice %222 {offsets = [0, 64], sizes = [8, 8], strides = [1, 1]} : vector<8x96xf32> to vector<8x8xf32>
    %cst_105 = arith.constant dense<0.000000e+00> : vector<8x8xf32>
    %229 = tpu.matmul %226, %227, %cst_105 {dimension_numbers = #tpu.dot_dimension_numbers<[1], [1], [0], [0], [0, 0, 1, 0], [], []>} : vector<8x8xf32>, vector<8x8xf32>, vector<8x8xf32> -> vector<8x8xf32>
    %cst_106 = arith.constant 0.353553385 : f32
    %230 = vector.broadcast %cst_106 : f32 to vector<8x8xf32>
    %231 = arith.mulf %229, %230 : vector<8x8xf32>
    %232 = vector.broadcast %47 : vector<1x8xf32> to vector<8x8xf32>
    %233 = arith.addf %231, %232 : vector<8x8xf32>
    %cst_107 = arith.constant dense<0xFF800000> : vector<8xf32>
    %234 = vector.multi_reduction <maximumf>, %233, %cst_107 [1] : vector<8x8xf32> to vector<8xf32>
    %235 = vector.shape_cast %234 : vector<8xf32> to vector<8x1xf32>
    %236 = vector.broadcast %235 : vector<8x1xf32> to vector<8x8xf32>
    %237 = arith.subf %233, %236 : vector<8x8xf32>
    %238 = math.exp %237 : vector<8x8xf32>
    %cst_108 = arith.constant dense<0.000000e+00> : vector<8xf32>
    %239 = vector.multi_reduction <add>, %238, %cst_108 [1] : vector<8x8xf32> to vector<8xf32>
    %240 = vector.shape_cast %239 : vector<8xf32> to vector<8x1xf32>
    %241 = tpu.reciprocal %240 {approx = true} : vector<8x1xf32> -> vector<8x1xf32>
    %242 = vector.broadcast %241 : vector<8x1xf32> to vector<8x8xf32>
    %243 = arith.mulf %238, %242 : vector<8x8xf32>
    %cst_109 = arith.constant dense<0.000000e+00> : vector<8x8xf32>
    %244 = tpu.matmul %243, %228, %cst_109 {dimension_numbers = #tpu.dot_dimension_numbers<[1], [0], [0], [1], [0, 0, 1, 1], [], []>} : vector<8x8xf32>, vector<8x8xf32>, vector<8x8xf32> -> vector<8x8xf32>
    %245 = vector.extract_strided_slice %224 {offsets = [0, 0], sizes = [8, 32], strides = [1, 1]} : vector<32x32xf32> to vector<8x32xf32>
    %cst_110 = arith.constant dense<0.000000e+00> : vector<8x32xf32>
    %246 = tpu.matmul %244, %245, %cst_110 {dimension_numbers = #tpu.dot_dimension_numbers<[1], [0], [0], [1], [0, 0, 1, 1], [], []>} : vector<8x8xf32>, vector<8x32xf32>, vector<8x32xf32> -> vector<8x32xf32>
    %247 = vector.extract_strided_slice %222 {offsets = [0, 8], sizes = [8, 8], strides = [1, 1]} : vector<8x96xf32> to vector<8x8xf32>
    %248 = vector.extract_strided_slice %222 {offsets = [0, 40], sizes = [8, 8], strides = [1, 1]} : vector<8x96xf32> to vector<8x8xf32>
    %249 = vector.extract_strided_slice %222 {offsets = [0, 72], sizes = [8, 8], strides = [1, 1]} : vector<8x96xf32> to vector<8x8xf32>
    %cst_111 = arith.constant dense<0.000000e+00> : vector<8x8xf32>
    %250 = tpu.matmul %247, %248, %cst_111 {dimension_numbers = #tpu.dot_dimension_numbers<[1], [1], [0], [0], [0, 0, 1, 0], [], []>} : vector<8x8xf32>, vector<8x8xf32>, vector<8x8xf32> -> vector<8x8xf32>
    %cst_112 = arith.constant 0.353553385 : f32
    %251 = vector.broadcast %cst_112 : f32 to vector<8x8xf32>
    %252 = arith.mulf %250, %251 : vector<8x8xf32>
    %253 = vector.broadcast %47 : vector<1x8xf32> to vector<8x8xf32>
    %254 = arith.addf %252, %253 : vector<8x8xf32>
    %cst_113 = arith.constant dense<0xFF800000> : vector<8xf32>
    %255 = vector.multi_reduction <maximumf>, %254, %cst_113 [1] : vector<8x8xf32> to vector<8xf32>
    %256 = vector.shape_cast %255 : vector<8xf32> to vector<8x1xf32>
    %257 = vector.broadcast %256 : vector<8x1xf32> to vector<8x8xf32>
    %258 = arith.subf %254, %257 : vector<8x8xf32>
    %259 = math.exp %258 : vector<8x8xf32>
    %cst_114 = arith.constant dense<0.000000e+00> : vector<8xf32>
    %260 = vector.multi_reduction <add>, %259, %cst_114 [1] : vector<8x8xf32> to vector<8xf32>
    %261 = vector.shape_cast %260 : vector<8xf32> to vector<8x1xf32>
    %262 = tpu.reciprocal %261 {approx = true} : vector<8x1xf32> -> vector<8x1xf32>
    %263 = vector.broadcast %262 : vector<8x1xf32> to vector<8x8xf32>
    %264 = arith.mulf %259, %263 : vector<8x8xf32>
    %cst_115 = arith.constant dense<0.000000e+00> : vector<8x8xf32>
    %265 = tpu.matmul %264, %249, %cst_115 {dimension_numbers = #tpu.dot_dimension_numbers<[1], [0], [0], [1], [0, 0, 1, 1], [], []>} : vector<8x8xf32>, vector<8x8xf32>, vector<8x8xf32> -> vector<8x8xf32>
    %266 = vector.extract_strided_slice %224 {offsets = [8, 0], sizes = [8, 32], strides = [1, 1]} : vector<32x32xf32> to vector<8x32xf32>
    %cst_116 = arith.constant dense<0.000000e+00> : vector<8x32xf32>
    %267 = tpu.matmul %265, %266, %cst_116 {dimension_numbers = #tpu.dot_dimension_numbers<[1], [0], [0], [1], [0, 0, 1, 1], [], []>} : vector<8x8xf32>, vector<8x32xf32>, vector<8x32xf32> -> vector<8x32xf32>
    %268 = arith.addf %246, %267 : vector<8x32xf32>
    %269 = vector.extract_strided_slice %222 {offsets = [0, 16], sizes = [8, 8], strides = [1, 1]} : vector<8x96xf32> to vector<8x8xf32>
    %270 = vector.extract_strided_slice %222 {offsets = [0, 48], sizes = [8, 8], strides = [1, 1]} : vector<8x96xf32> to vector<8x8xf32>
    %271 = vector.extract_strided_slice %222 {offsets = [0, 80], sizes = [8, 8], strides = [1, 1]} : vector<8x96xf32> to vector<8x8xf32>
    %cst_117 = arith.constant dense<0.000000e+00> : vector<8x8xf32>
    %272 = tpu.matmul %269, %270, %cst_117 {dimension_numbers = #tpu.dot_dimension_numbers<[1], [1], [0], [0], [0, 0, 1, 0], [], []>} : vector<8x8xf32>, vector<8x8xf32>, vector<8x8xf32> -> vector<8x8xf32>
    %cst_118 = arith.constant 0.353553385 : f32
    %273 = vector.broadcast %cst_118 : f32 to vector<8x8xf32>
    %274 = arith.mulf %272, %273 : vector<8x8xf32>
    %275 = vector.broadcast %47 : vector<1x8xf32> to vector<8x8xf32>
    %276 = arith.addf %274, %275 : vector<8x8xf32>
    %cst_119 = arith.constant dense<0xFF800000> : vector<8xf32>
    %277 = vector.multi_reduction <maximumf>, %276, %cst_119 [1] : vector<8x8xf32> to vector<8xf32>
    %278 = vector.shape_cast %277 : vector<8xf32> to vector<8x1xf32>
    %279 = vector.broadcast %278 : vector<8x1xf32> to vector<8x8xf32>
    %280 = arith.subf %276, %279 : vector<8x8xf32>
    %281 = math.exp %280 : vector<8x8xf32>
    %cst_120 = arith.constant dense<0.000000e+00> : vector<8xf32>
    %282 = vector.multi_reduction <add>, %281, %cst_120 [1] : vector<8x8xf32> to vector<8xf32>
    %283 = vector.shape_cast %282 : vector<8xf32> to vector<8x1xf32>
    %284 = tpu.reciprocal %283 {approx = true} : vector<8x1xf32> -> vector<8x1xf32>
    %285 = vector.broadcast %284 : vector<8x1xf32> to vector<8x8xf32>
    %286 = arith.mulf %281, %285 : vector<8x8xf32>
    %cst_121 = arith.constant dense<0.000000e+00> : vector<8x8xf32>
    %287 = tpu.matmul %286, %271, %cst_121 {dimension_numbers = #tpu.dot_dimension_numbers<[1], [0], [0], [1], [0, 0, 1, 1], [], []>} : vector<8x8xf32>, vector<8x8xf32>, vector<8x8xf32> -> vector<8x8xf32>
    %288 = vector.extract_strided_slice %224 {offsets = [16, 0], sizes = [8, 32], strides = [1, 1]} : vector<32x32xf32> to vector<8x32xf32>
    %cst_122 = arith.constant dense<0.000000e+00> : vector<8x32xf32>
    %289 = tpu.matmul %287, %288, %cst_122 {dimension_numbers = #tpu.dot_dimension_numbers<[1], [0], [0], [1], [0, 0, 1, 1], [], []>} : vector<8x8xf32>, vector<8x32xf32>, vector<8x32xf32> -> vector<8x32xf32>
    %290 = arith.addf %268, %289 : vector<8x32xf32>
    %291 = vector.extract_strided_slice %222 {offsets = [0, 24], sizes = [8, 8], strides = [1, 1]} : vector<8x96xf32> to vector<8x8xf32>
    %292 = vector.extract_strided_slice %222 {offsets = [0, 56], sizes = [8, 8], strides = [1, 1]} : vector<8x96xf32> to vector<8x8xf32>
    %293 = vector.extract_strided_slice %222 {offsets = [0, 88], sizes = [8, 8], strides = [1, 1]} : vector<8x96xf32> to vector<8x8xf32>
    %cst_123 = arith.constant dense<0.000000e+00> : vector<8x8xf32>
    %294 = tpu.matmul %291, %292, %cst_123 {dimension_numbers = #tpu.dot_dimension_numbers<[1], [1], [0], [0], [0, 0, 1, 0], [], []>} : vector<8x8xf32>, vector<8x8xf32>, vector<8x8xf32> -> vector<8x8xf32>
    %cst_124 = arith.constant 0.353553385 : f32
    %295 = vector.broadcast %cst_124 : f32 to vector<8x8xf32>
    %296 = arith.mulf %294, %295 : vector<8x8xf32>
    %297 = vector.broadcast %47 : vector<1x8xf32> to vector<8x8xf32>
    %298 = arith.addf %296, %297 : vector<8x8xf32>
    %cst_125 = arith.constant dense<0xFF800000> : vector<8xf32>
    %299 = vector.multi_reduction <maximumf>, %298, %cst_125 [1] : vector<8x8xf32> to vector<8xf32>
    %300 = vector.shape_cast %299 : vector<8xf32> to vector<8x1xf32>
    %301 = vector.broadcast %300 : vector<8x1xf32> to vector<8x8xf32>
    %302 = arith.subf %298, %301 : vector<8x8xf32>
    %303 = math.exp %302 : vector<8x8xf32>
    %cst_126 = arith.constant dense<0.000000e+00> : vector<8xf32>
    %304 = vector.multi_reduction <add>, %303, %cst_126 [1] : vector<8x8xf32> to vector<8xf32>
    %305 = vector.shape_cast %304 : vector<8xf32> to vector<8x1xf32>
    %306 = tpu.reciprocal %305 {approx = true} : vector<8x1xf32> -> vector<8x1xf32>
    %307 = vector.broadcast %306 : vector<8x1xf32> to vector<8x8xf32>
    %308 = arith.mulf %303, %307 : vector<8x8xf32>
    %cst_127 = arith.constant dense<0.000000e+00> : vector<8x8xf32>
    %309 = tpu.matmul %308, %293, %cst_127 {dimension_numbers = #tpu.dot_dimension_numbers<[1], [0], [0], [1], [0, 0, 1, 1], [], []>} : vector<8x8xf32>, vector<8x8xf32>, vector<8x8xf32> -> vector<8x8xf32>
    %310 = vector.extract_strided_slice %224 {offsets = [24, 0], sizes = [8, 32], strides = [1, 1]} : vector<32x32xf32> to vector<8x32xf32>
    %cst_128 = arith.constant dense<0.000000e+00> : vector<8x32xf32>
    %311 = tpu.matmul %309, %310, %cst_128 {dimension_numbers = #tpu.dot_dimension_numbers<[1], [0], [0], [1], [0, 0, 1, 1], [], []>} : vector<8x8xf32>, vector<8x32xf32>, vector<8x32xf32> -> vector<8x32xf32>
    %312 = arith.addf %290, %311 : vector<8x32xf32>
    %313 = vector.broadcast %225 : vector<1x32xf32> to vector<8x32xf32>
    %314 = arith.addf %312, %313 : vector<8x32xf32>
    %315 = arith.addf %314, %216 : vector<8x32xf32>
    %316 = vector.extract_strided_slice %2 {offsets = [1, 0], sizes = [1, 32], strides = [1, 1]} : vector<2x32xf32> to vector<1x32xf32>
    %317 = vector.extract_strided_slice %3 {offsets = [1, 0], sizes = [1, 32], strides = [1, 1]} : vector<2x32xf32> to vector<1x32xf32>
    %cst_129 = arith.constant dense<0.000000e+00> : vector<8xf32>
    %318 = vector.multi_reduction <add>, %315, %cst_129 [1] : vector<8x32xf32> to vector<8xf32>
    %319 = vector.shape_cast %318 : vector<8xf32> to vector<8x1xf32>
    %cst_130 = arith.constant 3.200000e+01 : f32
    %320 = vector.broadcast %cst_130 : f32 to vector<8x1xf32>
    %321 = arith.divf %319, %320 : vector<8x1xf32>
    %322 = vector.broadcast %321 : vector<8x1xf32> to vector<8x32xf32>
    %323 = arith.subf %315, %322 : vector<8x32xf32>
    %324 = arith.mulf %323, %323 : vector<8x32xf32>
    %cst_131 = arith.constant dense<0.000000e+00> : vector<8xf32>
    %325 = vector.multi_reduction <add>, %324, %cst_131 [1] : vector<8x32xf32> to vector<8xf32>
    %326 = vector.shape_cast %325 : vector<8xf32> to vector<8x1xf32>
    %cst_132 = arith.constant 3.200000e+01 : f32
    %327 = vector.broadcast %cst_132 : f32 to vector<8x1xf32>
    %328 = arith.divf %326, %327 : vector<8x1xf32>
    %329 = vector.broadcast %321 : vector<8x1xf32> to vector<8x32xf32>
    %330 = arith.subf %315, %329 : vector<8x32xf32>
    %cst_133 = arith.constant 9.99999996E-13 : f32
    %331 = vector.broadcast %cst_133 : f32 to vector<8x1xf32>
    %332 = arith.addf %328, %331 : vector<8x1xf32>
    %333 = math.rsqrt %332 : vector<8x1xf32>
    %334 = vector.broadcast %333 : vector<8x1xf32> to vector<8x32xf32>
    %335 = arith.mulf %330, %334 : vector<8x32xf32>
    %336 = vector.broadcast %316 : vector<1x32xf32> to vector<8x32xf32>
    %337 = arith.mulf %335, %336 : vector<8x32xf32>
    %338 = vector.broadcast %317 : vector<1x32xf32> to vector<8x32xf32>
    %339 = arith.addf %337, %338 : vector<8x32xf32>
    %c1_134 = arith.constant 1 : index
    %c0_135 = arith.constant 0 : index
    %c0_136 = arith.constant 0 : index
    %340 = vector.load %arg12[%c1_134, %c0_135, %c0_136] : memref<2x32x64xf32, #tpu.memory_space<vmem>>, vector<1x32x64xf32>
    %341 = vector.shape_cast %340 : vector<1x32x64xf32> to vector<32x64xf32>
    %342 = vector.extract_strided_slice %4 {offsets = [1, 0], sizes = [1, 64], strides = [1, 1]} : vector<2x64xf32> to vector<1x64xf32>
    %cst_137 = arith.constant dense<0.000000e+00> : vector<8x64xf32>
    %343 = tpu.matmul %339, %341, %cst_137 {dimension_numbers = #tpu.dot_dimension_numbers<[1], [0], [0], [1], [0, 0, 1, 1], [], []>} : vector<8x32xf32>, vector<32x64xf32>, vector<8x64xf32> -> vector<8x64xf32>
    %344 = vector.broadcast %342 : vector<1x64xf32> to vector<8x64xf32>
    %345 = arith.addf %343, %344 : vector<8x64xf32>
    %cst_138 = arith.constant 5.000000e-01 : f32
    %346 = vector.broadcast %cst_138 : f32 to vector<8x64xf32>
    %347 = arith.mulf %345, %346 : vector<8x64xf32>
    %cst_139 = arith.constant 2.000000e+00 : f32
    %348 = math.sqrt %cst_139 : f32
    %349 = vector.broadcast %348 : f32 to vector<8x64xf32>
    %350 = arith.divf %345, %349 : vector<8x64xf32>
    %351 = math.erf %350 : vector<8x64xf32>
    %cst_140 = arith.constant 1.000000e+00 : f32
    %352 = vector.broadcast %cst_140 : f32 to vector<8x64xf32>
    %353 = arith.addf %352, %351 : vector<8x64xf32>
    %354 = arith.mulf %347, %353 : vector<8x64xf32>
    %c1_141 = arith.constant 1 : index
    %c0_142 = arith.constant 0 : index
    %c0_143 = arith.constant 0 : index
    %355 = vector.load %arg14[%c1_141, %c0_142, %c0_143] : memref<2x64x32xf32, #tpu.memory_space<vmem>>, vector<1x64x32xf32>
    %356 = vector.shape_cast %355 : vector<1x64x32xf32> to vector<64x32xf32>
    %357 = vector.extract_strided_slice %5 {offsets = [1, 0], sizes = [1, 32], strides = [1, 1]} : vector<2x32xf32> to vector<1x32xf32>
    %cst_144 = arith.constant dense<0.000000e+00> : vector<8x32xf32>
    %358 = tpu.matmul %354, %356, %cst_144 {dimension_numbers = #tpu.dot_dimension_numbers<[1], [0], [0], [1], [0, 0, 1, 1], [], []>} : vector<8x64xf32>, vector<64x32xf32>, vector<8x32xf32> -> vector<8x32xf32>
    %359 = vector.broadcast %357 : vector<1x32xf32> to vector<8x32xf32>
    %360 = arith.addf %358, %359 : vector<8x32xf32>
    %361 = arith.addf %360, %339 : vector<8x32xf32>
    %362 = vector.extract_strided_slice %6 {offsets = [1, 0], sizes = [1, 32], strides = [1, 1]} : vector<2x32xf32> to vector<1x32xf32>
    %363 = vector.extract_strided_slice %7 {offsets = [1, 0], sizes = [1, 32], strides = [1, 1]} : vector<2x32xf32> to vector<1x32xf32>
    %cst_145 = arith.constant dense<0.000000e+00> : vector<8xf32>
    %364 = vector.multi_reduction <add>, %361, %cst_145 [1] : vector<8x32xf32> to vector<8xf32>
    %365 = vector.shape_cast %364 : vector<8xf32> to vector<8x1xf32>
    %cst_146 = arith.constant 3.200000e+01 : f32
    %366 = vector.broadcast %cst_146 : f32 to vector<8x1xf32>
    %367 = arith.divf %365, %366 : vector<8x1xf32>
    %368 = vector.broadcast %367 : vector<8x1xf32> to vector<8x32xf32>
    %369 = arith.subf %361, %368 : vector<8x32xf32>
    %370 = arith.mulf %369, %369 : vector<8x32xf32>
    %cst_147 = arith.constant dense<0.000000e+00> : vector<8xf32>
    %371 = vector.multi_reduction <add>, %370, %cst_147 [1] : vector<8x32xf32> to vector<8xf32>
    %372 = vector.shape_cast %371 : vector<8xf32> to vector<8x1xf32>
    %cst_148 = arith.constant 3.200000e+01 : f32
    %373 = vector.broadcast %cst_148 : f32 to vector<8x1xf32>
    %374 = arith.divf %372, %373 : vector<8x1xf32>
    %375 = vector.broadcast %367 : vector<8x1xf32> to vector<8x32xf32>
    %376 = arith.subf %361, %375 : vector<8x32xf32>
    %cst_149 = arith.constant 9.99999996E-13 : f32
    %377 = vector.broadcast %cst_149 : f32 to vector<8x1xf32>
    %378 = arith.addf %374, %377 : vector<8x1xf32>
    %379 = math.rsqrt %378 : vector<8x1xf32>
    %380 = vector.broadcast %379 : vector<8x1xf32> to vector<8x32xf32>
    %381 = arith.mulf %376, %380 : vector<8x32xf32>
    %382 = vector.broadcast %362 : vector<1x32xf32> to vector<8x32xf32>
    %383 = arith.mulf %381, %382 : vector<8x32xf32>
    %384 = vector.broadcast %363 : vector<1x32xf32> to vector<8x32xf32>
    %385 = arith.addf %383, %384 : vector<8x32xf32>
    %c0_150 = arith.constant 0 : index
    %c0_151 = arith.constant 0 : index
    %386 = vector.load %arg3[%c0_150, %c0_151] : memref<8x32xf32, #tpu.memory_space<vmem>>, vector<8x32xf32>
    %387 = arith.addf %385, %386 : vector<8x32xf32>
    %388 = tpu.iota {dimensions = array<i32: 0>} : vector<8x8xi32>
    %389 = tpu.iota {dimensions = array<i32: 1>} : vector<8x8xi32>
    %390 = arith.cmpi sle, %389, %388 : vector<8x8xi32>
    %cst_152 = arith.constant 0.000000e+00 : f32
    %cst_153 = arith.constant -1.000000e+09 : f32
    %391 = vector.broadcast %cst_152 : f32 to vector<8x8xf32>
    %392 = vector.broadcast %cst_153 : f32 to vector<8x8xf32>
    %393 = arith.select %390, %391, %392 : vector<8x8xi1>, vector<8x8xf32>
    %394 = vector.extract_strided_slice %8 {offsets = [0, 0], sizes = [1, 32], strides = [1, 1]} : vector<2x32xf32> to vector<1x32xf32>
    %395 = vector.extract_strided_slice %9 {offsets = [0, 0], sizes = [1, 32], strides = [1, 1]} : vector<2x32xf32> to vector<1x32xf32>
    %cst_154 = arith.constant dense<0.000000e+00> : vector<8xf32>
    %396 = vector.multi_reduction <add>, %387, %cst_154 [1] : vector<8x32xf32> to vector<8xf32>
    %397 = vector.shape_cast %396 : vector<8xf32> to vector<8x1xf32>
    %cst_155 = arith.constant 3.200000e+01 : f32
    %398 = vector.broadcast %cst_155 : f32 to vector<8x1xf32>
    %399 = arith.divf %397, %398 : vector<8x1xf32>
    %400 = vector.broadcast %399 : vector<8x1xf32> to vector<8x32xf32>
    %401 = arith.subf %387, %400 : vector<8x32xf32>
    %402 = arith.mulf %401, %401 : vector<8x32xf32>
    %cst_156 = arith.constant dense<0.000000e+00> : vector<8xf32>
    %403 = vector.multi_reduction <add>, %402, %cst_156 [1] : vector<8x32xf32> to vector<8xf32>
    %404 = vector.shape_cast %403 : vector<8xf32> to vector<8x1xf32>
    %cst_157 = arith.constant 3.200000e+01 : f32
    %405 = vector.broadcast %cst_157 : f32 to vector<8x1xf32>
    %406 = arith.divf %404, %405 : vector<8x1xf32>
    %407 = vector.broadcast %399 : vector<8x1xf32> to vector<8x32xf32>
    %408 = arith.subf %387, %407 : vector<8x32xf32>
    %cst_158 = arith.constant 9.99999974E-6 : f32
    %409 = vector.broadcast %cst_158 : f32 to vector<8x1xf32>
    %410 = arith.addf %406, %409 : vector<8x1xf32>
    %411 = math.rsqrt %410 : vector<8x1xf32>
    %412 = vector.broadcast %411 : vector<8x1xf32> to vector<8x32xf32>
    %413 = arith.mulf %408, %412 : vector<8x32xf32>
    %414 = vector.broadcast %394 : vector<1x32xf32> to vector<8x32xf32>
    %415 = arith.mulf %413, %414 : vector<8x32xf32>
    %416 = vector.broadcast %395 : vector<1x32xf32> to vector<8x32xf32>
    %417 = arith.addf %415, %416 : vector<8x32xf32>
    %c0_159 = arith.constant 0 : index
    %c0_160 = arith.constant 0 : index
    %c0_161 = arith.constant 0 : index
    %418 = vector.load %arg20[%c0_159, %c0_160, %c0_161] : memref<2x32x96xf32, #tpu.memory_space<vmem>>, vector<1x32x96xf32>
    %419 = vector.shape_cast %418 : vector<1x32x96xf32> to vector<32x96xf32>
    %420 = vector.extract_strided_slice %10 {offsets = [0, 0], sizes = [1, 96], strides = [1, 1]} : vector<2x96xf32> to vector<1x96xf32>
    %cst_162 = arith.constant dense<0.000000e+00> : vector<8x96xf32>
    %421 = tpu.matmul %417, %419, %cst_162 {dimension_numbers = #tpu.dot_dimension_numbers<[1], [0], [0], [1], [0, 0, 1, 1], [], []>} : vector<8x32xf32>, vector<32x96xf32>, vector<8x96xf32> -> vector<8x96xf32>
    %422 = vector.broadcast %420 : vector<1x96xf32> to vector<8x96xf32>
    %423 = arith.addf %421, %422 : vector<8x96xf32>
    %c0_163 = arith.constant 0 : index
    %c0_164 = arith.constant 0 : index
    %c0_165 = arith.constant 0 : index
    %424 = vector.load %arg22[%c0_163, %c0_164, %c0_165] : memref<2x32x32xf32, #tpu.memory_space<vmem>>, vector<1x32x32xf32>
    %425 = vector.shape_cast %424 : vector<1x32x32xf32> to vector<32x32xf32>
    %426 = vector.extract_strided_slice %11 {offsets = [0, 0], sizes = [1, 32], strides = [1, 1]} : vector<2x32xf32> to vector<1x32xf32>
    %427 = vector.extract_strided_slice %423 {offsets = [0, 0], sizes = [8, 8], strides = [1, 1]} : vector<8x96xf32> to vector<8x8xf32>
    %428 = vector.extract_strided_slice %423 {offsets = [0, 32], sizes = [8, 8], strides = [1, 1]} : vector<8x96xf32> to vector<8x8xf32>
    %429 = vector.extract_strided_slice %423 {offsets = [0, 64], sizes = [8, 8], strides = [1, 1]} : vector<8x96xf32> to vector<8x8xf32>
    %cst_166 = arith.constant dense<0.000000e+00> : vector<8x8xf32>
    %430 = tpu.matmul %427, %428, %cst_166 {dimension_numbers = #tpu.dot_dimension_numbers<[1], [1], [0], [0], [0, 0, 1, 0], [], []>} : vector<8x8xf32>, vector<8x8xf32>, vector<8x8xf32> -> vector<8x8xf32>
    %cst_167 = arith.constant 0.353553385 : f32
    %431 = vector.broadcast %cst_167 : f32 to vector<8x8xf32>
    %432 = arith.mulf %430, %431 : vector<8x8xf32>
    %433 = arith.addf %432, %393 : vector<8x8xf32>
    %cst_168 = arith.constant dense<0xFF800000> : vector<8xf32>
    %434 = vector.multi_reduction <maximumf>, %433, %cst_168 [1] : vector<8x8xf32> to vector<8xf32>
    %435 = vector.shape_cast %434 : vector<8xf32> to vector<8x1xf32>
    %436 = vector.broadcast %435 : vector<8x1xf32> to vector<8x8xf32>
    %437 = arith.subf %433, %436 : vector<8x8xf32>
    %438 = math.exp %437 : vector<8x8xf32>
    %cst_169 = arith.constant dense<0.000000e+00> : vector<8xf32>
    %439 = vector.multi_reduction <add>, %438, %cst_169 [1] : vector<8x8xf32> to vector<8xf32>
    %440 = vector.shape_cast %439 : vector<8xf32> to vector<8x1xf32>
    %441 = tpu.reciprocal %440 {approx = true} : vector<8x1xf32> -> vector<8x1xf32>
    %442 = vector.broadcast %441 : vector<8x1xf32> to vector<8x8xf32>
    %443 = arith.mulf %438, %442 : vector<8x8xf32>
    %cst_170 = arith.constant dense<0.000000e+00> : vector<8x8xf32>
    %444 = tpu.matmul %443, %429, %cst_170 {dimension_numbers = #tpu.dot_dimension_numbers<[1], [0], [0], [1], [0, 0, 1, 1], [], []>} : vector<8x8xf32>, vector<8x8xf32>, vector<8x8xf32> -> vector<8x8xf32>
    %445 = vector.extract_strided_slice %425 {offsets = [0, 0], sizes = [8, 32], strides = [1, 1]} : vector<32x32xf32> to vector<8x32xf32>
    %cst_171 = arith.constant dense<0.000000e+00> : vector<8x32xf32>
    %446 = tpu.matmul %444, %445, %cst_171 {dimension_numbers = #tpu.dot_dimension_numbers<[1], [0], [0], [1], [0, 0, 1, 1], [], []>} : vector<8x8xf32>, vector<8x32xf32>, vector<8x32xf32> -> vector<8x32xf32>
    %447 = vector.extract_strided_slice %423 {offsets = [0, 8], sizes = [8, 8], strides = [1, 1]} : vector<8x96xf32> to vector<8x8xf32>
    %448 = vector.extract_strided_slice %423 {offsets = [0, 40], sizes = [8, 8], strides = [1, 1]} : vector<8x96xf32> to vector<8x8xf32>
    %449 = vector.extract_strided_slice %423 {offsets = [0, 72], sizes = [8, 8], strides = [1, 1]} : vector<8x96xf32> to vector<8x8xf32>
    %cst_172 = arith.constant dense<0.000000e+00> : vector<8x8xf32>
    %450 = tpu.matmul %447, %448, %cst_172 {dimension_numbers = #tpu.dot_dimension_numbers<[1], [1], [0], [0], [0, 0, 1, 0], [], []>} : vector<8x8xf32>, vector<8x8xf32>, vector<8x8xf32> -> vector<8x8xf32>
    %cst_173 = arith.constant 0.353553385 : f32
    %451 = vector.broadcast %cst_173 : f32 to vector<8x8xf32>
    %452 = arith.mulf %450, %451 : vector<8x8xf32>
    %453 = arith.addf %452, %393 : vector<8x8xf32>
    %cst_174 = arith.constant dense<0xFF800000> : vector<8xf32>
    %454 = vector.multi_reduction <maximumf>, %453, %cst_174 [1] : vector<8x8xf32> to vector<8xf32>
    %455 = vector.shape_cast %454 : vector<8xf32> to vector<8x1xf32>
    %456 = vector.broadcast %455 : vector<8x1xf32> to vector<8x8xf32>
    %457 = arith.subf %453, %456 : vector<8x8xf32>
    %458 = math.exp %457 : vector<8x8xf32>
    %cst_175 = arith.constant dense<0.000000e+00> : vector<8xf32>
    %459 = vector.multi_reduction <add>, %458, %cst_175 [1] : vector<8x8xf32> to vector<8xf32>
    %460 = vector.shape_cast %459 : vector<8xf32> to vector<8x1xf32>
    %461 = tpu.reciprocal %460 {approx = true} : vector<8x1xf32> -> vector<8x1xf32>
    %462 = vector.broadcast %461 : vector<8x1xf32> to vector<8x8xf32>
    %463 = arith.mulf %458, %462 : vector<8x8xf32>
    %cst_176 = arith.constant dense<0.000000e+00> : vector<8x8xf32>
    %464 = tpu.matmul %463, %449, %cst_176 {dimension_numbers = #tpu.dot_dimension_numbers<[1], [0], [0], [1], [0, 0, 1, 1], [], []>} : vector<8x8xf32>, vector<8x8xf32>, vector<8x8xf32> -> vector<8x8xf32>
    %465 = vector.extract_strided_slice %425 {offsets = [8, 0], sizes = [8, 32], strides = [1, 1]} : vector<32x32xf32> to vector<8x32xf32>
    %cst_177 = arith.constant dense<0.000000e+00> : vector<8x32xf32>
    %466 = tpu.matmul %464, %465, %cst_177 {dimension_numbers = #tpu.dot_dimension_numbers<[1], [0], [0], [1], [0, 0, 1, 1], [], []>} : vector<8x8xf32>, vector<8x32xf32>, vector<8x32xf32> -> vector<8x32xf32>
    %467 = arith.addf %446, %466 : vector<8x32xf32>
    %468 = vector.extract_strided_slice %423 {offsets = [0, 16], sizes = [8, 8], strides = [1, 1]} : vector<8x96xf32> to vector<8x8xf32>
    %469 = vector.extract_strided_slice %423 {offsets = [0, 48], sizes = [8, 8], strides = [1, 1]} : vector<8x96xf32> to vector<8x8xf32>
    %470 = vector.extract_strided_slice %423 {offsets = [0, 80], sizes = [8, 8], strides = [1, 1]} : vector<8x96xf32> to vector<8x8xf32>
    %cst_178 = arith.constant dense<0.000000e+00> : vector<8x8xf32>
    %471 = tpu.matmul %468, %469, %cst_178 {dimension_numbers = #tpu.dot_dimension_numbers<[1], [1], [0], [0], [0, 0, 1, 0], [], []>} : vector<8x8xf32>, vector<8x8xf32>, vector<8x8xf32> -> vector<8x8xf32>
    %cst_179 = arith.constant 0.353553385 : f32
    %472 = vector.broadcast %cst_179 : f32 to vector<8x8xf32>
    %473 = arith.mulf %471, %472 : vector<8x8xf32>
    %474 = arith.addf %473, %393 : vector<8x8xf32>
    %cst_180 = arith.constant dense<0xFF800000> : vector<8xf32>
    %475 = vector.multi_reduction <maximumf>, %474, %cst_180 [1] : vector<8x8xf32> to vector<8xf32>
    %476 = vector.shape_cast %475 : vector<8xf32> to vector<8x1xf32>
    %477 = vector.broadcast %476 : vector<8x1xf32> to vector<8x8xf32>
    %478 = arith.subf %474, %477 : vector<8x8xf32>
    %479 = math.exp %478 : vector<8x8xf32>
    %cst_181 = arith.constant dense<0.000000e+00> : vector<8xf32>
    %480 = vector.multi_reduction <add>, %479, %cst_181 [1] : vector<8x8xf32> to vector<8xf32>
    %481 = vector.shape_cast %480 : vector<8xf32> to vector<8x1xf32>
    %482 = tpu.reciprocal %481 {approx = true} : vector<8x1xf32> -> vector<8x1xf32>
    %483 = vector.broadcast %482 : vector<8x1xf32> to vector<8x8xf32>
    %484 = arith.mulf %479, %483 : vector<8x8xf32>
    %cst_182 = arith.constant dense<0.000000e+00> : vector<8x8xf32>
    %485 = tpu.matmul %484, %470, %cst_182 {dimension_numbers = #tpu.dot_dimension_numbers<[1], [0], [0], [1], [0, 0, 1, 1], [], []>} : vector<8x8xf32>, vector<8x8xf32>, vector<8x8xf32> -> vector<8x8xf32>
    %486 = vector.extract_strided_slice %425 {offsets = [16, 0], sizes = [8, 32], strides = [1, 1]} : vector<32x32xf32> to vector<8x32xf32>
    %cst_183 = arith.constant dense<0.000000e+00> : vector<8x32xf32>
    %487 = tpu.matmul %485, %486, %cst_183 {dimension_numbers = #tpu.dot_dimension_numbers<[1], [0], [0], [1], [0, 0, 1, 1], [], []>} : vector<8x8xf32>, vector<8x32xf32>, vector<8x32xf32> -> vector<8x32xf32>
    %488 = arith.addf %467, %487 : vector<8x32xf32>
    %489 = vector.extract_strided_slice %423 {offsets = [0, 24], sizes = [8, 8], strides = [1, 1]} : vector<8x96xf32> to vector<8x8xf32>
    %490 = vector.extract_strided_slice %423 {offsets = [0, 56], sizes = [8, 8], strides = [1, 1]} : vector<8x96xf32> to vector<8x8xf32>
    %491 = vector.extract_strided_slice %423 {offsets = [0, 88], sizes = [8, 8], strides = [1, 1]} : vector<8x96xf32> to vector<8x8xf32>
    %cst_184 = arith.constant dense<0.000000e+00> : vector<8x8xf32>
    %492 = tpu.matmul %489, %490, %cst_184 {dimension_numbers = #tpu.dot_dimension_numbers<[1], [1], [0], [0], [0, 0, 1, 0], [], []>} : vector<8x8xf32>, vector<8x8xf32>, vector<8x8xf32> -> vector<8x8xf32>
    %cst_185 = arith.constant 0.353553385 : f32
    %493 = vector.broadcast %cst_185 : f32 to vector<8x8xf32>
    %494 = arith.mulf %492, %493 : vector<8x8xf32>
    %495 = arith.addf %494, %393 : vector<8x8xf32>
    %cst_186 = arith.constant dense<0xFF800000> : vector<8xf32>
    %496 = vector.multi_reduction <maximumf>, %495, %cst_186 [1] : vector<8x8xf32> to vector<8xf32>
    %497 = vector.shape_cast %496 : vector<8xf32> to vector<8x1xf32>
    %498 = vector.broadcast %497 : vector<8x1xf32> to vector<8x8xf32>
    %499 = arith.subf %495, %498 : vector<8x8xf32>
    %500 = math.exp %499 : vector<8x8xf32>
    %cst_187 = arith.constant dense<0.000000e+00> : vector<8xf32>
    %501 = vector.multi_reduction <add>, %500, %cst_187 [1] : vector<8x8xf32> to vector<8xf32>
    %502 = vector.shape_cast %501 : vector<8xf32> to vector<8x1xf32>
    %503 = tpu.reciprocal %502 {approx = true} : vector<8x1xf32> -> vector<8x1xf32>
    %504 = vector.broadcast %503 : vector<8x1xf32> to vector<8x8xf32>
    %505 = arith.mulf %500, %504 : vector<8x8xf32>
    %cst_188 = arith.constant dense<0.000000e+00> : vector<8x8xf32>
    %506 = tpu.matmul %505, %491, %cst_188 {dimension_numbers = #tpu.dot_dimension_numbers<[1], [0], [0], [1], [0, 0, 1, 1], [], []>} : vector<8x8xf32>, vector<8x8xf32>, vector<8x8xf32> -> vector<8x8xf32>
    %507 = vector.extract_strided_slice %425 {offsets = [24, 0], sizes = [8, 32], strides = [1, 1]} : vector<32x32xf32> to vector<8x32xf32>
    %cst_189 = arith.constant dense<0.000000e+00> : vector<8x32xf32>
    %508 = tpu.matmul %506, %507, %cst_189 {dimension_numbers = #tpu.dot_dimension_numbers<[1], [0], [0], [1], [0, 0, 1, 1], [], []>} : vector<8x8xf32>, vector<8x32xf32>, vector<8x32xf32> -> vector<8x32xf32>
    %509 = arith.addf %488, %508 : vector<8x32xf32>
    %510 = vector.broadcast %426 : vector<1x32xf32> to vector<8x32xf32>
    %511 = arith.addf %509, %510 : vector<8x32xf32>
    %512 = arith.addf %387, %511 : vector<8x32xf32>
    %513 = vector.extract_strided_slice %12 {offsets = [0, 0], sizes = [1, 32], strides = [1, 1]} : vector<2x32xf32> to vector<1x32xf32>
    %514 = vector.extract_strided_slice %13 {offsets = [0, 0], sizes = [1, 32], strides = [1, 1]} : vector<2x32xf32> to vector<1x32xf32>
    %cst_190 = arith.constant dense<0.000000e+00> : vector<8xf32>
    %515 = vector.multi_reduction <add>, %512, %cst_190 [1] : vector<8x32xf32> to vector<8xf32>
    %516 = vector.shape_cast %515 : vector<8xf32> to vector<8x1xf32>
    %cst_191 = arith.constant 3.200000e+01 : f32
    %517 = vector.broadcast %cst_191 : f32 to vector<8x1xf32>
    %518 = arith.divf %516, %517 : vector<8x1xf32>
    %519 = vector.broadcast %518 : vector<8x1xf32> to vector<8x32xf32>
    %520 = arith.subf %512, %519 : vector<8x32xf32>
    %521 = arith.mulf %520, %520 : vector<8x32xf32>
    %cst_192 = arith.constant dense<0.000000e+00> : vector<8xf32>
    %522 = vector.multi_reduction <add>, %521, %cst_192 [1] : vector<8x32xf32> to vector<8xf32>
    %523 = vector.shape_cast %522 : vector<8xf32> to vector<8x1xf32>
    %cst_193 = arith.constant 3.200000e+01 : f32
    %524 = vector.broadcast %cst_193 : f32 to vector<8x1xf32>
    %525 = arith.divf %523, %524 : vector<8x1xf32>
    %526 = vector.broadcast %518 : vector<8x1xf32> to vector<8x32xf32>
    %527 = arith.subf %512, %526 : vector<8x32xf32>
    %cst_194 = arith.constant 9.99999974E-6 : f32
    %528 = vector.broadcast %cst_194 : f32 to vector<8x1xf32>
    %529 = arith.addf %525, %528 : vector<8x1xf32>
    %530 = math.rsqrt %529 : vector<8x1xf32>
    %531 = vector.broadcast %530 : vector<8x1xf32> to vector<8x32xf32>
    %532 = arith.mulf %527, %531 : vector<8x32xf32>
    %533 = vector.broadcast %513 : vector<1x32xf32> to vector<8x32xf32>
    %534 = arith.mulf %532, %533 : vector<8x32xf32>
    %535 = vector.broadcast %514 : vector<1x32xf32> to vector<8x32xf32>
    %536 = arith.addf %534, %535 : vector<8x32xf32>
    %c0_195 = arith.constant 0 : index
    %c0_196 = arith.constant 0 : index
    %c0_197 = arith.constant 0 : index
    %537 = vector.load %arg26[%c0_195, %c0_196, %c0_197] : memref<2x32x64xf32, #tpu.memory_space<vmem>>, vector<1x32x64xf32>
    %538 = vector.shape_cast %537 : vector<1x32x64xf32> to vector<32x64xf32>
    %539 = vector.extract_strided_slice %14 {offsets = [0, 0], sizes = [1, 64], strides = [1, 1]} : vector<2x64xf32> to vector<1x64xf32>
    %cst_198 = arith.constant dense<0.000000e+00> : vector<8x64xf32>
    %540 = tpu.matmul %536, %538, %cst_198 {dimension_numbers = #tpu.dot_dimension_numbers<[1], [0], [0], [1], [0, 0, 1, 1], [], []>} : vector<8x32xf32>, vector<32x64xf32>, vector<8x64xf32> -> vector<8x64xf32>
    %541 = vector.broadcast %539 : vector<1x64xf32> to vector<8x64xf32>
    %542 = arith.addf %540, %541 : vector<8x64xf32>
    %cst_199 = arith.constant 0.636619746 : f32
    %543 = math.sqrt %cst_199 : f32
    %cst_200 = arith.constant 5.000000e-01 : f32
    %544 = vector.broadcast %cst_200 : f32 to vector<8x64xf32>
    %545 = arith.mulf %544, %542 : vector<8x64xf32>
    %cst_201 = arith.constant 4.471500e-02 : f32
    %546 = vector.broadcast %cst_201 : f32 to vector<8x64xf32>
    %547 = arith.mulf %546, %542 : vector<8x64xf32>
    %548 = arith.mulf %547, %542 : vector<8x64xf32>
    %549 = arith.mulf %548, %542 : vector<8x64xf32>
    %550 = arith.addf %542, %549 : vector<8x64xf32>
    %551 = vector.broadcast %543 : f32 to vector<8x64xf32>
    %552 = arith.mulf %551, %550 : vector<8x64xf32>
    %553 = math.tanh %552 : vector<8x64xf32>
    %cst_202 = arith.constant 1.000000e+00 : f32
    %554 = vector.broadcast %cst_202 : f32 to vector<8x64xf32>
    %555 = arith.addf %554, %553 : vector<8x64xf32>
    %556 = arith.mulf %545, %555 : vector<8x64xf32>
    %c0_203 = arith.constant 0 : index
    %c0_204 = arith.constant 0 : index
    %c0_205 = arith.constant 0 : index
    %557 = vector.load %arg28[%c0_203, %c0_204, %c0_205] : memref<2x64x32xf32, #tpu.memory_space<vmem>>, vector<1x64x32xf32>
    %558 = vector.shape_cast %557 : vector<1x64x32xf32> to vector<64x32xf32>
    %559 = vector.extract_strided_slice %15 {offsets = [0, 0], sizes = [1, 32], strides = [1, 1]} : vector<2x32xf32> to vector<1x32xf32>
    %cst_206 = arith.constant dense<0.000000e+00> : vector<8x32xf32>
    %560 = tpu.matmul %556, %558, %cst_206 {dimension_numbers = #tpu.dot_dimension_numbers<[1], [0], [0], [1], [0, 0, 1, 1], [], []>} : vector<8x64xf32>, vector<64x32xf32>, vector<8x32xf32> -> vector<8x32xf32>
    %561 = vector.broadcast %559 : vector<1x32xf32> to vector<8x32xf32>
    %562 = arith.addf %560, %561 : vector<8x32xf32>
    %563 = arith.addf %512, %562 : vector<8x32xf32>
    %564 = vector.extract_strided_slice %8 {offsets = [1, 0], sizes = [1, 32], strides = [1, 1]} : vector<2x32xf32> to vector<1x32xf32>
    %565 = vector.extract_strided_slice %9 {offsets = [1, 0], sizes = [1, 32], strides = [1, 1]} : vector<2x32xf32> to vector<1x32xf32>
    %cst_207 = arith.constant dense<0.000000e+00> : vector<8xf32>
    %566 = vector.multi_reduction <add>, %563, %cst_207 [1] : vector<8x32xf32> to vector<8xf32>
    %567 = vector.shape_cast %566 : vector<8xf32> to vector<8x1xf32>
    %cst_208 = arith.constant 3.200000e+01 : f32
    %568 = vector.broadcast %cst_208 : f32 to vector<8x1xf32>
    %569 = arith.divf %567, %568 : vector<8x1xf32>
    %570 = vector.broadcast %569 : vector<8x1xf32> to vector<8x32xf32>
    %571 = arith.subf %563, %570 : vector<8x32xf32>
    %572 = arith.mulf %571, %571 : vector<8x32xf32>
    %cst_209 = arith.constant dense<0.000000e+00> : vector<8xf32>
    %573 = vector.multi_reduction <add>, %572, %cst_209 [1] : vector<8x32xf32> to vector<8xf32>
    %574 = vector.shape_cast %573 : vector<8xf32> to vector<8x1xf32>
    %cst_210 = arith.constant 3.200000e+01 : f32
    %575 = vector.broadcast %cst_210 : f32 to vector<8x1xf32>
    %576 = arith.divf %574, %575 : vector<8x1xf32>
    %577 = vector.broadcast %569 : vector<8x1xf32> to vector<8x32xf32>
    %578 = arith.subf %563, %577 : vector<8x32xf32>
    %cst_211 = arith.constant 9.99999974E-6 : f32
    %579 = vector.broadcast %cst_211 : f32 to vector<8x1xf32>
    %580 = arith.addf %576, %579 : vector<8x1xf32>
    %581 = math.rsqrt %580 : vector<8x1xf32>
    %582 = vector.broadcast %581 : vector<8x1xf32> to vector<8x32xf32>
    %583 = arith.mulf %578, %582 : vector<8x32xf32>
    %584 = vector.broadcast %564 : vector<1x32xf32> to vector<8x32xf32>
    %585 = arith.mulf %583, %584 : vector<8x32xf32>
    %586 = vector.broadcast %565 : vector<1x32xf32> to vector<8x32xf32>
    %587 = arith.addf %585, %586 : vector<8x32xf32>
    %c1_212 = arith.constant 1 : index
    %c0_213 = arith.constant 0 : index
    %c0_214 = arith.constant 0 : index
    %588 = vector.load %arg20[%c1_212, %c0_213, %c0_214] : memref<2x32x96xf32, #tpu.memory_space<vmem>>, vector<1x32x96xf32>
    %589 = vector.shape_cast %588 : vector<1x32x96xf32> to vector<32x96xf32>
    %590 = vector.extract_strided_slice %10 {offsets = [1, 0], sizes = [1, 96], strides = [1, 1]} : vector<2x96xf32> to vector<1x96xf32>
    %cst_215 = arith.constant dense<0.000000e+00> : vector<8x96xf32>
    %591 = tpu.matmul %587, %589, %cst_215 {dimension_numbers = #tpu.dot_dimension_numbers<[1], [0], [0], [1], [0, 0, 1, 1], [], []>} : vector<8x32xf32>, vector<32x96xf32>, vector<8x96xf32> -> vector<8x96xf32>
    %592 = vector.broadcast %590 : vector<1x96xf32> to vector<8x96xf32>
    %593 = arith.addf %591, %592 : vector<8x96xf32>
    %c1_216 = arith.constant 1 : index
    %c0_217 = arith.constant 0 : index
    %c0_218 = arith.constant 0 : index
    %594 = vector.load %arg22[%c1_216, %c0_217, %c0_218] : memref<2x32x32xf32, #tpu.memory_space<vmem>>, vector<1x32x32xf32>
    %595 = vector.shape_cast %594 : vector<1x32x32xf32> to vector<32x32xf32>
    %596 = vector.extract_strided_slice %11 {offsets = [1, 0], sizes = [1, 32], strides = [1, 1]} : vector<2x32xf32> to vector<1x32xf32>
    %597 = vector.extract_strided_slice %593 {offsets = [0, 0], sizes = [8, 8], strides = [1, 1]} : vector<8x96xf32> to vector<8x8xf32>
    %598 = vector.extract_strided_slice %593 {offsets = [0, 32], sizes = [8, 8], strides = [1, 1]} : vector<8x96xf32> to vector<8x8xf32>
    %599 = vector.extract_strided_slice %593 {offsets = [0, 64], sizes = [8, 8], strides = [1, 1]} : vector<8x96xf32> to vector<8x8xf32>
    %cst_219 = arith.constant dense<0.000000e+00> : vector<8x8xf32>
    %600 = tpu.matmul %597, %598, %cst_219 {dimension_numbers = #tpu.dot_dimension_numbers<[1], [1], [0], [0], [0, 0, 1, 0], [], []>} : vector<8x8xf32>, vector<8x8xf32>, vector<8x8xf32> -> vector<8x8xf32>
    %cst_220 = arith.constant 0.353553385 : f32
    %601 = vector.broadcast %cst_220 : f32 to vector<8x8xf32>
    %602 = arith.mulf %600, %601 : vector<8x8xf32>
    %603 = arith.addf %602, %393 : vector<8x8xf32>
    %cst_221 = arith.constant dense<0xFF800000> : vector<8xf32>
    %604 = vector.multi_reduction <maximumf>, %603, %cst_221 [1] : vector<8x8xf32> to vector<8xf32>
    %605 = vector.shape_cast %604 : vector<8xf32> to vector<8x1xf32>
    %606 = vector.broadcast %605 : vector<8x1xf32> to vector<8x8xf32>
    %607 = arith.subf %603, %606 : vector<8x8xf32>
    %608 = math.exp %607 : vector<8x8xf32>
    %cst_222 = arith.constant dense<0.000000e+00> : vector<8xf32>
    %609 = vector.multi_reduction <add>, %608, %cst_222 [1] : vector<8x8xf32> to vector<8xf32>
    %610 = vector.shape_cast %609 : vector<8xf32> to vector<8x1xf32>
    %611 = tpu.reciprocal %610 {approx = true} : vector<8x1xf32> -> vector<8x1xf32>
    %612 = vector.broadcast %611 : vector<8x1xf32> to vector<8x8xf32>
    %613 = arith.mulf %608, %612 : vector<8x8xf32>
    %cst_223 = arith.constant dense<0.000000e+00> : vector<8x8xf32>
    %614 = tpu.matmul %613, %599, %cst_223 {dimension_numbers = #tpu.dot_dimension_numbers<[1], [0], [0], [1], [0, 0, 1, 1], [], []>} : vector<8x8xf32>, vector<8x8xf32>, vector<8x8xf32> -> vector<8x8xf32>
    %615 = vector.extract_strided_slice %595 {offsets = [0, 0], sizes = [8, 32], strides = [1, 1]} : vector<32x32xf32> to vector<8x32xf32>
    %cst_224 = arith.constant dense<0.000000e+00> : vector<8x32xf32>
    %616 = tpu.matmul %614, %615, %cst_224 {dimension_numbers = #tpu.dot_dimension_numbers<[1], [0], [0], [1], [0, 0, 1, 1], [], []>} : vector<8x8xf32>, vector<8x32xf32>, vector<8x32xf32> -> vector<8x32xf32>
    %617 = vector.extract_strided_slice %593 {offsets = [0, 8], sizes = [8, 8], strides = [1, 1]} : vector<8x96xf32> to vector<8x8xf32>
    %618 = vector.extract_strided_slice %593 {offsets = [0, 40], sizes = [8, 8], strides = [1, 1]} : vector<8x96xf32> to vector<8x8xf32>
    %619 = vector.extract_strided_slice %593 {offsets = [0, 72], sizes = [8, 8], strides = [1, 1]} : vector<8x96xf32> to vector<8x8xf32>
    %cst_225 = arith.constant dense<0.000000e+00> : vector<8x8xf32>
    %620 = tpu.matmul %617, %618, %cst_225 {dimension_numbers = #tpu.dot_dimension_numbers<[1], [1], [0], [0], [0, 0, 1, 0], [], []>} : vector<8x8xf32>, vector<8x8xf32>, vector<8x8xf32> -> vector<8x8xf32>
    %cst_226 = arith.constant 0.353553385 : f32
    %621 = vector.broadcast %cst_226 : f32 to vector<8x8xf32>
    %622 = arith.mulf %620, %621 : vector<8x8xf32>
    %623 = arith.addf %622, %393 : vector<8x8xf32>
    %cst_227 = arith.constant dense<0xFF800000> : vector<8xf32>
    %624 = vector.multi_reduction <maximumf>, %623, %cst_227 [1] : vector<8x8xf32> to vector<8xf32>
    %625 = vector.shape_cast %624 : vector<8xf32> to vector<8x1xf32>
    %626 = vector.broadcast %625 : vector<8x1xf32> to vector<8x8xf32>
    %627 = arith.subf %623, %626 : vector<8x8xf32>
    %628 = math.exp %627 : vector<8x8xf32>
    %cst_228 = arith.constant dense<0.000000e+00> : vector<8xf32>
    %629 = vector.multi_reduction <add>, %628, %cst_228 [1] : vector<8x8xf32> to vector<8xf32>
    %630 = vector.shape_cast %629 : vector<8xf32> to vector<8x1xf32>
    %631 = tpu.reciprocal %630 {approx = true} : vector<8x1xf32> -> vector<8x1xf32>
    %632 = vector.broadcast %631 : vector<8x1xf32> to vector<8x8xf32>
    %633 = arith.mulf %628, %632 : vector<8x8xf32>
    %cst_229 = arith.constant dense<0.000000e+00> : vector<8x8xf32>
    %634 = tpu.matmul %633, %619, %cst_229 {dimension_numbers = #tpu.dot_dimension_numbers<[1], [0], [0], [1], [0, 0, 1, 1], [], []>} : vector<8x8xf32>, vector<8x8xf32>, vector<8x8xf32> -> vector<8x8xf32>
    %635 = vector.extract_strided_slice %595 {offsets = [8, 0], sizes = [8, 32], strides = [1, 1]} : vector<32x32xf32> to vector<8x32xf32>
    %cst_230 = arith.constant dense<0.000000e+00> : vector<8x32xf32>
    %636 = tpu.matmul %634, %635, %cst_230 {dimension_numbers = #tpu.dot_dimension_numbers<[1], [0], [0], [1], [0, 0, 1, 1], [], []>} : vector<8x8xf32>, vector<8x32xf32>, vector<8x32xf32> -> vector<8x32xf32>
    %637 = arith.addf %616, %636 : vector<8x32xf32>
    %638 = vector.extract_strided_slice %593 {offsets = [0, 16], sizes = [8, 8], strides = [1, 1]} : vector<8x96xf32> to vector<8x8xf32>
    %639 = vector.extract_strided_slice %593 {offsets = [0, 48], sizes = [8, 8], strides = [1, 1]} : vector<8x96xf32> to vector<8x8xf32>
    %640 = vector.extract_strided_slice %593 {offsets = [0, 80], sizes = [8, 8], strides = [1, 1]} : vector<8x96xf32> to vector<8x8xf32>
    %cst_231 = arith.constant dense<0.000000e+00> : vector<8x8xf32>
    %641 = tpu.matmul %638, %639, %cst_231 {dimension_numbers = #tpu.dot_dimension_numbers<[1], [1], [0], [0], [0, 0, 1, 0], [], []>} : vector<8x8xf32>, vector<8x8xf32>, vector<8x8xf32> -> vector<8x8xf32>
    %cst_232 = arith.constant 0.353553385 : f32
    %642 = vector.broadcast %cst_232 : f32 to vector<8x8xf32>
    %643 = arith.mulf %641, %642 : vector<8x8xf32>
    %644 = arith.addf %643, %393 : vector<8x8xf32>
    %cst_233 = arith.constant dense<0xFF800000> : vector<8xf32>
    %645 = vector.multi_reduction <maximumf>, %644, %cst_233 [1] : vector<8x8xf32> to vector<8xf32>
    %646 = vector.shape_cast %645 : vector<8xf32> to vector<8x1xf32>
    %647 = vector.broadcast %646 : vector<8x1xf32> to vector<8x8xf32>
    %648 = arith.subf %644, %647 : vector<8x8xf32>
    %649 = math.exp %648 : vector<8x8xf32>
    %cst_234 = arith.constant dense<0.000000e+00> : vector<8xf32>
    %650 = vector.multi_reduction <add>, %649, %cst_234 [1] : vector<8x8xf32> to vector<8xf32>
    %651 = vector.shape_cast %650 : vector<8xf32> to vector<8x1xf32>
    %652 = tpu.reciprocal %651 {approx = true} : vector<8x1xf32> -> vector<8x1xf32>
    %653 = vector.broadcast %652 : vector<8x1xf32> to vector<8x8xf32>
    %654 = arith.mulf %649, %653 : vector<8x8xf32>
    %cst_235 = arith.constant dense<0.000000e+00> : vector<8x8xf32>
    %655 = tpu.matmul %654, %640, %cst_235 {dimension_numbers = #tpu.dot_dimension_numbers<[1], [0], [0], [1], [0, 0, 1, 1], [], []>} : vector<8x8xf32>, vector<8x8xf32>, vector<8x8xf32> -> vector<8x8xf32>
    %656 = vector.extract_strided_slice %595 {offsets = [16, 0], sizes = [8, 32], strides = [1, 1]} : vector<32x32xf32> to vector<8x32xf32>
    %cst_236 = arith.constant dense<0.000000e+00> : vector<8x32xf32>
    %657 = tpu.matmul %655, %656, %cst_236 {dimension_numbers = #tpu.dot_dimension_numbers<[1], [0], [0], [1], [0, 0, 1, 1], [], []>} : vector<8x8xf32>, vector<8x32xf32>, vector<8x32xf32> -> vector<8x32xf32>
    %658 = arith.addf %637, %657 : vector<8x32xf32>
    %659 = vector.extract_strided_slice %593 {offsets = [0, 24], sizes = [8, 8], strides = [1, 1]} : vector<8x96xf32> to vector<8x8xf32>
    %660 = vector.extract_strided_slice %593 {offsets = [0, 56], sizes = [8, 8], strides = [1, 1]} : vector<8x96xf32> to vector<8x8xf32>
    %661 = vector.extract_strided_slice %593 {offsets = [0, 88], sizes = [8, 8], strides = [1, 1]} : vector<8x96xf32> to vector<8x8xf32>
    %cst_237 = arith.constant dense<0.000000e+00> : vector<8x8xf32>
    %662 = tpu.matmul %659, %660, %cst_237 {dimension_numbers = #tpu.dot_dimension_numbers<[1], [1], [0], [0], [0, 0, 1, 0], [], []>} : vector<8x8xf32>, vector<8x8xf32>, vector<8x8xf32> -> vector<8x8xf32>
    %cst_238 = arith.constant 0.353553385 : f32
    %663 = vector.broadcast %cst_238 : f32 to vector<8x8xf32>
    %664 = arith.mulf %662, %663 : vector<8x8xf32>
    %665 = arith.addf %664, %393 : vector<8x8xf32>
    %cst_239 = arith.constant dense<0xFF800000> : vector<8xf32>
    %666 = vector.multi_reduction <maximumf>, %665, %cst_239 [1] : vector<8x8xf32> to vector<8xf32>
    %667 = vector.shape_cast %666 : vector<8xf32> to vector<8x1xf32>
    %668 = vector.broadcast %667 : vector<8x1xf32> to vector<8x8xf32>
    %669 = arith.subf %665, %668 : vector<8x8xf32>
    %670 = math.exp %669 : vector<8x8xf32>
    %cst_240 = arith.constant dense<0.000000e+00> : vector<8xf32>
    %671 = vector.multi_reduction <add>, %670, %cst_240 [1] : vector<8x8xf32> to vector<8xf32>
    %672 = vector.shape_cast %671 : vector<8xf32> to vector<8x1xf32>
    %673 = tpu.reciprocal %672 {approx = true} : vector<8x1xf32> -> vector<8x1xf32>
    %674 = vector.broadcast %673 : vector<8x1xf32> to vector<8x8xf32>
    %675 = arith.mulf %670, %674 : vector<8x8xf32>
    %cst_241 = arith.constant dense<0.000000e+00> : vector<8x8xf32>
    %676 = tpu.matmul %675, %661, %cst_241 {dimension_numbers = #tpu.dot_dimension_numbers<[1], [0], [0], [1], [0, 0, 1, 1], [], []>} : vector<8x8xf32>, vector<8x8xf32>, vector<8x8xf32> -> vector<8x8xf32>
    %677 = vector.extract_strided_slice %595 {offsets = [24, 0], sizes = [8, 32], strides = [1, 1]} : vector<32x32xf32> to vector<8x32xf32>
    %cst_242 = arith.constant dense<0.000000e+00> : vector<8x32xf32>
    %678 = tpu.matmul %676, %677, %cst_242 {dimension_numbers = #tpu.dot_dimension_numbers<[1], [0], [0], [1], [0, 0, 1, 1], [], []>} : vector<8x8xf32>, vector<8x32xf32>, vector<8x32xf32> -> vector<8x32xf32>
    %679 = arith.addf %658, %678 : vector<8x32xf32>
    %680 = vector.broadcast %596 : vector<1x32xf32> to vector<8x32xf32>
    %681 = arith.addf %679, %680 : vector<8x32xf32>
    %682 = arith.addf %563, %681 : vector<8x32xf32>
    %683 = vector.extract_strided_slice %12 {offsets = [1, 0], sizes = [1, 32], strides = [1, 1]} : vector<2x32xf32> to vector<1x32xf32>
    %684 = vector.extract_strided_slice %13 {offsets = [1, 0], sizes = [1, 32], strides = [1, 1]} : vector<2x32xf32> to vector<1x32xf32>
    %cst_243 = arith.constant dense<0.000000e+00> : vector<8xf32>
    %685 = vector.multi_reduction <add>, %682, %cst_243 [1] : vector<8x32xf32> to vector<8xf32>
    %686 = vector.shape_cast %685 : vector<8xf32> to vector<8x1xf32>
    %cst_244 = arith.constant 3.200000e+01 : f32
    %687 = vector.broadcast %cst_244 : f32 to vector<8x1xf32>
    %688 = arith.divf %686, %687 : vector<8x1xf32>
    %689 = vector.broadcast %688 : vector<8x1xf32> to vector<8x32xf32>
    %690 = arith.subf %682, %689 : vector<8x32xf32>
    %691 = arith.mulf %690, %690 : vector<8x32xf32>
    %cst_245 = arith.constant dense<0.000000e+00> : vector<8xf32>
    %692 = vector.multi_reduction <add>, %691, %cst_245 [1] : vector<8x32xf32> to vector<8xf32>
    %693 = vector.shape_cast %692 : vector<8xf32> to vector<8x1xf32>
    %cst_246 = arith.constant 3.200000e+01 : f32
    %694 = vector.broadcast %cst_246 : f32 to vector<8x1xf32>
    %695 = arith.divf %693, %694 : vector<8x1xf32>
    %696 = vector.broadcast %688 : vector<8x1xf32> to vector<8x32xf32>
    %697 = arith.subf %682, %696 : vector<8x32xf32>
    %cst_247 = arith.constant 9.99999974E-6 : f32
    %698 = vector.broadcast %cst_247 : f32 to vector<8x1xf32>
    %699 = arith.addf %695, %698 : vector<8x1xf32>
    %700 = math.rsqrt %699 : vector<8x1xf32>
    %701 = vector.broadcast %700 : vector<8x1xf32> to vector<8x32xf32>
    %702 = arith.mulf %697, %701 : vector<8x32xf32>
    %703 = vector.broadcast %683 : vector<1x32xf32> to vector<8x32xf32>
    %704 = arith.mulf %702, %703 : vector<8x32xf32>
    %705 = vector.broadcast %684 : vector<1x32xf32> to vector<8x32xf32>
    %706 = arith.addf %704, %705 : vector<8x32xf32>
    %c1_248 = arith.constant 1 : index
    %c0_249 = arith.constant 0 : index
    %c0_250 = arith.constant 0 : index
    %707 = vector.load %arg26[%c1_248, %c0_249, %c0_250] : memref<2x32x64xf32, #tpu.memory_space<vmem>>, vector<1x32x64xf32>
    %708 = vector.shape_cast %707 : vector<1x32x64xf32> to vector<32x64xf32>
    %709 = vector.extract_strided_slice %14 {offsets = [1, 0], sizes = [1, 64], strides = [1, 1]} : vector<2x64xf32> to vector<1x64xf32>
    %cst_251 = arith.constant dense<0.000000e+00> : vector<8x64xf32>
    %710 = tpu.matmul %706, %708, %cst_251 {dimension_numbers = #tpu.dot_dimension_numbers<[1], [0], [0], [1], [0, 0, 1, 1], [], []>} : vector<8x32xf32>, vector<32x64xf32>, vector<8x64xf32> -> vector<8x64xf32>
    %711 = vector.broadcast %709 : vector<1x64xf32> to vector<8x64xf32>
    %712 = arith.addf %710, %711 : vector<8x64xf32>
    %cst_252 = arith.constant 0.636619746 : f32
    %713 = math.sqrt %cst_252 : f32
    %cst_253 = arith.constant 5.000000e-01 : f32
    %714 = vector.broadcast %cst_253 : f32 to vector<8x64xf32>
    %715 = arith.mulf %714, %712 : vector<8x64xf32>
    %cst_254 = arith.constant 4.471500e-02 : f32
    %716 = vector.broadcast %cst_254 : f32 to vector<8x64xf32>
    %717 = arith.mulf %716, %712 : vector<8x64xf32>
    %718 = arith.mulf %717, %712 : vector<8x64xf32>
    %719 = arith.mulf %718, %712 : vector<8x64xf32>
    %720 = arith.addf %712, %719 : vector<8x64xf32>
    %721 = vector.broadcast %713 : f32 to vector<8x64xf32>
    %722 = arith.mulf %721, %720 : vector<8x64xf32>
    %723 = math.tanh %722 : vector<8x64xf32>
    %cst_255 = arith.constant 1.000000e+00 : f32
    %724 = vector.broadcast %cst_255 : f32 to vector<8x64xf32>
    %725 = arith.addf %724, %723 : vector<8x64xf32>
    %726 = arith.mulf %715, %725 : vector<8x64xf32>
    %c1_256 = arith.constant 1 : index
    %c0_257 = arith.constant 0 : index
    %c0_258 = arith.constant 0 : index
    %727 = vector.load %arg28[%c1_256, %c0_257, %c0_258] : memref<2x64x32xf32, #tpu.memory_space<vmem>>, vector<1x64x32xf32>
    %728 = vector.shape_cast %727 : vector<1x64x32xf32> to vector<64x32xf32>
    %729 = vector.extract_strided_slice %15 {offsets = [1, 0], sizes = [1, 32], strides = [1, 1]} : vector<2x32xf32> to vector<1x32xf32>
    %cst_259 = arith.constant dense<0.000000e+00> : vector<8x32xf32>
    %730 = tpu.matmul %726, %728, %cst_259 {dimension_numbers = #tpu.dot_dimension_numbers<[1], [0], [0], [1], [0, 0, 1, 1], [], []>} : vector<8x64xf32>, vector<64x32xf32>, vector<8x32xf32> -> vector<8x32xf32>
    %731 = vector.broadcast %729 : vector<1x32xf32> to vector<8x32xf32>
    %732 = arith.addf %730, %731 : vector<8x32xf32>
    %733 = arith.addf %682, %732 : vector<8x32xf32>
    %c0_260 = arith.constant 0 : index
    %c0_261 = arith.constant 0 : index
    %734 = vector.load %arg30[%c0_260, %c0_261] : memref<1x32xf32, #tpu.memory_space<vmem>>, vector<1x32xf32>
    %c0_262 = arith.constant 0 : index
    %c0_263 = arith.constant 0 : index
    %735 = vector.load %arg31[%c0_262, %c0_263] : memref<1x32xf32, #tpu.memory_space<vmem>>, vector<1x32xf32>
    %cst_264 = arith.constant dense<0.000000e+00> : vector<8xf32>
    %736 = vector.multi_reduction <add>, %733, %cst_264 [1] : vector<8x32xf32> to vector<8xf32>
    %737 = vector.shape_cast %736 : vector<8xf32> to vector<8x1xf32>
    %cst_265 = arith.constant 3.200000e+01 : f32
    %738 = vector.broadcast %cst_265 : f32 to vector<8x1xf32>
    %739 = arith.divf %737, %738 : vector<8x1xf32>
    %740 = vector.broadcast %739 : vector<8x1xf32> to vector<8x32xf32>
    %741 = arith.subf %733, %740 : vector<8x32xf32>
    %742 = arith.mulf %741, %741 : vector<8x32xf32>
    %cst_266 = arith.constant dense<0.000000e+00> : vector<8xf32>
    %743 = vector.multi_reduction <add>, %742, %cst_266 [1] : vector<8x32xf32> to vector<8xf32>
    %744 = vector.shape_cast %743 : vector<8xf32> to vector<8x1xf32>
    %cst_267 = arith.constant 3.200000e+01 : f32
    %745 = vector.broadcast %cst_267 : f32 to vector<8x1xf32>
    %746 = arith.divf %744, %745 : vector<8x1xf32>
    %747 = vector.broadcast %739 : vector<8x1xf32> to vector<8x32xf32>
    %748 = arith.subf %733, %747 : vector<8x32xf32>
    %cst_268 = arith.constant 9.99999974E-6 : f32
    %749 = vector.broadcast %cst_268 : f32 to vector<8x1xf32>
    %750 = arith.addf %746, %749 : vector<8x1xf32>
    %751 = math.rsqrt %750 : vector<8x1xf32>
    %752 = vector.broadcast %751 : vector<8x1xf32> to vector<8x32xf32>
    %753 = arith.mulf %748, %752 : vector<8x32xf32>
    %754 = vector.broadcast %734 : vector<1x32xf32> to vector<8x32xf32>
    %755 = arith.mulf %753, %754 : vector<8x32xf32>
    %756 = vector.broadcast %735 : vector<1x32xf32> to vector<8x32xf32>
    %757 = arith.addf %755, %756 : vector<8x32xf32>
    %c0_269 = arith.constant 0 : index
    %c0_270 = arith.constant 0 : index
    %758 = vector.load %arg32[%c0_269, %c0_270] : memref<32x3xf32, #tpu.memory_space<vmem>>, vector<32x3xf32>
    %c0_271 = arith.constant 0 : index
    %c0_272 = arith.constant 0 : index
    %759 = vector.load %arg33[%c0_271, %c0_272] : memref<1x3xf32, #tpu.memory_space<vmem>>, vector<1x3xf32>
    %cst_273 = arith.constant dense<0.000000e+00> : vector<8x3xf32>
    %760 = tpu.matmul %757, %758, %cst_273 {dimension_numbers = #tpu.dot_dimension_numbers<[1], [0], [0], [1], [0, 0, 1, 1], [], []>} : vector<8x32xf32>, vector<32x3xf32>, vector<8x3xf32> -> vector<8x3xf32>
    %761 = vector.broadcast %759 : vector<1x3xf32> to vector<8x3xf32>
    %762 = arith.addf %760, %761 : vector<8x3xf32>
    %763 = vector.extract_strided_slice %762 {offsets = [0, 0], sizes = [1, 3], strides = [1, 1]} : vector<8x3xf32> to vector<1x3xf32>
    %c0_274 = arith.constant 0 : index
    %c0_275 = arith.constant 0 : index
    %c0_276 = arith.constant 0 : index
    %764 = vector.load %arg34[%c0_274, %c0_275, %c0_276] : memref<1x1x3xf32, #tpu.memory_space<vmem>>, vector<1x1x3xf32>
    %765 = vector.shape_cast %764 : vector<1x1x3xf32> to vector<1x3xf32>
    %766 = vector.shape_cast %763 : vector<1x3xf32> to vector<1x1x3xf32>
    tpu.vector_store %arg34[%c0_274, %c0_275, %c0_276], %766 {strides = array<i32>} : memref<1x1x3xf32, #tpu.memory_space<vmem>>, vector<1x1x3xf32>,
    return
  }
  func.func @transform_0(%arg0: i32) -> (i32, i32, i32) {
    %c0_i32 = arith.constant 0 : i32
    %c0_i32_0 = arith.constant 0 : i32
    %c0_i32_1 = arith.constant 0 : i32
    return %arg0, %c0_i32, %c0_i32_0 : i32, i32, i32
  }
  func.func @transform_1(%arg0: i32) -> (i32, i32, i32) {
    %c0_i32 = arith.constant 0 : i32
    %c0_i32_0 = arith.constant 0 : i32
    %c0_i32_1 = arith.constant 0 : i32
    return %arg0, %c0_i32, %c0_i32_0 : i32, i32, i32
  }
  func.func @transform_2(%arg0: i32) -> (i32, i32) {
    %c0_i32 = arith.constant 0 : i32
    %c0_i32_0 = arith.constant 0 : i32
    %c0_i32_1 = arith.constant 0 : i32
    return %c0_i32, %c0_i32_0 : i32, i32
  }
  func.func @transform_3(%arg0: i32) -> (i32, i32) {
    %c0_i32 = arith.constant 0 : i32
    %c0_i32_0 = arith.constant 0 : i32
    %c0_i32_1 = arith.constant 0 : i32
    return %c0_i32, %c0_i32_0 : i32, i32
  }
  func.func @transform_4(%arg0: i32) -> (i32, i32) {
    %c0_i32 = arith.constant 0 : i32
    %c0_i32_0 = arith.constant 0 : i32
    %c0_i32_1 = arith.constant 0 : i32
    return %c0_i32, %c0_i32_0 : i32, i32
  }
  func.func @transform_5(%arg0: i32) -> (i32, i32, i32) {
    %c0_i32 = arith.constant 0 : i32
    %c0_i32_0 = arith.constant 0 : i32
    %c0_i32_1 = arith.constant 0 : i32
    %c0_i32_2 = arith.constant 0 : i32
    return %c0_i32, %c0_i32_0, %c0_i32_1 : i32, i32, i32
  }
  func.func @transform_6(%arg0: i32) -> (i32, i32) {
    %c0_i32 = arith.constant 0 : i32
    %c0_i32_0 = arith.constant 0 : i32
    %c0_i32_1 = arith.constant 0 : i32
    return %c0_i32, %c0_i32_0 : i32, i32
  }
  func.func @transform_7(%arg0: i32) -> (i32, i32, i32) {
    %c0_i32 = arith.constant 0 : i32
    %c0_i32_0 = arith.constant 0 : i32
    %c0_i32_1 = arith.constant 0 : i32
    %c0_i32_2 = arith.constant 0 : i32
    return %c0_i32, %c0_i32_0, %c0_i32_1 : i32, i32, i32
  }
  func.func @transform_8(%arg0: i32) -> (i32, i32) {
    %c0_i32 = arith.constant 0 : i32
    %c0_i32_0 = arith.constant 0 : i32
    %c0_i32_1 = arith.constant 0 : i32
    return %c0_i32, %c0_i32_0 : i32, i32
  }
  func.func @transform_9(%arg0: i32) -> (i32, i32) {
    %c0_i32 = arith.constant 0 : i32
    %c0_i32_0 = arith.constant 0 : i32
    %c0_i32_1 = arith.constant 0 : i32
    return %c0_i32, %c0_i32_0 : i32, i32
  }
  func.func @transform_10(%arg0: i32) -> (i32, i32) {
    %c0_i32 = arith.constant 0 : i32
    %c0_i32_0 = arith.constant 0 : i32
    %c0_i32_1 = arith.constant 0 : i32
    return %c0_i32, %c0_i32_0 : i32, i32
  }
  func.func @transform_11(%arg0: i32) -> (i32, i32, i32) {
    %c0_i32 = arith.constant 0 : i32
    %c0_i32_0 = arith.constant 0 : i32
    %c0_i32_1 = arith.constant 0 : i32
    %c0_i32_2 = arith.constant 0 : i32
    return %c0_i32, %c0_i32_0, %c0_i32_1 : i32, i32, i32
  }
  func.func @transform_12(%arg0: i32) -> (i32, i32) {
    %c0_i32 = arith.constant 0 : i32
    %c0_i32_0 = arith.constant 0 : i32
    %c0_i32_1 = arith.constant 0 : i32
    return %c0_i32, %c0_i32_0 : i32, i32
  }
  func.func @transform_13(%arg0: i32) -> (i32, i32, i32) {
    %c0_i32 = arith.constant 0 : i32
    %c0_i32_0 = arith.constant 0 : i32
    %c0_i32_1 = arith.constant 0 : i32
    %c0_i32_2 = arith.constant 0 : i32
    return %c0_i32, %c0_i32_0, %c0_i32_1 : i32, i32, i32
  }
  func.func @transform_14(%arg0: i32) -> (i32, i32) {
    %c0_i32 = arith.constant 0 : i32
    %c0_i32_0 = arith.constant 0 : i32
    %c0_i32_1 = arith.constant 0 : i32
    return %c0_i32, %c0_i32_0 : i32, i32
  }
  func.func @transform_15(%arg0: i32) -> (i32, i32) {
    %c0_i32 = arith.constant 0 : i32
    %c0_i32_0 = arith.constant 0 : i32
    %c0_i32_1 = arith.constant 0 : i32
    return %c0_i32, %c0_i32_0 : i32, i32
  }
  func.func @transform_16(%arg0: i32) -> (i32, i32) {
    %c0_i32 = arith.constant 0 : i32
    %c0_i32_0 = arith.constant 0 : i32
    %c0_i32_1 = arith.constant 0 : i32
    return %c0_i32, %c0_i32_0 : i32, i32
  }
  func.func @transform_17(%arg0: i32) -> (i32, i32) {
    %c0_i32 = arith.constant 0 : i32
    %c0_i32_0 = arith.constant 0 : i32
    %c0_i32_1 = arith.constant 0 : i32
    return %c0_i32, %c0_i32_0 : i32, i32
  }
  func.func @transform_18(%arg0: i32) -> (i32, i32) {
    %c0_i32 = arith.constant 0 : i32
    %c0_i32_0 = arith.constant 0 : i32
    %c0_i32_1 = arith.constant 0 : i32
    return %c0_i32, %c0_i32_0 : i32, i32
  }
  func.func @transform_19(%arg0: i32) -> (i32, i32, i32) {
    %c0_i32 = arith.constant 0 : i32
    %c0_i32_0 = arith.constant 0 : i32
    %c0_i32_1 = arith.constant 0 : i32
    %c0_i32_2 = arith.constant 0 : i32
    return %c0_i32, %c0_i32_0, %c0_i32_1 : i32, i32, i32
  }
  func.func @transform_20(%arg0: i32) -> (i32, i32) {
    %c0_i32 = arith.constant 0 : i32
    %c0_i32_0 = arith.constant 0 : i32
    %c0_i32_1 = arith.constant 0 : i32
    return %c0_i32, %c0_i32_0 : i32, i32
  }
  func.func @transform_21(%arg0: i32) -> (i32, i32, i32) {
    %c0_i32 = arith.constant 0 : i32
    %c0_i32_0 = arith.constant 0 : i32
    %c0_i32_1 = arith.constant 0 : i32
    %c0_i32_2 = arith.constant 0 : i32
    return %c0_i32, %c0_i32_0, %c0_i32_1 : i32, i32, i32
  }
  func.func @transform_22(%arg0: i32) -> (i32, i32) {
    %c0_i32 = arith.constant 0 : i32
    %c0_i32_0 = arith.constant 0 : i32
    %c0_i32_1 = arith.constant 0 : i32
    return %c0_i32, %c0_i32_0 : i32, i32
  }
  func.func @transform_23(%arg0: i32) -> (i32, i32) {
    %c0_i32 = arith.constant 0 : i32
    %c0_i32_0 = arith.constant 0 : i32
    %c0_i32_1 = arith.constant 0 : i32
    return %c0_i32, %c0_i32_0 : i32, i32
  }
  func.func @transform_24(%arg0: i32) -> (i32, i32) {
    %c0_i32 = arith.constant 0 : i32
    %c0_i32_0 = arith.constant 0 : i32
    %c0_i32_1 = arith.constant 0 : i32
    return %c0_i32, %c0_i32_0 : i32, i32
  }
  func.func @transform_25(%arg0: i32) -> (i32, i32, i32) {
    %c0_i32 = arith.constant 0 : i32
    %c0_i32_0 = arith.constant 0 : i32
    %c0_i32_1 = arith.constant 0 : i32
    %c0_i32_2 = arith.constant 0 : i32
    return %c0_i32, %c0_i32_0, %c0_i32_1 : i32, i32, i32
  }
  func.func @transform_26(%arg0: i32) -> (i32, i32) {
    %c0_i32 = arith.constant 0 : i32
    %c0_i32_0 = arith.constant 0 : i32
    %c0_i32_1 = arith.constant 0 : i32
    return %c0_i32, %c0_i32_0 : i32, i32
  }
  func.func @transform_27(%arg0: i32) -> (i32, i32, i32) {
    %c0_i32 = arith.constant 0 : i32
    %c0_i32_0 = arith.constant 0 : i32
    %c0_i32_1 = arith.constant 0 : i32
    %c0_i32_2 = arith.constant 0 : i32
    return %c0_i32, %c0_i32_0, %c0_i32_1 : i32, i32, i32
  }
  func.func @transform_28(%arg0: i32) -> (i32, i32) {
    %c0_i32 = arith.constant 0 : i32
    %c0_i32_0 = arith.constant 0 : i32
    %c0_i32_1 = arith.constant 0 : i32
    return %c0_i32, %c0_i32_0 : i32, i32
  }
  func.func @transform_29(%arg0: i32) -> (i32, i32) {
    %c0_i32 = arith.constant 0 : i32
    %c0_i32_0 = arith.constant 0 : i32
    %c0_i32_1 = arith.constant 0 : i32
    return %c0_i32, %c0_i32_0 : i32, i32
  }
  func.func @transform_30(%arg0: i32) -> (i32, i32) {
    %c0_i32 = arith.constant 0 : i32
    %c0_i32_0 = arith.constant 0 : i32
    %c0_i32_1 = arith.constant 0 : i32
    return %c0_i32, %c0_i32_0 : i32, i32
  }
  func.func @transform_31(%arg0: i32) -> (i32, i32) {
    %c0_i32 = arith.constant 0 : i32
    %c0_i32_0 = arith.constant 0 : i32
    %c0_i32_1 = arith.constant 0 : i32
    return %c0_i32, %c0_i32_0 : i32, i32
  }
  func.func @transform_32(%arg0: i32) -> (i32, i32) {
    %c0_i32 = arith.constant 0 : i32
    %c0_i32_0 = arith.constant 0 : i32
    %c0_i32_1 = arith.constant 0 : i32
    return %c0_i32, %c0_i32_0 : i32, i32
  }
  func.func @transform_33(%arg0: i32) -> (i32, i32, i32) {
    %c0_i32 = arith.constant 0 : i32
    %c0_i32_0 = arith.constant 0 : i32
    %c0_i32_1 = arith.constant 0 : i32
    return %arg0, %c0_i32, %c0_i32_0 : i32, i32, i32
  }
}

</mosaic_0001>

<llo_original>
// kernel: bert_gpt2_classifier.1
$region0: #{bert_gpt2_classifier.1}
  #allocation0 [shape = 'u32[]', space=smem, size = 0x4, offset = 0x4, fixed_abs, tag = 'smem constant byte address 0x4 - core index']
  #allocation1 [shape = 'u32[72,128]{1,0:T(1,128)}', space=vmem, size = 0x9000, scoped, tag = 'internal scratch']
  %s0 = inlined_call_operand.smem [shape: u32[34], index: -1, kind: input, shape index: {}]
  %s1 = sld [smem:[%s0]]
  %s2 = scalar_lea.smem %s0, 1
  %s3 = sld [smem:[%s2]]
  %s4 = scalar_lea.smem %s0, 2
  %s5 = sld [smem:[%s4]]
  %s6 = scalar_lea.smem %s0, 3
  %s7 = sld [smem:[%s6]]
  %s8 = scalar_lea.smem %s0, 4
  %s9 = sld [smem:[%s8]]
  %s10 = scalar_lea.smem %s0, 5
  %s11 = sld [smem:[%s10]]
  %s12 = scalar_lea.smem %s0, 6
  %s13 = sld [smem:[%s12]]
  %s14 = scalar_lea.smem %s0, 7
  %s15 = sld [smem:[%s14]]
  %s16 = scalar_lea.smem %s0, 8
  %s17 = sld [smem:[%s16]]
  %s18 = scalar_lea.smem %s0, 9
  %s19 = sld [smem:[%s18]]
  %s20 = scalar_lea.smem %s0, 10
  %s21 = sld [smem:[%s20]]
  %s22 = scalar_lea.smem %s0, 11
  %s23 = sld [smem:[%s22]]
  %s24 = scalar_lea.smem %s0, 12
  %s25 = sld [smem:[%s24]]
  %s26 = scalar_lea.smem %s0, 13
  %s27 = sld [smem:[%s26]]
  %s28 = scalar_lea.smem %s0, 14
  %s29 = sld [smem:[%s28]]
  %s30 = scalar_lea.smem %s0, 15
  %s31 = sld [smem:[%s30]]
  %s32 = scalar_lea.smem %s0, 16
  %s33 = sld [smem:[%s32]]
  %s34 = scalar_lea.smem %s0, 17
  %s35 = sld [smem:[%s34]]
  %s36 = scalar_lea.smem %s0, 18
  %s37 = sld [smem:[%s36]]
  %s38 = scalar_lea.smem %s0, 19
  %s39 = sld [smem:[%s38]]
  %s40 = scalar_lea.smem %s0, 20
  %s41 = sld [smem:[%s40]]
  %s42 = scalar_lea.smem %s0, 21
  %s43 = sld [smem:[%s42]]
  %s44 = scalar_lea.smem %s0, 22
  %s45 = sld [smem:[%s44]]
  %s46 = scalar_lea.smem %s0, 23
  %s47 = sld [smem:[%s46]]
  %s48 = scalar_lea.smem %s0, 24
  %s49 = sld [smem:[%s48]]
  %s50 = scalar_lea.smem %s0, 25
  %s51 = sld [smem:[%s50]]
  %s52 = scalar_lea.smem %s0, 26
  %s53 = sld [smem:[%s52]]
  %s54 = scalar_lea.smem %s0, 27
  %s55 = sld [smem:[%s54]]
  %s56 = scalar_lea.smem %s0, 28
  %s57 = sld [smem:[%s56]]
  %s58 = scalar_lea.smem %s0, 29
  %s59 = sld [smem:[%s58]]
  %s60 = scalar_lea.smem %s0, 30
  %s61 = sld [smem:[%s60]]
  %s62 = scalar_lea.smem %s0, 31
  %s63 = sld [smem:[%s62]]
  %s64 = scalar_lea.smem %s0, 32
  %s65 = sld [smem:[%s64]]
  %s66 = scalar_lea.smem %s0, 33
  %s67 = sld [smem:[%s66]]
  %s68 = sld [smem:[#allocation0]]
  $region165: #{bert_gpt2_classifier.1} parent=0
    _
  %s70 = ssub.s32 1, %s68
  %s71 = scalar_select 0, %s70, %s68
  $region1: #{bert_gpt2_classifier.1} parent=0
    #allocation2 [shape = 'u8[1024]{0}', space=vmem, size = 0x400, scoped, tag = 'output window, operand 0']
    #allocation3 [shape = 's32[2]{0}', space=sflag, size = 0x8, scoped, tag = 'scoped memory for bert_gpt2_classifier.1']
    %72 = vsyncpa [#allocation3], 0
    %s73 = scalar_lea.sflag [#allocation3], 1
    %74 = vsyncpa %s73, 0
    loop: start=0, step=1, limit=4
    $region2: #{bert_gpt2_classifier.1} parent=1 // loop_pre_header
      _
    $region3: #{bert_gpt2_classifier.1} parent=1 // loop_header
      %s76 = sphi 0, %s80
      %p77 = scmp.ge.s32.totalorder %s76, 4
      %s86 = sphi 0, %s88
      %s89 = sphi 0, %s86
      %s90 = sphi 0, %s89
      %s106 = sphi 0, %s90
      %s112 = sphi 0, %s114
      %s115 = sphi 0, %s112
      %s116 = sphi 0, %s115
      %s132 = sphi 0, %s116
      %s136 = sphi 0, %s136
      %s138 = sphi 0, %s136
      %s139 = sphi 0, %s138
      %s153 = sphi 0, %s139
      %s157 = sphi 0, %s157
      %s159 = sphi 0, %s157
      %s160 = sphi 0, %s159
      %s174 = sphi 0, %s160
      %s178 = sphi 0, %s178
      %s180 = sphi 0, %s178
      %s181 = sphi 0, %s180
      %s195 = sphi 0, %s181
      %s199 = sphi 0, %s199
      %s201 = sphi 0, %s199
      %s202 = sphi 0, %s201
      %s216 = sphi 0, %s202
      %s220 = sphi 0, %s220
      %s222 = sphi 0, %s220
      %s223 = sphi 0, %s222
      %s237 = sphi 0, %s223
      %s241 = sphi 0, %s241
      %s243 = sphi 0, %s241
      %s244 = sphi 0, %s243
      %s258 = sphi 0, %s244
      %s262 = sphi 0, %s262
      %s264 = sphi 0, %s262
      %s265 = sphi 0, %s264
      %s279 = sphi 0, %s265
      %s283 = sphi 0, %s283
      %s285 = sphi 0, %s283
      %s286 = sphi 0, %s285
      %s300 = sphi 0, %s286
      %s304 = sphi 0, %s304
      %s306 = sphi 0, %s304
      %s307 = sphi 0, %s306
      %s321 = sphi 0, %s307
      %s325 = sphi 0, %s325
      %s327 = sphi 0, %s325
      %s328 = sphi 0, %s327
      %s342 = sphi 0, %s328
      %s346 = sphi 0, %s346
      %s348 = sphi 0, %s346
      %s349 = sphi 0, %s348
      %s363 = sphi 0, %s349
      %s367 = sphi 0, %s367
      %s369 = sphi 0, %s367
      %s370 = sphi 0, %s369
      %s384 = sphi 0, %s370
      %s388 = sphi 0, %s388
      %s390 = sphi 0, %s388
      %s391 = sphi 0, %s390
      %s405 = sphi 0, %s391
      %s409 = sphi 0, %s409
      %s411 = sphi 0, %s409
      %s412 = sphi 0, %s411
      %s426 = sphi 0, %s412
      %s430 = sphi 0, %s430
      %s432 = sphi 0, %s430
      %s433 = sphi 0, %s432
      %s447 = sphi 0, %s433
      %s451 = sphi 0, %s451
      %s453 = sphi 0, %s451
      %s454 = sphi 0, %s453
      %s468 = sphi 0, %s454
      %s472 = sphi 0, %s472
      %s474 = sphi 0, %s472
      %s475 = sphi 0, %s474
      %s489 = sphi 0, %s475
      %s493 = sphi 0, %s493
      %s495 = sphi 0, %s493
      %s496 = sphi 0, %s495
      %s510 = sphi 0, %s496
      %s514 = sphi 0, %s514
      %s516 = sphi 0, %s514
      %s517 = sphi 0, %s516
      %s531 = sphi 0, %s517
      %s535 = sphi 0, %s535
      %s537 = sphi 0, %s535
      %s538 = sphi 0, %s537
      %s552 = sphi 0, %s538
      %s556 = sphi 0, %s556
      %s558 = sphi 0, %s556
      %s559 = sphi 0, %s558
      %s573 = sphi 0, %s559
      %s577 = sphi 0, %s577
      %s579 = sphi 0, %s577
      %s580 = sphi 0, %s579
      %s594 = sphi 0, %s580
      %s598 = sphi 0, %s598
      %s600 = sphi 0, %s598
      %s601 = sphi 0, %s600
      %s615 = sphi 0, %s601
      %s619 = sphi 0, %s619
      %s621 = sphi 0, %s619
      %s622 = sphi 0, %s621
      %s636 = sphi 0, %s622
      %s640 = sphi 0, %s640
      %s642 = sphi 0, %s640
      %s643 = sphi 0, %s642
      %s657 = sphi 0, %s643
      %s661 = sphi 0, %s661
      %s663 = sphi 0, %s661
      %s664 = sphi 0, %s663
      %s678 = sphi 0, %s664
      %s682 = sphi 0, %s682
      %s684 = sphi 0, %s682
      %s685 = sphi 0, %s684
      %s699 = sphi 0, %s685
      %s703 = sphi 0, %s703
      %s705 = sphi 0, %s703
      %s706 = sphi 0, %s705
      %s720 = sphi 0, %s706
      %s724 = sphi 0, %s724
      %s726 = sphi 0, %s724
      %s727 = sphi 0, %s726
      %s741 = sphi 0, %s727
      %s745 = sphi 0, %s745
      %s747 = sphi 0, %s745
      %s748 = sphi 0, %s747
      %s762 = sphi 0, %s748
      %s766 = sphi 0, %s766
      %s768 = sphi 0, %s766
      %s769 = sphi 0, %s768
      %s783 = sphi 0, %s769
      %s789 = sphi 0, %s791
      %s792 = sphi 0, %s789
      %s793 = sphi 0, %s792
      %s809 = sphi 0, %s793
    $region4: #{bert_gpt2_classifier.1} parent=1 // loop_header_branch
      %79 = sbr.rel (%p77) target = $region8
    $region5: #{bert_gpt2_classifier.1} parent=1 // loop_body
      %s81 = ssub.s32 %s76, 1
      %s82 = ssub.s32 %s76, 2
      %s83 = sadd.s32 %s76, 1
      %s84 = ssub.s32 %s76, %s83
      %p85 = scmp.eq.s32.totalorder %s84, 0
      %s87 = sadd.s32 %s86, 1
      %s88 = scalar_select %p85, %s86, %s87
      %p91 = pneg %p85
      %p92 = scmp.eq.s32.totalorder %s76, 1
      %p93 = por %p91, %p92
      %p94 = scmp.ne.s32.totalorder %s86, %s89
      %p95 = scmp.eq.s32.totalorder %s76, 0
      %p96 = por %p94, %p95
      %p97 = scmp.ne.s32.totalorder %s86, %s89
      %p98 = scmp.eq.s32.totalorder %s81, 1
      %p99 = por %p97, %p98
      %p100 = scmp.ne.s32.totalorder %s89, %s90
      %p101 = scmp.eq.s32.totalorder %s81, 0
      %p102 = por %p100, %p101
      %p103 = scmp.ne.s32.totalorder %s89, %s90
      %p104 = scmp.eq.s32.totalorder %s82, 1
      %p105 = por %p103, %p104
      %p107 = scmp.ne.s32.totalorder %s90, %s106
      %p108 = scmp.eq.s32.totalorder %s82, 0
      %p109 = por %p107, %p108
      %s110 = ssub.s32 %s76, %s83
      %p111 = scmp.eq.s32.totalorder %s110, 0
      %s113 = sadd.s32 %s112, 1
      %s114 = scalar_select %p111, %s112, %s113
      %p117 = pneg %p111
      %p118 = scmp.eq.s32.totalorder %s76, 1
      %p119 = por %p117, %p118
      %p120 = scmp.ne.s32.totalorder %s112, %s115
      %p121 = scmp.eq.s32.totalorder %s76, 0
      %p122 = por %p120, %p121
      %p123 = scmp.ne.s32.totalorder %s112, %s115
      %p124 = scmp.eq.s32.totalorder %s81, 1
      %p125 = por %p123, %p124
      %p126 = scmp.ne.s32.totalorder %s115, %s116
      %p127 = scmp.eq.s32.totalorder %s81, 0
      %p128 = por %p126, %p127
      %p129 = scmp.ne.s32.totalorder %s115, %s116
      %p130 = scmp.eq.s32.totalorder %s82, 1
      %p131 = por %p129, %p130
      %p133 = scmp.ne.s32.totalorder %s116, %s132
      %p134 = scmp.eq.s32.totalorder %s82, 0
      %p135 = por %p133, %p134
      %s137 = sadd.s32 %s136, 1
      %p140 = scmp.eq.s32.totalorder %s76, 1
      %p141 = scmp.ne.s32.totalorder %s136, %s138
      %p142 = scmp.eq.s32.totalorder %s76, 0
      %p143 = por %p141, %p142
      %p144 = scmp.ne.s32.totalorder %s136, %s138
      %p145 = scmp.eq.s32.totalorder %s81, 1
      %p146 = por %p144, %p145
      %p147 = scmp.ne.s32.totalorder %s138, %s139
      %p148 = scmp.eq.s32.totalorder %s81, 0
      %p149 = por %p147, %p148
      %p150 = scmp.ne.s32.totalorder %s138, %s139
      %p151 = scmp.eq.s32.totalorder %s82, 1
      %p152 = por %p150, %p151
      %p154 = scmp.ne.s32.totalorder %s139, %s153
      %p155 = scmp.eq.s32.totalorder %s82, 0
      %p156 = por %p154, %p155
      %s158 = sadd.s32 %s157, 1
      %p161 = scmp.eq.s32.totalorder %s76, 1
      %p162 = scmp.ne.s32.totalorder %s157, %s159
      %p163 = scmp.eq.s32.totalorder %s76, 0
      %p164 = por %p162, %p163
      %p165 = scmp.ne.s32.totalorder %s157, %s159
      %p166 = scmp.eq.s32.totalorder %s81, 1
      %p167 = por %p165, %p166
      %p168 = scmp.ne.s32.totalorder %s159, %s160
      %p169 = scmp.eq.s32.totalorder %s81, 0
      %p170 = por %p168, %p169
      %p171 = scmp.ne.s32.totalorder %s159, %s160
      %p172 = scmp.eq.s32.totalorder %s82, 1
      %p173 = por %p171, %p172
      %p175 = scmp.ne.s32.totalorder %s160, %s174
      %p176 = scmp.eq.s32.totalorder %s82, 0
      %p177 = por %p175, %p176
      %s179 = sadd.s32 %s178, 1
      %p182 = scmp.eq.s32.totalorder %s76, 1
      %p183 = scmp.ne.s32.totalorder %s178, %s180
      %p184 = scmp.eq.s32.totalorder %s76, 0
      %p185 = por %p183, %p184
      %p186 = scmp.ne.s32.totalorder %s178, %s180
      %p187 = scmp.eq.s32.totalorder %s81, 1
      %p188 = por %p186, %p187
      %p189 = scmp.ne.s32.totalorder %s180, %s181
      %p190 = scmp.eq.s32.totalorder %s81, 0
      %p191 = por %p189, %p190
      %p192 = scmp.ne.s32.totalorder %s180, %s181
      %p193 = scmp.eq.s32.totalorder %s82, 1
      %p194 = por %p192, %p193
      %p196 = scmp.ne.s32.totalorder %s181, %s195
      %p197 = scmp.eq.s32.totalorder %s82, 0
      %p198 = por %p196, %p197
      %s200 = sadd.s32 %s199, 1
      %p203 = scmp.eq.s32.totalorder %s76, 1
      %p204 = scmp.ne.s32.totalorder %s199, %s201
      %p205 = scmp.eq.s32.totalorder %s76, 0
      %p206 = por %p204, %p205
      %p207 = scmp.ne.s32.totalorder %s199, %s201
      %p208 = scmp.eq.s32.totalorder %s81, 1
      %p209 = por %p207, %p208
      %p210 = scmp.ne.s32.totalorder %s201, %s202
      %p211 = scmp.eq.s32.totalorder %s81, 0
      %p212 = por %p210, %p211
      %p213 = scmp.ne.s32.totalorder %s201, %s202
      %p214 = scmp.eq.s32.totalorder %s82, 1
      %p215 = por %p213, %p214
      %p217 = scmp.ne.s32.totalorder %s202, %s216
      %p218 = scmp.eq.s32.totalorder %s82, 0
      %p219 = por %p217, %p218
      %s221 = sadd.s32 %s220, 1
      %p224 = scmp.eq.s32.totalorder %s76, 1
      %p225 = scmp.ne.s32.totalorder %s220, %s222
      %p226 = scmp.eq.s32.totalorder %s76, 0
      %p227 = por %p225, %p226
      %p228 = scmp.ne.s32.totalorder %s220, %s222
      %p229 = scmp.eq.s32.totalorder %s81, 1
      %p230 = por %p228, %p229
      %p231 = scmp.ne.s32.totalorder %s222, %s223
      %p232 = scmp.eq.s32.totalorder %s81, 0
      %p233 = por %p231, %p232
      %p234 = scmp.ne.s32.totalorder %s222, %s223
      %p235 = scmp.eq.s32.totalorder %s82, 1
      %p236 = por %p234, %p235
      %p238 = scmp.ne.s32.totalorder %s223, %s237
      %p239 = scmp.eq.s32.totalorder %s82, 0
      %p240 = por %p238, %p239
      %s242 = sadd.s32 %s241, 1
      %p245 = scmp.eq.s32.totalorder %s76, 1
      %p246 = scmp.ne.s32.totalorder %s241, %s243
      %p247 = scmp.eq.s32.totalorder %s76, 0
      %p248 = por %p246, %p247
      %p249 = scmp.ne.s32.totalorder %s241, %s243
      %p250 = scmp.eq.s32.totalorder %s81, 1
      %p251 = por %p249, %p250
      %p252 = scmp.ne.s32.totalorder %s243, %s244
      %p253 = scmp.eq.s32.totalorder %s81, 0
      %p254 = por %p252, %p253
      %p255 = scmp.ne.s32.totalorder %s243, %s244
      %p256 = scmp.eq.s32.totalorder %s82, 1
      %p257 = por %p255, %p256
      %p259 = scmp.ne.s32.totalorder %s244, %s258
      %p260 = scmp.eq.s32.totalorder %s82, 0
      %p261 = por %p259, %p260
      %s263 = sadd.s32 %s262, 1
      %p266 = scmp.eq.s32.totalorder %s76, 1
      %p267 = scmp.ne.s32.totalorder %s262, %s264
      %p268 = scmp.eq.s32.totalorder %s76, 0
      %p269 = por %p267, %p268
      %p270 = scmp.ne.s32.totalorder %s262, %s264
      %p271 = scmp.eq.s32.totalorder %s81, 1
      %p272 = por %p270, %p271
      %p273 = scmp.ne.s32.totalorder %s264, %s265
      %p274 = scmp.eq.s32.totalorder %s81, 0
      %p275 = por %p273, %p274
      %p276 = scmp.ne.s32.totalorder %s264, %s265
      %p277 = scmp.eq.s32.totalorder %s82, 1
      %p278 = por %p276, %p277
      %p280 = scmp.ne.s32.totalorder %s265, %s279
      %p281 = scmp.eq.s32.totalorder %s82, 0
      %p282 = por %p280, %p281
      %s284 = sadd.s32 %s283, 1
      %p287 = scmp.eq.s32.totalorder %s76, 1
      %p288 = scmp.ne.s32.totalorder %s283, %s285
      %p289 = scmp.eq.s32.totalorder %s76, 0
      %p290 = por %p288, %p289
      %p291 = scmp.ne.s32.totalorder %s283, %s285
      %p292 = scmp.eq.s32.totalorder %s81, 1
      %p293 = por %p291, %p292
      %p294 = scmp.ne.s32.totalorder %s285, %s286
      %p295 = scmp.eq.s32.totalorder %s81, 0
      %p296 = por %p294, %p295
      %p297 = scmp.ne.s32.totalorder %s285, %s286
      %p298 = scmp.eq.s32.totalorder %s82, 1
      %p299 = por %p297, %p298
      %p301 = scmp.ne.s32.totalorder %s286, %s300
      %p302 = scmp.eq.s32.totalorder %s82, 0
      %p303 = por %p301, %p302
      %s305 = sadd.s32 %s304, 1
      %p308 = scmp.eq.s32.totalorder %s76, 1
      %p309 = scmp.ne.s32.totalorder %s304, %s306
      %p310 = scmp.eq.s32.totalorder %s76, 0
      %p311 = por %p309, %p310
      %p312 = scmp.ne.s32.totalorder %s304, %s306
      %p313 = scmp.eq.s32.totalorder %s81, 1
      %p314 = por %p312, %p313
      %p315 = scmp.ne.s32.totalorder %s306, %s307
      %p316 = scmp.eq.s32.totalorder %s81, 0
      %p317 = por %p315, %p316
      %p318 = scmp.ne.s32.totalorder %s306, %s307
      %p319 = scmp.eq.s32.totalorder %s82, 1
      %p320 = por %p318, %p319
      %p322 = scmp.ne.s32.totalorder %s307, %s321
      %p323 = scmp.eq.s32.totalorder %s82, 0
      %p324 = por %p322, %p323
      %s326 = sadd.s32 %s325, 1
      %p329 = scmp.eq.s32.totalorder %s76, 1
      %p330 = scmp.ne.s32.totalorder %s325, %s327
      %p331 = scmp.eq.s32.totalorder %s76, 0
      %p332 = por %p330, %p331
      %p333 = scmp.ne.s32.totalorder %s325, %s327
      %p334 = scmp.eq.s32.totalorder %s81, 1
      %p335 = por %p333, %p334
      %p336 = scmp.ne.s32.totalorder %s327, %s328
      %p337 = scmp.eq.s32.totalorder %s81, 0
      %p338 = por %p336, %p337
      %p339 = scmp.ne.s32.totalorder %s327, %s328
      %p340 = scmp.eq.s32.totalorder %s82, 1
      %p341 = por %p339, %p340
      %p343 = scmp.ne.s32.totalorder %s328, %s342
      %p344 = scmp.eq.s32.totalorder %s82, 0
      %p345 = por %p343, %p344
      %s347 = sadd.s32 %s346, 1
      %p350 = scmp.eq.s32.totalorder %s76, 1
      %p351 = scmp.ne.s32.totalorder %s346, %s348
      %p352 = scmp.eq.s32.totalorder %s76, 0
      %p353 = por %p351, %p352
      %p354 = scmp.ne.s32.totalorder %s346, %s348
      %p355 = scmp.eq.s32.totalorder %s81, 1
      %p356 = por %p354, %p355
      %p357 = scmp.ne.s32.totalorder %s348, %s349
      %p358 = scmp.eq.s32.totalorder %s81, 0
      %p359 = por %p357, %p358
      %p360 = scmp.ne.s32.totalorder %s348, %s349
      %p361 = scmp.eq.s32.totalorder %s82, 1
      %p362 = por %p360, %p361
      %p364 = scmp.ne.s32.totalorder %s349, %s363
      %p365 = scmp.eq.s32.totalorder %s82, 0
      %p366 = por %p364, %p365
      %s368 = sadd.s32 %s367, 1
      %p371 = scmp.eq.s32.totalorder %s76, 1
      %p372 = scmp.ne.s32.totalorder %s367, %s369
      %p373 = scmp.eq.s32.totalorder %s76, 0
      %p374 = por %p372, %p373
      %p375 = scmp.ne.s32.totalorder %s367, %s369
      %p376 = scmp.eq.s32.totalorder %s81, 1
      %p377 = por %p375, %p376
      %p378 = scmp.ne.s32.totalorder %s369, %s370
      %p379 = scmp.eq.s32.totalorder %s81, 0
      %p380 = por %p378, %p379
      %p381 = scmp.ne.s32.totalorder %s369, %s370
      %p382 = scmp.eq.s32.totalorder %s82, 1
      %p383 = por %p381, %p382
      %p385 = scmp.ne.s32.totalorder %s370, %s384
      %p386 = scmp.eq.s32.totalorder %s82, 0
      %p387 = por %p385, %p386
      %s389 = sadd.s32 %s388, 1
      %p392 = scmp.eq.s32.totalorder %s76, 1
      %p393 = scmp.ne.s32.totalorder %s388, %s390
      %p394 = scmp.eq.s32.totalorder %s76, 0
      %p395 = por %p393, %p394
      %p396 = scmp.ne.s32.totalorder %s388, %s390
      %p397 = scmp.eq.s32.totalorder %s81, 1
      %p398 = por %p396, %p397
      %p399 = scmp.ne.s32.totalorder %s390, %s391
      %p400 = scmp.eq.s32.totalorder %s81, 0
      %p401 = por %p399, %p400
      %p402 = scmp.ne.s32.totalorder %s390, %s391
      %p403 = scmp.eq.s32.totalorder %s82, 1
      %p404 = por %p402, %p403
      %p406 = scmp.ne.s32.totalorder %s391, %s405
      %p407 = scmp.eq.s32.totalorder %s82, 0
      %p408 = por %p406, %p407
      %s410 = sadd.s32 %s409, 1
      %p413 = scmp.eq.s32.totalorder %s76, 1
      %p414 = scmp.ne.s32.totalorder %s409, %s411
      %p415 = scmp.eq.s32.totalorder %s76, 0
      %p416 = por %p414, %p415
      %p417 = scmp.ne.s32.totalorder %s409, %s411
      %p418 = scmp.eq.s32.totalorder %s81, 1
      %p419 = por %p417, %p418
      %p420 = scmp.ne.s32.totalorder %s411, %s412
      %p421 = scmp.eq.s32.totalorder %s81, 0
      %p422 = por %p420, %p421
      %p423 = scmp.ne.s32.totalorder %s411, %s412
      %p424 = scmp.eq.s32.totalorder %s82, 1
      %p425 = por %p423, %p424
      %p427 = scmp.ne.s32.totalorder %s412, %s426
      %p428 = scmp.eq.s32.totalorder %s82, 0
      %p429 = por %p427, %p428
      %s431 = sadd.s32 %s430, 1
      %p434 = scmp.eq.s32.totalorder %s76, 1
      %p435 = scmp.ne.s32.totalorder %s430, %s432
      %p436 = scmp.eq.s32.totalorder %s76, 0
      %p437 = por %p435, %p436
      %p438 = scmp.ne.s32.totalorder %s430, %s432
      %p439 = scmp.eq.s32.totalorder %s81, 1
      %p440 = por %p438, %p439
      %p441 = scmp.ne.s32.totalorder %s432, %s433
      %p442 = scmp.eq.s32.totalorder %s81, 0
      %p443 = por %p441, %p442
      %p444 = scmp.ne.s32.totalorder %s432, %s433
      %p445 = scmp.eq.s32.totalorder %s82, 1
      %p446 = por %p444, %p445
      %p448 = scmp.ne.s32.totalorder %s433, %s447
      %p449 = scmp.eq.s32.totalorder %s82, 0
      %p450 = por %p448, %p449
      %s452 = sadd.s32 %s451, 1
      %p455 = scmp.eq.s32.totalorder %s76, 1
      %p456 = scmp.ne.s32.totalorder %s451, %s453
      %p457 = scmp.eq.s32.totalorder %s76, 0
      %p458 = por %p456, %p457
      %p459 = scmp.ne.s32.totalorder %s451, %s453
      %p460 = scmp.eq.s32.totalorder %s81, 1
      %p461 = por %p459, %p460
      %p462 = scmp.ne.s32.totalorder %s453, %s454
      %p463 = scmp.eq.s32.totalorder %s81, 0
      %p464 = por %p462, %p463
      %p465 = scmp.ne.s32.totalorder %s453, %s454
      %p466 = scmp.eq.s32.totalorder %s82, 1
      %p467 = por %p465, %p466
      %p469 = scmp.ne.s32.totalorder %s454, %s468
      %p470 = scmp.eq.s32.totalorder %s82, 0
      %p471 = por %p469, %p470
      %s473 = sadd.s32 %s472, 1
      %p476 = scmp.eq.s32.totalorder %s76, 1
      %p477 = scmp.ne.s32.totalorder %s472, %s474
      %p478 = scmp.eq.s32.totalorder %s76, 0
      %p479 = por %p477, %p478
      %p480 = scmp.ne.s32.totalorder %s472, %s474
      %p481 = scmp.eq.s32.totalorder %s81, 1
      %p482 = por %p480, %p481
      %p483 = scmp.ne.s32.totalorder %s474, %s475
      %p484 = scmp.eq.s32.totalorder %s81, 0
      %p485 = por %p483, %p484
      %p486 = scmp.ne.s32.totalorder %s474, %s475
      %p487 = scmp.eq.s32.totalorder %s82, 1
      %p488 = por %p486, %p487
      %p490 = scmp.ne.s32.totalorder %s475, %s489
      %p491 = scmp.eq.s32.totalorder %s82, 0
      %p492 = por %p490, %p491
      %s494 = sadd.s32 %s493, 1
      %p497 = scmp.eq.s32.totalorder %s76, 1
      %p498 = scmp.ne.s32.totalorder %s493, %s495
      %p499 = scmp.eq.s32.totalorder %s76, 0
      %p500 = por %p498, %p499
      %p501 = scmp.ne.s32.totalorder %s493, %s495
      %p502 = scmp.eq.s32.totalorder %s81, 1
      %p503 = por %p501, %p502
      %p504 = scmp.ne.s32.totalorder %s495, %s496
      %p505 = scmp.eq.s32.totalorder %s81, 0
      %p506 = por %p504, %p505
      %p507 = scmp.ne.s32.totalorder %s495, %s496
      %p508 = scmp.eq.s32.totalorder %s82, 1
      %p509 = por %p507, %p508
      %p511 = scmp.ne.s32.totalorder %s496, %s510
      %p512 = scmp.eq.s32.totalorder %s82, 0
      %p513 = por %p511, %p512
      %s515 = sadd.s32 %s514, 1
      %p518 = scmp.eq.s32.totalorder %s76, 1
      %p519 = scmp.ne.s32.totalorder %s514, %s516
      %p520 = scmp.eq.s32.totalorder %s76, 0
      %p521 = por %p519, %p520
      %p522 = scmp.ne.s32.totalorder %s514, %s516
      %p523 = scmp.eq.s32.totalorder %s81, 1
      %p524 = por %p522, %p523
      %p525 = scmp.ne.s32.totalorder %s516, %s517
      %p526 = scmp.eq.s32.totalorder %s81, 0
      %p527 = por %p525, %p526
      %p528 = scmp.ne.s32.totalorder %s516, %s517
      %p529 = scmp.eq.s32.totalorder %s82, 1
      %p530 = por %p528, %p529
      %p532 = scmp.ne.s32.totalorder %s517, %s531
      %p533 = scmp.eq.s32.totalorder %s82, 0
      %p534 = por %p532, %p533
      %s536 = sadd.s32 %s535, 1
      %p539 = scmp.eq.s32.totalorder %s76, 1
      %p540 = scmp.ne.s32.totalorder %s535, %s537
      %p541 = scmp.eq.s32.totalorder %s76, 0
      %p542 = por %p540, %p541
      %p543 = scmp.ne.s32.totalorder %s535, %s537
      %p544 = scmp.eq.s32.totalorder %s81, 1
      %p545 = por %p543, %p544
      %p546 = scmp.ne.s32.totalorder %s537, %s538
      %p547 = scmp.eq.s32.totalorder %s81, 0
      %p548 = por %p546, %p547
      %p549 = scmp.ne.s32.totalorder %s537, %s538
      %p550 = scmp.eq.s32.totalorder %s82, 1
      %p551 = por %p549, %p550
      %p553 = scmp.ne.s32.totalorder %s538, %s552
      %p554 = scmp.eq.s32.totalorder %s82, 0
      %p555 = por %p553, %p554
      %s557 = sadd.s32 %s556, 1
      %p560 = scmp.eq.s32.totalorder %s76, 1
      %p561 = scmp.ne.s32.totalorder %s556, %s558
      %p562 = scmp.eq.s32.totalorder %s76, 0
      %p563 = por %p561, %p562
      %p564 = scmp.ne.s32.totalorder %s556, %s558
      %p565 = scmp.eq.s32.totalorder %s81, 1
      %p566 = por %p564, %p565
      %p567 = scmp.ne.s32.totalorder %s558, %s559
      %p568 = scmp.eq.s32.totalorder %s81, 0
      %p569 = por %p567, %p568
      %p570 = scmp.ne.s32.totalorder %s558, %s559
      %p571 = scmp.eq.s32.totalorder %s82, 1
      %p572 = por %p570, %p571
      %p574 = scmp.ne.s32.totalorder %s559, %s573
      %p575 = scmp.eq.s32.totalorder %s82, 0
      %p576 = por %p574, %p575
      %s578 = sadd.s32 %s577, 1
      %p581 = scmp.eq.s32.totalorder %s76, 1
      %p582 = scmp.ne.s32.totalorder %s577, %s579
      %p583 = scmp.eq.s32.totalorder %s76, 0
      %p584 = por %p582, %p583
      %p585 = scmp.ne.s32.totalorder %s577, %s579
      %p586 = scmp.eq.s32.totalorder %s81, 1
      %p587 = por %p585, %p586
      %p588 = scmp.ne.s32.totalorder %s579, %s580
      %p589 = scmp.eq.s32.totalorder %s81, 0
      %p590 = por %p588, %p589
      %p591 = scmp.ne.s32.totalorder %s579, %s580
      %p592 = scmp.eq.s32.totalorder %s82, 1
      %p593 = por %p591, %p592
      %p595 = scmp.ne.s32.totalorder %s580, %s594
      %p596 = scmp.eq.s32.totalorder %s82, 0
      %p597 = por %p595, %p596
      %s599 = sadd.s32 %s598, 1
      %p602 = scmp.eq.s32.totalorder %s76, 1
      %p603 = scmp.ne.s32.totalorder %s598, %s600
      %p604 = scmp.eq.s32.totalorder %s76, 0
      %p605 = por %p603, %p604
      %p606 = scmp.ne.s32.totalorder %s598, %s600
      %p607 = scmp.eq.s32.totalorder %s81, 1
      %p608 = por %p606, %p607
      %p609 = scmp.ne.s32.totalorder %s600, %s601
      %p610 = scmp.eq.s32.totalorder %s81, 0
      %p611 = por %p609, %p610
      %p612 = scmp.ne.s32.totalorder %s600, %s601
      %p613 = scmp.eq.s32.totalorder %s82, 1
      %p614 = por %p612, %p613
      %p616 = scmp.ne.s32.totalorder %s601, %s615
      %p617 = scmp.eq.s32.totalorder %s82, 0
      %p618 = por %p616, %p617
      %s620 = sadd.s32 %s619, 1
      %p623 = scmp.eq.s32.totalorder %s76, 1
      %p624 = scmp.ne.s32.totalorder %s619, %s621
      %p625 = scmp.eq.s32.totalorder %s76, 0
      %p626 = por %p624, %p625
      %p627 = scmp.ne.s32.totalorder %s619, %s621
      %p628 = scmp.eq.s32.totalorder %s81, 1
      %p629 = por %p627, %p628
      %p630 = scmp.ne.s32.totalorder %s621, %s622
      %p631 = scmp.eq.s32.totalorder %s81, 0
      %p632 = por %p630, %p631
      %p633 = scmp.ne.s32.totalorder %s621, %s622
      %p634 = scmp.eq.s32.totalorder %s82, 1
      %p635 = por %p633, %p634
      %p637 = scmp.ne.s32.totalorder %s622, %s636
      %p638 = scmp.eq.s32.totalorder %s82, 0
      %p639 = por %p637, %p638
      %s641 = sadd.s32 %s640, 1
      %p644 = scmp.eq.s32.totalorder %s76, 1
      %p645 = scmp.ne.s32.totalorder %s640, %s642
      %p646 = scmp.eq.s32.totalorder %s76, 0
      %p647 = por %p645, %p646
      %p648 = scmp.ne.s32.totalorder %s640, %s642
      %p649 = scmp.eq.s32.totalorder %s81, 1
      %p650 = por %p648, %p649
      %p651 = scmp.ne.s32.totalorder %s642, %s643
      %p652 = scmp.eq.s32.totalorder %s81, 0
      %p653 = por %p651, %p652
      %p654 = scmp.ne.s32.totalorder %s642, %s643
      %p655 = scmp.eq.s32.totalorder %s82, 1
      %p656 = por %p654, %p655
      %p658 = scmp.ne.s32.totalorder %s643, %s657
      %p659 = scmp.eq.s32.totalorder %s82, 0
      %p660 = por %p658, %p659
      %s662 = sadd.s32 %s661, 1
      %p665 = scmp.eq.s32.totalorder %s76, 1
      %p666 = scmp.ne.s32.totalorder %s661, %s663
      %p667 = scmp.eq.s32.totalorder %s76, 0
      %p668 = por %p666, %p667
      %p669 = scmp.ne.s32.totalorder %s661, %s663
      %p670 = scmp.eq.s32.totalorder %s81, 1
      %p671 = por %p669, %p670
      %p672 = scmp.ne.s32.totalorder %s663, %s664
      %p673 = scmp.eq.s32.totalorder %s81, 0
      %p674 = por %p672, %p673
      %p675 = scmp.ne.s32.totalorder %s663, %s664
      %p676 = scmp.eq.s32.totalorder %s82, 1
      %p677 = por %p675, %p676
      %p679 = scmp.ne.s32.totalorder %s664, %s678
      %p680 = scmp.eq.s32.totalorder %s82, 0
      %p681 = por %p679, %p680
      %s683 = sadd.s32 %s682, 1
      %p686 = scmp.eq.s32.totalorder %s76, 1
      %p687 = scmp.ne.s32.totalorder %s682, %s684
      %p688 = scmp.eq.s32.totalorder %s76, 0
      %p689 = por %p687, %p688
      %p690 = scmp.ne.s32.totalorder %s682, %s684
      %p691 = scmp.eq.s32.totalorder %s81, 1
      %p692 = por %p690, %p691
      %p693 = scmp.ne.s32.totalorder %s684, %s685
      %p694 = scmp.eq.s32.totalorder %s81, 0
      %p695 = por %p693, %p694
      %p696 = scmp.ne.s32.totalorder %s684, %s685
      %p697 = scmp.eq.s32.totalorder %s82, 1
      %p698 = por %p696, %p697
      %p700 = scmp.ne.s32.totalorder %s685, %s699
      %p701 = scmp.eq.s32.totalorder %s82, 0
      %p702 = por %p700, %p701
      %s704 = sadd.s32 %s703, 1
      %p707 = scmp.eq.s32.totalorder %s76, 1
      %p708 = scmp.ne.s32.totalorder %s703, %s705
      %p709 = scmp.eq.s32.totalorder %s76, 0
      %p710 = por %p708, %p709
      %p711 = scmp.ne.s32.totalorder %s703, %s705
      %p712 = scmp.eq.s32.totalorder %s81, 1
      %p713 = por %p711, %p712
      %p714 = scmp.ne.s32.totalorder %s705, %s706
      %p715 = scmp.eq.s32.totalorder %s81, 0
      %p716 = por %p714, %p715
      %p717 = scmp.ne.s32.totalorder %s705, %s706
      %p718 = scmp.eq.s32.totalorder %s82, 1
      %p719 = por %p717, %p718
      %p721 = scmp.ne.s32.totalorder %s706, %s720
      %p722 = scmp.eq.s32.totalorder %s82, 0
      %p723 = por %p721, %p722
      %s725 = sadd.s32 %s724, 1
      %p728 = scmp.eq.s32.totalorder %s76, 1
      %p729 = scmp.ne.s32.totalorder %s724, %s726
      %p730 = scmp.eq.s32.totalorder %s76, 0
      %p731 = por %p729, %p730
      %p732 = scmp.ne.s32.totalorder %s724, %s726
      %p733 = scmp.eq.s32.totalorder %s81, 1
      %p734 = por %p732, %p733
      %p735 = scmp.ne.s32.totalorder %s726, %s727
      %p736 = scmp.eq.s32.totalorder %s81, 0
      %p737 = por %p735, %p736
      %p738 = scmp.ne.s32.totalorder %s726, %s727
      %p739 = scmp.eq.s32.totalorder %s82, 1
      %p740 = por %p738, %p739
      %p742 = scmp.ne.s32.totalorder %s727, %s741
      %p743 = scmp.eq.s32.totalorder %s82, 0
      %p744 = por %p742, %p743
      %s746 = sadd.s32 %s745, 1
      %p749 = scmp.eq.s32.totalorder %s76, 1
      %p750 = scmp.ne.s32.totalorder %s745, %s747
      %p751 = scmp.eq.s32.totalorder %s76, 0
      %p752 = por %p750, %p751
      %p753 = scmp.ne.s32.totalorder %s745, %s747
      %p754 = scmp.eq.s32.totalorder %s81, 1
      %p755 = por %p753, %p754
      %p756 = scmp.ne.s32.totalorder %s747, %s748
      %p757 = scmp.eq.s32.totalorder %s81, 0
      %p758 = por %p756, %p757
      %p759 = scmp.ne.s32.totalorder %s747, %s748
      %p760 = scmp.eq.s32.totalorder %s82, 1
      %p761 = por %p759, %p760
      %p763 = scmp.ne.s32.totalorder %s748, %s762
      %p764 = scmp.eq.s32.totalorder %s82, 0
      %p765 = por %p763, %p764
      %s767 = sadd.s32 %s766, 1
      %p770 = scmp.eq.s32.totalorder %s76, 1
      %p771 = scmp.ne.s32.totalorder %s766, %s768
      %p772 = scmp.eq.s32.totalorder %s76, 0
      %p773 = por %p771, %p772
      %p774 = scmp.ne.s32.totalorder %s766, %s768
      %p775 = scmp.eq.s32.totalorder %s81, 1
      %p776 = por %p774, %p775
      %p777 = scmp.ne.s32.totalorder %s768, %s769
      %p778 = scmp.eq.s32.totalorder %s81, 0
      %p779 = por %p777, %p778
      %p780 = scmp.ne.s32.totalorder %s768, %s769
      %p781 = scmp.eq.s32.totalorder %s82, 1
      %p782 = por %p780, %p781
      %p784 = scmp.ne.s32.totalorder %s769, %s783
      %p785 = scmp.eq.s32.totalorder %s82, 0
      %p786 = por %p784, %p785
      %s787 = ssub.s32 %s76, %s83
      %p788 = scmp.eq.s32.totalorder %s787, 0
      %s790 = sadd.s32 %s789, 1
      %s791 = scalar_select %p788, %s789, %s790
      %p794 = pneg %p788
      %p795 = scmp.eq.s32.totalorder %s76, 1
      %p796 = por %p794, %p795
      %p797 = scmp.ne.s32.totalorder %s789, %s792
      %p798 = scmp.eq.s32.totalorder %s76, 0
      %p799 = por %p797, %p798
      %p800 = scmp.ne.s32.totalorder %s789, %s792
      %p801 = scmp.eq.s32.totalorder %s81, 1
      %p802 = por %p800, %p801
      %p803 = scmp.ne.s32.totalorder %s792, %s793
      %p804 = scmp.eq.s32.totalorder %s81, 0
      %p805 = por %p803, %p804
      %p806 = scmp.ne.s32.totalorder %s792, %s793
      %p807 = scmp.eq.s32.totalorder %s82, 1
      %p808 = por %p806, %p807
      %p810 = scmp.ne.s32.totalorder %s793, %s809
      %p811 = scmp.eq.s32.totalorder %s82, 0
      %p812 = por %p810, %p811
      %p813 = scmp.le.s32.totalorder 1, %s76
      %p814 = scmp.lt.s32.totalorder %s76, 3
      %p815 = pnand %p813, %p814
      %p816 = pneg %p815
      // Predicated region
      $region9: #{bert_gpt2_classifier.1} parent=5 // pred_check
        _
      $region10: #{bert_gpt2_classifier.1} parent=5 // pred_check_branch
        %818 = sbr.rel (%p815) target = $region12
      $region11: #{bert_gpt2_classifier.1} parent=5 // pred_region
        %s819 = ssub.s32 %s76, 1
        // Predicated region
        $region13: #{bert_gpt2_classifier.1} parent=11 // pred_check
          %p820 = pneg %p149
        $region14: #{bert_gpt2_classifier.1} parent=11 // pred_check_branch
          %822 = sbr.rel (%p820) target = $region16
        $region15: #{bert_gpt2_classifier.1} parent=11 // pred_region
          _
        $region16: #{bert_gpt2_classifier.1} parent=11 // pred_fallthru
          _
        // Predicated region
        $region17: #{bert_gpt2_classifier.1} parent=11 // pred_check
          %p823 = pneg %p170
        $region18: #{bert_gpt2_classifier.1} parent=11 // pred_check_branch
          %825 = sbr.rel (%p823) target = $region20
        $region19: #{bert_gpt2_classifier.1} parent=11 // pred_region
          _
        $region20: #{bert_gpt2_classifier.1} parent=11 // pred_fallthru
          _
        // Predicated region
        $region21: #{bert_gpt2_classifier.1} parent=11 // pred_check
          %p826 = pneg %p191
        $region22: #{bert_gpt2_classifier.1} parent=11 // pred_check_branch
          %828 = sbr.rel (%p826) target = $region24
        $region23: #{bert_gpt2_classifier.1} parent=11 // pred_region
          _
        $region24: #{bert_gpt2_classifier.1} parent=11 // pred_fallthru
          _
        // Predicated region
        $region25: #{bert_gpt2_classifier.1} parent=11 // pred_check
          %p829 = pneg %p212
        $region26: #{bert_gpt2_classifier.1} parent=11 // pred_check_branch
          %831 = sbr.rel (%p829) target = $region28
        $region27: #{bert_gpt2_classifier.1} parent=11 // pred_region
          _
        $region28: #{bert_gpt2_classifier.1} parent=11 // pred_fallthru
          _
        // Predicated region
        $region29: #{bert_gpt2_classifier.1} parent=11 // pred_check
          %p832 = pneg %p233
        $region30: #{bert_gpt2_classifier.1} parent=11 // pred_check_branch
          %834 = sbr.rel (%p832) target = $region32
        $region31: #{bert_gpt2_classifier.1} parent=11 // pred_region
          _
        $region32: #{bert_gpt2_classifier.1} parent=11 // pred_fallthru
          _
        // Predicated region
        $region33: #{bert_gpt2_classifier.1} parent=11 // pred_check
          %p835 = pneg %p254
        $region34: #{bert_gpt2_classifier.1} parent=11 // pred_check_branch
          %837 = sbr.rel (%p835) target = $region36
        $region35: #{bert_gpt2_classifier.1} parent=11 // pred_region
          _
        $region36: #{bert_gpt2_classifier.1} parent=11 // pred_fallthru
          _
        // Predicated region
        $region37: #{bert_gpt2_classifier.1} parent=11 // pred_check
          %p838 = pneg %p275
        $region38: #{bert_gpt2_classifier.1} parent=11 // pred_check_branch
          %840 = sbr.rel (%p838) target = $region40
        $region39: #{bert_gpt2_classifier.1} parent=11 // pred_region
          _
        $region40: #{bert_gpt2_classifier.1} parent=11 // pred_fallthru
          _
        // Predicated region
        $region41: #{bert_gpt2_classifier.1} parent=11 // pred_check
          %p841 = pneg %p296
        $region42: #{bert_gpt2_classifier.1} parent=11 // pred_check_branch
          %843 = sbr.rel (%p841) target = $region44
        $region43: #{bert_gpt2_classifier.1} parent=11 // pred_region
          _
        $region44: #{bert_gpt2_classifier.1} parent=11 // pred_fallthru
          _
        // Predicated region
        $region45: #{bert_gpt2_classifier.1} parent=11 // pred_check
          %p844 = pneg %p317
        $region46: #{bert_gpt2_classifier.1} parent=11 // pred_check_branch
          %846 = sbr.rel (%p844) target = $region48
        $region47: #{bert_gpt2_classifier.1} parent=11 // pred_region
          _
        $region48: #{bert_gpt2_classifier.1} parent=11 // pred_fallthru
          _
        // Predicated region
        $region49: #{bert_gpt2_classifier.1} parent=11 // pred_check
          %p847 = pneg %p338
        $region50: #{bert_gpt2_classifier.1} parent=11 // pred_check_branch
          %849 = sbr.rel (%p847) target = $region52
        $region51: #{bert_gpt2_classifier.1} parent=11 // pred_region
          _
        $region52: #{bert_gpt2_classifier.1} parent=11 // pred_fallthru
          _
        // Predicated region
        $region53: #{bert_gpt2_classifier.1} parent=11 // pred_check
          %p850 = pneg %p359
        $region54: #{bert_gpt2_classifier.1} parent=11 // pred_check_branch
          %852 = sbr.rel (%p850) target = $region56
        $region55: #{bert_gpt2_classifier.1} parent=11 // pred_region
          _
        $region56: #{bert_gpt2_classifier.1} parent=11 // pred_fallthru
          _
        // Predicated region
        $region57: #{bert_gpt2_classifier.1} parent=11 // pred_check
          %p853 = pneg %p380
        $region58: #{bert_gpt2_classifier.1} parent=11 // pred_check_branch
          %855 = sbr.rel (%p853) target = $region60
        $region59: #{bert_gpt2_classifier.1} parent=11 // pred_region
          _
        $region60: #{bert_gpt2_classifier.1} parent=11 // pred_fallthru
          _
        // Predicated region
        $region61: #{bert_gpt2_classifier.1} parent=11 // pred_check
          %p856 = pneg %p401
        $region62: #{bert_gpt2_classifier.1} parent=11 // pred_check_branch
          %858 = sbr.rel (%p856) target = $region64
        $region63: #{bert_gpt2_classifier.1} parent=11 // pred_region
          _
        $region64: #{bert_gpt2_classifier.1} parent=11 // pred_fallthru
          _
        // Predicated region
        $region65: #{bert_gpt2_classifier.1} parent=11 // pred_check
          %p859 = pneg %p422
        $region66: #{bert_gpt2_classifier.1} parent=11 // pred_check_branch
          %861 = sbr.rel (%p859) target = $region68
        $region67: #{bert_gpt2_classifier.1} parent=11 // pred_region
          _
        $region68: #{bert_gpt2_classifier.1} parent=11 // pred_fallthru
          _
        // Predicated region
        $region69: #{bert_gpt2_classifier.1} parent=11 // pred_check
          %p862 = pneg %p443
        $region70: #{bert_gpt2_classifier.1} parent=11 // pred_check_branch
          %864 = sbr.rel (%p862) target = $region72
        $region71: #{bert_gpt2_classifier.1} parent=11 // pred_region
          _
        $region72: #{bert_gpt2_classifier.1} parent=11 // pred_fallthru
          _
        // Predicated region
        $region73: #{bert_gpt2_classifier.1} parent=11 // pred_check
          %p865 = pneg %p464
        $region74: #{bert_gpt2_classifier.1} parent=11 // pred_check_branch
          %867 = sbr.rel (%p865) target = $region76
        $region75: #{bert_gpt2_classifier.1} parent=11 // pred_region
          _
        $region76: #{bert_gpt2_classifier.1} parent=11 // pred_fallthru
          _
        // Predicated region
        $region77: #{bert_gpt2_classifier.1} parent=11 // pred_check
          %p868 = pneg %p485
        $region78: #{bert_gpt2_classifier.1} parent=11 // pred_check_branch
          %870 = sbr.rel (%p868) target = $region80
        $region79: #{bert_gpt2_classifier.1} parent=11 // pred_region
          _
        $region80: #{bert_gpt2_classifier.1} parent=11 // pred_fallthru
          _
        // Predicated region
        $region81: #{bert_gpt2_classifier.1} parent=11 // pred_check
          %p871 = pneg %p506
        $region82: #{bert_gpt2_classifier.1} parent=11 // pred_check_branch
          %873 = sbr.rel (%p871) target = $region84
        $region83: #{bert_gpt2_classifier.1} parent=11 // pred_region
          _
        $region84: #{bert_gpt2_classifier.1} parent=11 // pred_fallthru
          _
        // Predicated region
        $region85: #{bert_gpt2_classifier.1} parent=11 // pred_check
          %p874 = pneg %p527
        $region86: #{bert_gpt2_classifier.1} parent=11 // pred_check_branch
          %876 = sbr.rel (%p874) target = $region88
        $region87: #{bert_gpt2_classifier.1} parent=11 // pred_region
          _
        $region88: #{bert_gpt2_classifier.1} parent=11 // pred_fallthru
          _
        // Predicated region
        $region89: #{bert_gpt2_classifier.1} parent=11 // pred_check
          %p877 = pneg %p548
        $region90: #{bert_gpt2_classifier.1} parent=11 // pred_check_branch
          %879 = sbr.rel (%p877) target = $region92
        $region91: #{bert_gpt2_classifier.1} parent=11 // pred_region
          _
        $region92: #{bert_gpt2_classifier.1} parent=11 // pred_fallthru
          _
        // Predicated region
        $region93: #{bert_gpt2_classifier.1} parent=11 // pred_check
          %p880 = pneg %p569
        $region94: #{bert_gpt2_classifier.1} parent=11 // pred_check_branch
          %882 = sbr.rel (%p880) target = $region96
        $region95: #{bert_gpt2_classifier.1} parent=11 // pred_region
          _
        $region96: #{bert_gpt2_classifier.1} parent=11 // pred_fallthru
          _
        // Predicated region
        $region97: #{bert_gpt2_classifier.1} parent=11 // pred_check
          %p883 = pneg %p590
        $region98: #{bert_gpt2_classifier.1} parent=11 // pred_check_branch
          %885 = sbr.rel (%p883) target = $region100
        $region99: #{bert_gpt2_classifier.1} parent=11 // pred_region
          _
        $region100: #{bert_gpt2_classifier.1} parent=11 // pred_fallthru
          _
        // Predicated region
        $region101: #{bert_gpt2_classifier.1} parent=11 // pred_check
          %p886 = pneg %p611
        $region102: #{bert_gpt2_classifier.1} parent=11 // pred_check_branch
          %888 = sbr.rel (%p886) target = $region104
        $region103: #{bert_gpt2_classifier.1} parent=11 // pred_region
          _
        $region104: #{bert_gpt2_classifier.1} parent=11 // pred_fallthru
          _
        // Predicated region
        $region105: #{bert_gpt2_classifier.1} parent=11 // pred_check
          %p889 = pneg %p632
        $region106: #{bert_gpt2_classifier.1} parent=11 // pred_check_branch
          %891 = sbr.rel (%p889) target = $region108
        $region107: #{bert_gpt2_classifier.1} parent=11 // pred_region
          _
        $region108: #{bert_gpt2_classifier.1} parent=11 // pred_fallthru
          _
        // Predicated region
        $region109: #{bert_gpt2_classifier.1} parent=11 // pred_check
          %p892 = pneg %p653
        $region110: #{bert_gpt2_classifier.1} parent=11 // pred_check_branch
          %894 = sbr.rel (%p892) target = $region112
        $region111: #{bert_gpt2_classifier.1} parent=11 // pred_region
          _
        $region112: #{bert_gpt2_classifier.1} parent=11 // pred_fallthru
          _
        // Predicated region
        $region113: #{bert_gpt2_classifier.1} parent=11 // pred_check
          %p895 = pneg %p674
        $region114: #{bert_gpt2_classifier.1} parent=11 // pred_check_branch
          %897 = sbr.rel (%p895) target = $region116
        $region115: #{bert_gpt2_classifier.1} parent=11 // pred_region
          _
        $region116: #{bert_gpt2_classifier.1} parent=11 // pred_fallthru
          _
        // Predicated region
        $region117: #{bert_gpt2_classifier.1} parent=11 // pred_check
          %p898 = pneg %p695
        $region118: #{bert_gpt2_classifier.1} parent=11 // pred_check_branch
          %900 = sbr.rel (%p898) target = $region120
        $region119: #{bert_gpt2_classifier.1} parent=11 // pred_region
          _
        $region120: #{bert_gpt2_classifier.1} parent=11 // pred_fallthru
          _
        // Predicated region
        $region121: #{bert_gpt2_classifier.1} parent=11 // pred_check
          %p901 = pneg %p716
        $region122: #{bert_gpt2_classifier.1} parent=11 // pred_check_branch
          %903 = sbr.rel (%p901) target = $region124
        $region123: #{bert_gpt2_classifier.1} parent=11 // pred_region
          _
        $region124: #{bert_gpt2_classifier.1} parent=11 // pred_fallthru
          _
        // Predicated region
        $region125: #{bert_gpt2_classifier.1} parent=11 // pred_check
          %p904 = pneg %p737
        $region126: #{bert_gpt2_classifier.1} parent=11 // pred_check_branch
          %906 = sbr.rel (%p904) target = $region128
        $region127: #{bert_gpt2_classifier.1} parent=11 // pred_region
          _
        $region128: #{bert_gpt2_classifier.1} parent=11 // pred_fallthru
          _
        // Predicated region
        $region129: #{bert_gpt2_classifier.1} parent=11 // pred_check
          %p907 = pneg %p758
        $region130: #{bert_gpt2_classifier.1} parent=11 // pred_check_branch
          %909 = sbr.rel (%p907) target = $region132
        $region131: #{bert_gpt2_classifier.1} parent=11 // pred_region
          _
        $region132: #{bert_gpt2_classifier.1} parent=11 // pred_fallthru
          _
        // Predicated region
        $region133: #{bert_gpt2_classifier.1} parent=11 // pred_check
          %p910 = pneg %p779
        $region134: #{bert_gpt2_classifier.1} parent=11 // pred_check_branch
          %912 = sbr.rel (%p910) target = $region136
        $region135: #{bert_gpt2_classifier.1} parent=11 // pred_region
          _
        $region136: #{bert_gpt2_classifier.1} parent=11 // pred_fallthru
          _
      $region12: #{bert_gpt2_classifier.1} parent=5 // pred_fallthru
        _
      %p913 = scmp.lt.s32.totalorder %s76, 2
      // Predicated region
      $region137: #{bert_gpt2_classifier.1} parent=5 // pred_check
        %p914 = pneg %p913
      $region138: #{bert_gpt2_classifier.1} parent=5 // pred_check_branch
        %916 = sbr.rel (%p914) target = $region140
      $region139: #{bert_gpt2_classifier.1} parent=5 // pred_region
        // Predicated region
        $region141: #{bert_gpt2_classifier.1} parent=139 // pred_check
          %p917 = pneg %p96
        $region142: #{bert_gpt2_classifier.1} parent=139 // pred_check_branch
          %919 = sbr.rel (%p917) target = $region144
        $region143: #{bert_gpt2_classifier.1} parent=139 // pred_region
          %p920 = scmp.lt.s32.totalorder %s76, 1
          %s921 = scalar_select %p920, %s76, 1
          %s922 = scalar_lea.vmem %s1, %s921
        $region144: #{bert_gpt2_classifier.1} parent=139 // pred_fallthru
          _
        // Predicated region
        $region145: #{bert_gpt2_classifier.1} parent=139 // pred_check
          %p923 = pneg %p122
        $region146: #{bert_gpt2_classifier.1} parent=139 // pred_check_branch
          %925 = sbr.rel (%p923) target = $region148
        $region147: #{bert_gpt2_classifier.1} parent=139 // pred_region
          %p926 = scmp.lt.s32.totalorder %s76, 1
          %s927 = scalar_select %p926, %s76, 1
          %s928 = smul.addr %s927, 8
          %s929 = scalar_lea.vmem %s3, %s928
        $region148: #{bert_gpt2_classifier.1} parent=139 // pred_fallthru
          _
      $region140: #{bert_gpt2_classifier.1} parent=5 // pred_fallthru
        _
      %p930 = scmp.le.s32.totalorder 1, %s76
      %p931 = scmp.lt.s32.totalorder %s76, 3
      %p932 = pnand %p930, %p931
      %p933 = pneg %p932
      // Predicated region
      $region149: #{bert_gpt2_classifier.1} parent=5 // pred_check
        _
      $region150: #{bert_gpt2_classifier.1} parent=5 // pred_check_branch
        %935 = sbr.rel (%p932) target = $region152
      $region151: #{bert_gpt2_classifier.1} parent=5 // pred_region
        %s936 = ssub.s32 %s76, 1
        %p937 = scmp.lt.s32.totalorder %s81, 1
        %s938 = scalar_select %p937, %s81, 1
        %s939 = scalar_lea.vmem %s1, %s938
        %p940 = pneg %p102
        %p941 = pneg %p99
        %p942 = scmp.lt.s32.totalorder %s81, 1
        %s943 = scalar_select %p942, %s81, 1
        %s944 = smul.addr %s943, 8
        %s945 = scalar_lea.vmem %s3, %s944
        %p946 = pneg %p128
        %p947 = pneg %p125
        %p948 = pneg %p149
        %p949 = pneg %p146
        %p950 = pneg %p170
        %p951 = pneg %p167
        %p952 = pneg %p191
        %p953 = pneg %p188
        %p954 = pneg %p212
        %p955 = pneg %p209
        %p956 = pneg %p233
        %p957 = pneg %p230
        %p958 = pneg %p254
        %p959 = pneg %p251
        %p960 = pneg %p275
        %p961 = pneg %p272
        %p962 = pneg %p296
        %p963 = pneg %p293
        %p964 = pneg %p317
        %p965 = pneg %p314
        %p966 = pneg %p338
        %p967 = pneg %p335
        %p968 = pneg %p359
        %p969 = pneg %p356
        %p970 = pneg %p380
        %p971 = pneg %p377
        %p972 = pneg %p401
        %p973 = pneg %p398
        %p974 = pneg %p422
        %p975 = pneg %p419
        %p976 = pneg %p443
        %p977 = pneg %p440
        %p978 = pneg %p464
        %p979 = pneg %p461
        %p980 = pneg %p485
        %p981 = pneg %p482
        %p982 = pneg %p506
        %p983 = pneg %p503
        %p984 = pneg %p527
        %p985 = pneg %p524
        %p986 = pneg %p548
        %p987 = pneg %p545
        %p988 = pneg %p569
        %p989 = pneg %p566
        %p990 = pneg %p590
        %p991 = pneg %p587
        %p992 = pneg %p611
        %p993 = pneg %p608
        %p994 = pneg %p632
        %p995 = pneg %p629
        %p996 = pneg %p653
        %p997 = pneg %p650
        %p998 = pneg %p674
        %p999 = pneg %p671
        %p1000 = pneg %p695
        %p1001 = pneg %p692
        %p1002 = pneg %p716
        %p1003 = pneg %p713
        %p1004 = pneg %p737
        %p1005 = pneg %p734
        %p1006 = pneg %p758
        %p1007 = pneg %p755
        %p1008 = pneg %p779
        %p1009 = pneg %p776
        %p1010 = pneg %p805
        %p1011 = pneg %p802
        %s1012 = sand.u32 %s792, 1
        %s1013 = scalar_lea.sflag [#allocation3], %s1012
        %s1014 = sand.u32 %s792, 1
        %s1015 = scalar_lea.vmem [#allocation2], %s1014
        %p1016 = scmp.lt.s32.totalorder %s81, 1
        %s1017 = scalar_select %p1016, %s81, 1
        %s1018 = scalar_lea.vmem %s1, %s1017
        %p1019 = scmp.lt.s32.totalorder %s81, 1
        %s1020 = scalar_select %p1019, %s81, 1
        %s1021 = smul.addr %s1020, 8
        %s1022 = scalar_lea.vmem %s3, %s1021
        %v1023 = vld [vmem:[%s13] sm:$0x3]
        %v1024 = vld [vmem:[%s17] sm:$0x3]
        %v1025 = vld [vmem:[%s19] sm:$0x3]
        %v1026 = vld [vmem:[%s21] sm:$0x3]
        %v1027 = vld [vmem:[%s25] sm:$0x3]
        %v1028 = vld [vmem:[%s29] sm:$0x3]
        %v1029 = vld [vmem:[%s31] sm:$0x3]
        %v1030 = vld [vmem:[%s33] sm:$0x3]
        %v1031 = vld [vmem:[%s35] sm:$0x3]
        %v1032 = vld [vmem:[%s37] sm:$0x3]
        %v1033 = vld [vmem:[%s41] sm:$0x3]
        %v1034 = vld [vmem:[%s45] sm:$0x3]
        %v1035 = vld [vmem:[%s47] sm:$0x3]
        %v1036 = vld [vmem:[%s49] sm:$0x3]
        %v1037 = vld [vmem:[%s53] sm:$0x3]
        %v1038 = vld [vmem:[%s57] sm:$0x3]
        %v1039 = vld [vmem:[%s1022] sm:$0xff]
        %v1040 = vld [vmem:[%s7] sm:$0x1]
        %v1041 = vld [vmem:[%s9] sm:$0x1]
        %vm1042 = vcmask 261120
        %v1043 = vsel %vm1042, %v1039, 0.0
        %1044 = vadd.xlane.f32.xlu0 %v1043
        %v1045 = vpop.xlane.xlu0 %1044
        %v1046 = vrcp.pop 32.0
        %v1047 = vmul.f32 32.0, %v1046
        %v1048 = vsub.f32 1.0, %v1047
        %v1049 = vmul.f32 %v1046, %v1048
        %v1050 = vadd.f32 %v1046, %v1049
        %vm1051 = vweird.f32 %v1046
        %v1052 = vsel %vm1051, %v1046, %v1050
        %v1053 = vmul.f32 %v1045, %v1052
        %v1054 = vsub.f32 %v1039, %v1053
        %v1055 = vmul.f32 %v1054, %v1054
        %v1056 = vsel %vm1042, %v1055, 0.0
        %1057 = vadd.xlane.f32.xlu0 %v1056
        %v1058 = vpop.xlane.xlu0 %1057
        %v1059 = vmul.f32 %v1058, %v1052
        %v1060 = vadd.f32 %v1059, 1e-12
        %v1061 = vrsqrt.pop %v1060
        %v1062 = vmul.f32 %v1061, %v1060
        %v1063 = vmul.f32 %v1062, %v1061
        %v1064 = vmul.f32 0.5, %v1063
        %v1065 = vsub.f32 1.5, %v1064
        %v1066 = vmul.f32 %v1061, %v1065
        %vm1067 = vweird.f32 %v1060
        %vm1068 = vweird.f32 %v1061
        %vm1069 = vmor %vm1067, %vm1068
        %v1070 = vsel %vm1069, %v1061, %v1066
        %v1071 = vmul.f32 %v1054, %v1070
        %v1073 = vperm.slane %v1040, 0
        %v1075 = vmul.f32 %v1071, %v1073
        %v1077 = vperm.slane %v1041, 0
        %v1079 = vadd.f32 %v1075, %v1077
        %v1080 = vld [vmem:[%s1018] sm:$0x1]
        %v1081 = vsub.f32 1.0, %v1080
        %v1082 = vmul.f32 %v1081, -10000.0
        %v1083 = vld [vmem:[%s11] sm:$0xff]
        %v1084 = vld [vmem:[%s11 + $0x8] sm:$0xff]
        %v1085 = vld [vmem:[%s11 + $0x10] sm:$0xff]
        %v1086 = vld [vmem:[%s11 + $0x18] sm:$0xff]
        %v1087 = vperm.slane %v1023, 0
        %v1089 = vsel %vm1042, %v1079, 0
        %1091 = vmatpush.msra.mxu0 0.0
        %1092 = vmatpush.msra.mxu0 0.0
        %1093 = vmatpush.msra.mxu0 0.0
        %1094 = vmatpush.msra.mxu0 0.0
        %1095 = vmatpush.msra.mxu0 0.0
        %1096 = vmatpush.msra.mxu0 0.0
        %1097 = vmatpush.msra.mxu0 0.0
        %1098 = vmatpush.msra.mxu0 0.0
        %1099 = vmatpush.msra.mxu0 0.0
        %1100 = vmatpush.msra.mxu0 0.0
        %1101 = vmatpush.msra.mxu0 0.0
        %1102 = vmatpush.msra.mxu0 0.0
        %1103 = vmatpush.msra.mxu0 %v1086
        %1104 = vmatpush.msra.mxu0 %v1085
        %1105 = vmatpush.msra.mxu0 %v1084
        %1106 = vmatpush.msra.mxu0 %v1083
        %1107 = vmatmul.f32.gmra.mxu0 %v1089
        %v1108 = vpop.f32.mrf.mxu0
        %v1109 = vadd.f32 %v1087, %v1108
        %1110 = vdwg.mxu0
        %v1111 = vld [vmem:[%s15] sm:$0xff]
        %v1112 = vld [vmem:[%s15 + $0x8] sm:$0xff]
        %v1113 = vld [vmem:[%s15 + $0x10] sm:$0xff]
        %v1114 = vld [vmem:[%s15 + $0x18] sm:$0xff]
        %1116 = vrot.lane.b32.xlu0 %v1109, 96
        %v1117 = vpop.permute.xlu0 %1116
        %vm1118 = vcmask 64512
        %v1119 = vsel %vm1118, %v1109, 0
        %v1121 = vsel %vm1118, %v1117, 0
        %1123 = vmatpush.xpose.msra.mxu0 0.0
        %1124 = vmatpush.xpose.msra.mxu0 0.0
        %1125 = vmatpush.xpose.msra.mxu0 0.0
        %1126 = vmatpush.xpose.msra.mxu0 0.0
        %1127 = vmatpush.xpose.msra.mxu0 0.0
        %1128 = vmatpush.xpose.msra.mxu0 0.0
        %1129 = vmatpush.xpose.msra.mxu0 0.0
        %1130 = vmatpush.xpose.msra.mxu0 0.0
        %1131 = vmatpush.xpose.msra.mxu0 0.0
        %1132 = vmatpush.xpose.msra.mxu0 0.0
        %1133 = vmatpush.xpose.msra.mxu0 0.0
        %1134 = vmatpush.xpose.msra.mxu0 0.0
        %1135 = vmatpush.xpose.msra.mxu0 0.0
        %1136 = vmatpush.xpose.msra.mxu0 0.0
        %1137 = vmatpush.xpose.msra.mxu0 0.0
        %1138 = vmatpush.xpose.msra.mxu0 %v1121
        %1139 = vmatmul.f32.gmra.mxu0 %v1119
        %v1140 = vpop.f32.mrf.mxu0
        %v1141 = vadd.f32 0.0, %v1140
        %1142 = vdwg.mxu0
        %v1143 = vmul.f32 %v1141, 0.35355338
        %v1145 = vperm.slane %v1082, 0
        %v1147 = vadd.f32 %v1143, %v1145
        %v1148 = vsel %vm1118, %v1147, -inf
        %1149 = vmax.xlane.f32.xlu0 %v1148
        %v1150 = vpop.xlane.xlu0 %1149
        %v1151 = vsub.f32 %v1147, %v1150
        %v1152 = vmul.f32 %v1151, 1.442695
        %v1153 = vpow.pop %v1152
        %v1154 = vsel %vm1118, %v1153, 0.0
        %1155 = vadd.xlane.f32.xlu0 %v1154
        %v1156 = vpop.xlane.xlu0 %1155
        %v1157 = vrcp.pop %v1156
        %v1158 = vmul.f32 %v1153, %v1157
        %1159 = vrot.lane.b32.xlu0 %v1109, 64
        %v1160 = vpop.permute.xlu0 %1159
        %v1163 = vsel %vm1118, %v1158, 0
        %1165 = vmatpush.msra.mxu0 0.0
        %1166 = vmatpush.msra.mxu0 0.0
        %1167 = vmatpush.msra.mxu0 0.0
        %1168 = vmatpush.msra.mxu0 0.0
        %1169 = vmatpush.msra.mxu0 0.0
        %1170 = vmatpush.msra.mxu0 0.0
        %1171 = vmatpush.msra.mxu0 0.0
        %1172 = vmatpush.msra.mxu0 0.0
        %1173 = vmatpush.msra.mxu0 0.0
        %1174 = vmatpush.msra.mxu0 0.0
        %1175 = vmatpush.msra.mxu0 0.0
        %1176 = vmatpush.msra.mxu0 0.0
        %1177 = vmatpush.msra.mxu0 0.0
        %1178 = vmatpush.msra.mxu0 0.0
        %1179 = vmatpush.msra.mxu0 0.0
        %1180 = vmatpush.msra.mxu0 %v1160
        %1181 = vmatmul.f32.gmra.mxu0 %v1163
        %v1182 = vpop.f32.mrf.mxu0
        %v1183 = vadd.f32 0.0, %v1182
        %1184 = vdwg.mxu0
        %1185 = vrot.lane.b32.xlu0 %v1109, 120
        %v1186 = vpop.permute.xlu0 %1185
        %1187 = vrot.lane.b32.xlu0 %v1109, 88
        %v1188 = vpop.permute.xlu0 %1187
        %v1189 = vsel %vm1118, %v1186, 0
        %v1191 = vsel %vm1118, %v1188, 0
        %1193 = vmatpush.xpose.msra.mxu0 0.0
        %1194 = vmatpush.xpose.msra.mxu0 0.0
        %1195 = vmatpush.xpose.msra.mxu0 0.0
        %1196 = vmatpush.xpose.msra.mxu0 0.0
        %1197 = vmatpush.xpose.msra.mxu0 0.0
        %1198 = vmatpush.xpose.msra.mxu0 0.0
        %1199 = vmatpush.xpose.msra.mxu0 0.0
        %1200 = vmatpush.xpose.msra.mxu0 0.0
        %1201 = vmatpush.xpose.msra.mxu0 0.0
        %1202 = vmatpush.xpose.msra.mxu0 0.0
        %1203 = vmatpush.xpose.msra.mxu0 0.0
        %1204 = vmatpush.xpose.msra.mxu0 0.0
        %1205 = vmatpush.xpose.msra.mxu0 0.0
        %1206 = vmatpush.xpose.msra.mxu0 0.0
        %1207 = vmatpush.xpose.msra.mxu0 0.0
        %1208 = vmatpush.xpose.msra.mxu0 %v1191
        %1209 = vmatmul.f32.gmra.mxu0 %v1189
        %v1210 = vpop.f32.mrf.mxu0
        %v1211 = vadd.f32 0.0, %v1210
        %1212 = vdwg.mxu0
        %v1213 = vmul.f32 %v1211, 0.35355338
        %v1214 = vadd.f32 %v1213, %v1145
        %v1215 = vsel %vm1118, %v1214, -inf
        %1216 = vmax.xlane.f32.xlu0 %v1215
        %v1217 = vpop.xlane.xlu0 %1216
        %v1218 = vsub.f32 %v1214, %v1217
        %v1219 = vmul.f32 %v1218, 1.442695
        %v1220 = vpow.pop %v1219
        %v1221 = vsel %vm1118, %v1220, 0.0
        %1222 = vadd.xlane.f32.xlu0 %v1221
        %v1223 = vpop.xlane.xlu0 %1222
        %v1224 = vrcp.pop %v1223
        %v1225 = vmul.f32 %v1220, %v1224
        %1226 = vrot.lane.b32.xlu0 %v1109, 56
        %v1227 = vpop.permute.xlu0 %1226
        %v1230 = vsel %vm1118, %v1225, 0
        %1232 = vmatpush.msra.mxu0 0.0
        %1233 = vmatpush.msra.mxu0 0.0
        %1234 = vmatpush.msra.mxu0 0.0
        %1235 = vmatpush.msra.mxu0 0.0
        %1236 = vmatpush.msra.mxu0 0.0
        %1237 = vmatpush.msra.mxu0 0.0
        %1238 = vmatpush.msra.mxu0 0.0
        %1239 = vmatpush.msra.mxu0 0.0
        %1240 = vmatpush.msra.mxu0 0.0
        %1241 = vmatpush.msra.mxu0 0.0
        %1242 = vmatpush.msra.mxu0 0.0
        %1243 = vmatpush.msra.mxu0 0.0
        %1244 = vmatpush.msra.mxu0 0.0
        %1245 = vmatpush.msra.mxu0 0.0
        %1246 = vmatpush.msra.mxu0 0.0
        %1247 = vmatpush.msra.mxu0 %v1227
        %1248 = vmatmul.f32.gmra.mxu0 %v1230
        %v1249 = vpop.f32.mrf.mxu0
        %v1250 = vadd.f32 0.0, %v1249
        %1251 = vdwg.mxu0
        %v1253 = vsel %vm1118, %v1250, 0
        %1255 = vmatpush.msra.mxu0 0.0
        %1256 = vmatpush.msra.mxu0 0.0
        %1257 = vmatpush.msra.mxu0 0.0
        %1258 = vmatpush.msra.mxu0 0.0
        %1259 = vmatpush.msra.mxu0 0.0
        %1260 = vmatpush.msra.mxu0 0.0
        %1261 = vmatpush.msra.mxu0 0.0
        %1262 = vmatpush.msra.mxu0 0.0
        %1263 = vmatpush.msra.mxu0 0.0
        %1264 = vmatpush.msra.mxu0 0.0
        %1265 = vmatpush.msra.mxu0 0.0
        %1266 = vmatpush.msra.mxu0 0.0
        %1267 = vmatpush.msra.mxu0 0.0
        %1268 = vmatpush.msra.mxu0 0.0
        %1269 = vmatpush.msra.mxu0 0.0
        %1270 = vmatpush.msra.mxu0 %v1112
        %1271 = vmatmul.f32.gmra.mxu0 %v1253
        %v1272 = vpop.f32.mrf.mxu0
        %v1273 = vadd.f32 0.0, %v1272
        %1274 = vdwg.mxu0
        %v1276 = vsel %vm1118, %v1183, 0
        %1278 = vmatpush.msra.mxu0 0.0
        %1279 = vmatpush.msra.mxu0 0.0
        %1280 = vmatpush.msra.mxu0 0.0
        %1281 = vmatpush.msra.mxu0 0.0
        %1282 = vmatpush.msra.mxu0 0.0
        %1283 = vmatpush.msra.mxu0 0.0
        %1284 = vmatpush.msra.mxu0 0.0
        %1285 = vmatpush.msra.mxu0 0.0
        %1286 = vmatpush.msra.mxu0 0.0
        %1287 = vmatpush.msra.mxu0 0.0
        %1288 = vmatpush.msra.mxu0 0.0
        %1289 = vmatpush.msra.mxu0 0.0
        %1290 = vmatpush.msra.mxu0 0.0
        %1291 = vmatpush.msra.mxu0 0.0
        %1292 = vmatpush.msra.mxu0 0.0
        %1293 = vmatpush.msra.mxu0 %v1111
        %1294 = vmatmul.f32.gmra.mxu0 %v1276
        %v1295 = vpop.f32.mrf.mxu0
        %v1296 = vadd.f32 %v1273, %v1295
        %1297 = vdwg.mxu0
        %1298 = vrot.lane.b32.xlu0 %v1109, 112
        %v1299 = vpop.permute.xlu0 %1298
        %1300 = vrot.lane.b32.xlu0 %v1109, 80
        %v1301 = vpop.permute.xlu0 %1300
        %v1302 = vsel %vm1118, %v1299, 0
        %v1304 = vsel %vm1118, %v1301, 0
        %1306 = vmatpush.xpose.msra.mxu0 0.0
        %1307 = vmatpush.xpose.msra.mxu0 0.0
        %1308 = vmatpush.xpose.msra.mxu0 0.0
        %1309 = vmatpush.xpose.msra.mxu0 0.0
        %1310 = vmatpush.xpose.msra.mxu0 0.0
        %1311 = vmatpush.xpose.msra.mxu0 0.0
        %1312 = vmatpush.xpose.msra.mxu0 0.0
        %1313 = vmatpush.xpose.msra.mxu0 0.0
        %1314 = vmatpush.xpose.msra.mxu0 0.0
        %1315 = vmatpush.xpose.msra.mxu0 0.0
        %1316 = vmatpush.xpose.msra.mxu0 0.0
        %1317 = vmatpush.xpose.msra.mxu0 0.0
        %1318 = vmatpush.xpose.msra.mxu0 0.0
        %1319 = vmatpush.xpose.msra.mxu0 0.0
        %1320 = vmatpush.xpose.msra.mxu0 0.0
        %1321 = vmatpush.xpose.msra.mxu0 %v1304
        %1322 = vmatmul.f32.gmra.mxu0 %v1302
        %v1323 = vpop.f32.mrf.mxu0
        %v1324 = vadd.f32 0.0, %v1323
        %1325 = vdwg.mxu0
        %v1326 = vmul.f32 %v1324, 0.35355338
        %v1327 = vadd.f32 %v1326, %v1145
        %v1328 = vsel %vm1118, %v1327, -inf
        %1329 = vmax.xlane.f32.xlu0 %v1328
        %v1330 = vpop.xlane.xlu0 %1329
        %v1331 = vsub.f32 %v1327, %v1330
        %v1332 = vmul.f32 %v1331, 1.442695
        %v1333 = vpow.pop %v1332
        %v1334 = vsel %vm1118, %v1333, 0.0
        %1335 = vadd.xlane.f32.xlu0 %v1334
        %v1336 = vpop.xlane.xlu0 %1335
        %v1337 = vrcp.pop %v1336
        %v1338 = vmul.f32 %v1333, %v1337
        %1339 = vrot.lane.b32.xlu0 %v1109, 48
        %v1340 = vpop.permute.xlu0 %1339
        %v1343 = vsel %vm1118, %v1338, 0
        %1345 = vmatpush.msra.mxu0 0.0
        %1346 = vmatpush.msra.mxu0 0.0
        %1347 = vmatpush.msra.mxu0 0.0
        %1348 = vmatpush.msra.mxu0 0.0
        %1349 = vmatpush.msra.mxu0 0.0
        %1350 = vmatpush.msra.mxu0 0.0
        %1351 = vmatpush.msra.mxu0 0.0
        %1352 = vmatpush.msra.mxu0 0.0
        %1353 = vmatpush.msra.mxu0 0.0
        %1354 = vmatpush.msra.mxu0 0.0
        %1355 = vmatpush.msra.mxu0 0.0
        %1356 = vmatpush.msra.mxu0 0.0
        %1357 = vmatpush.msra.mxu0 0.0
        %1358 = vmatpush.msra.mxu0 0.0
        %1359 = vmatpush.msra.mxu0 0.0
        %1360 = vmatpush.msra.mxu0 %v1340
        %1361 = vmatmul.f32.gmra.mxu0 %v1343
        %v1362 = vpop.f32.mrf.mxu0
        %v1363 = vadd.f32 0.0, %v1362
        %1364 = vdwg.mxu0
        %v1366 = vsel %vm1118, %v1363, 0
        %1368 = vmatpush.msra.mxu0 0.0
        %1369 = vmatpush.msra.mxu0 0.0
        %1370 = vmatpush.msra.mxu0 0.0
        %1371 = vmatpush.msra.mxu0 0.0
        %1372 = vmatpush.msra.mxu0 0.0
        %1373 = vmatpush.msra.mxu0 0.0
        %1374 = vmatpush.msra.mxu0 0.0
        %1375 = vmatpush.msra.mxu0 0.0
        %1376 = vmatpush.msra.mxu0 0.0
        %1377 = vmatpush.msra.mxu0 0.0
        %1378 = vmatpush.msra.mxu0 0.0
        %1379 = vmatpush.msra.mxu0 0.0
        %1380 = vmatpush.msra.mxu0 0.0
        %1381 = vmatpush.msra.mxu0 0.0
        %1382 = vmatpush.msra.mxu0 0.0
        %1383 = vmatpush.msra.mxu0 %v1113
        %1384 = vmatmul.f32.gmra.mxu0 %v1366
        %v1385 = vpop.f32.mrf.mxu0
        %v1386 = vadd.f32 0.0, %v1385
        %1387 = vdwg.mxu0
        %v1388 = vadd.f32 %v1296, %v1386
        %1389 = vrot.lane.b32.xlu0 %v1109, 104
        %v1390 = vpop.permute.xlu0 %1389
        %1391 = vrot.lane.b32.xlu0 %v1109, 72
        %v1392 = vpop.permute.xlu0 %1391
        %v1393 = vsel %vm1118, %v1390, 0
        %v1395 = vsel %vm1118, %v1392, 0
        %1397 = vmatpush.xpose.msra.mxu0 0.0
        %1398 = vmatpush.xpose.msra.mxu0 0.0
        %1399 = vmatpush.xpose.msra.mxu0 0.0
        %1400 = vmatpush.xpose.msra.mxu0 0.0
        %1401 = vmatpush.xpose.msra.mxu0 0.0
        %1402 = vmatpush.xpose.msra.mxu0 0.0
        %1403 = vmatpush.xpose.msra.mxu0 0.0
        %1404 = vmatpush.xpose.msra.mxu0 0.0
        %1405 = vmatpush.xpose.msra.mxu0 0.0
        %1406 = vmatpush.xpose.msra.mxu0 0.0
        %1407 = vmatpush.xpose.msra.mxu0 0.0
        %1408 = vmatpush.xpose.msra.mxu0 0.0
        %1409 = vmatpush.xpose.msra.mxu0 0.0
        %1410 = vmatpush.xpose.msra.mxu0 0.0
        %1411 = vmatpush.xpose.msra.mxu0 0.0
        %1412 = vmatpush.xpose.msra.mxu0 %v1395
        %1413 = vmatmul.f32.gmra.mxu0 %v1393
        %v1414 = vpop.f32.mrf.mxu0
        %v1415 = vadd.f32 0.0, %v1414
        %1416 = vdwg.mxu0
        %v1417 = vmul.f32 %v1415, 0.35355338
        %v1418 = vadd.f32 %v1417, %v1145
        %v1419 = vsel %vm1118, %v1418, -inf
        %1420 = vmax.xlane.f32.xlu0 %v1419
        %v1421 = vpop.xlane.xlu0 %1420
        %v1422 = vsub.f32 %v1418, %v1421
        %v1423 = vmul.f32 %v1422, 1.442695
        %v1424 = vpow.pop %v1423
        %v1425 = vsel %vm1118, %v1424, 0.0
        %1426 = vadd.xlane.f32.xlu0 %v1425
        %v1427 = vpop.xlane.xlu0 %1426
        %v1428 = vrcp.pop %v1427
        %v1429 = vmul.f32 %v1424, %v1428
        %1430 = vrot.lane.b32.xlu0 %v1109, 40
        %v1431 = vpop.permute.xlu0 %1430
        %v1434 = vsel %vm1118, %v1429, 0
        %1436 = vmatpush.msra.mxu0 0.0
        %1437 = vmatpush.msra.mxu0 0.0
        %1438 = vmatpush.msra.mxu0 0.0
        %1439 = vmatpush.msra.mxu0 0.0
        %1440 = vmatpush.msra.mxu0 0.0
        %1441 = vmatpush.msra.mxu0 0.0
        %1442 = vmatpush.msra.mxu0 0.0
        %1443 = vmatpush.msra.mxu0 0.0
        %1444 = vmatpush.msra.mxu0 0.0
        %1445 = vmatpush.msra.mxu0 0.0
        %1446 = vmatpush.msra.mxu0 0.0
        %1447 = vmatpush.msra.mxu0 0.0
        %1448 = vmatpush.msra.mxu0 0.0
        %1449 = vmatpush.msra.mxu0 0.0
        %1450 = vmatpush.msra.mxu0 0.0
        %1451 = vmatpush.msra.mxu0 %v1431
        %1452 = vmatmul.f32.gmra.mxu0 %v1434
        %v1453 = vpop.f32.mrf.mxu0
        %v1454 = vadd.f32 0.0, %v1453
        %1455 = vdwg.mxu0
        %v1457 = vsel %vm1118, %v1454, 0
        %1459 = vmatpush.msra.mxu0 0.0
        %1460 = vmatpush.msra.mxu0 0.0
        %1461 = vmatpush.msra.mxu0 0.0
        %1462 = vmatpush.msra.mxu0 0.0
        %1463 = vmatpush.msra.mxu0 0.0
        %1464 = vmatpush.msra.mxu0 0.0
        %1465 = vmatpush.msra.mxu0 0.0
        %1466 = vmatpush.msra.mxu0 0.0
        %1467 = vmatpush.msra.mxu0 0.0
        %1468 = vmatpush.msra.mxu0 0.0
        %1469 = vmatpush.msra.mxu0 0.0
        %1470 = vmatpush.msra.mxu0 0.0
        %1471 = vmatpush.msra.mxu0 0.0
        %1472 = vmatpush.msra.mxu0 0.0
        %1473 = vmatpush.msra.mxu0 0.0
        %1474 = vmatpush.msra.mxu0 %v1114
        %1475 = vmatmul.f32.gmra.mxu0 %v1457
        %v1476 = vpop.f32.mrf.mxu0
        %v1477 = vadd.f32 0.0, %v1476
        %1478 = vdwg.mxu0
        %v1479 = vadd.f32 %v1388, %v1477
        %v1480 = vperm.slane %v1024, 0
        %v1481 = vadd.f32 %v1479, %v1480
        %v1482 = vadd.f32 %v1481, %v1079
        %v1483 = vsel %vm1042, %v1482, 0.0
        %1484 = vadd.xlane.f32.xlu0 %v1483
        %v1485 = vpop.xlane.xlu0 %1484
        %v1486 = vmul.f32 %v1485, %v1052
        %v1487 = vsub.f32 %v1482, %v1486
        %v1488 = vmul.f32 %v1487, %v1487
        %v1489 = vsel %vm1042, %v1488, 0.0
        %1490 = vadd.xlane.f32.xlu0 %v1489
        %v1491 = vpop.xlane.xlu0 %1490
        %v1492 = vmul.f32 %v1491, %v1052
        %v1493 = vadd.f32 %v1492, 1e-12
        %v1494 = vrsqrt.pop %v1493
        %v1495 = vmul.f32 %v1494, %v1493
        %v1496 = vmul.f32 %v1495, %v1494
        %v1497 = vmul.f32 0.5, %v1496
        %v1498 = vsub.f32 1.5, %v1497
        %v1499 = vmul.f32 %v1494, %v1498
        %vm1500 = vweird.f32 %v1493
        %vm1501 = vweird.f32 %v1494
        %vm1502 = vmor %vm1500, %vm1501
        %v1503 = vsel %vm1502, %v1494, %v1499
        %v1504 = vmul.f32 %v1487, %v1503
        %v1505 = vperm.slane %v1025, 0
        %v1506 = vmul.f32 %v1504, %v1505
        %v1507 = vperm.slane %v1026, 0
        %v1508 = vadd.f32 %v1506, %v1507
        %v1509 = vld [vmem:[%s23] sm:$0xff]
        %v1510 = vld [vmem:[%s23 + $0x8] sm:$0xff]
        %v1511 = vld [vmem:[%s23 + $0x10] sm:$0xff]
        %v1512 = vld [vmem:[%s23 + $0x18] sm:$0xff]
        %v1513 = vperm.slane %v1027, 0
        %v1515 = vsel %vm1042, %v1508, 0
        %1517 = vmatpush.msra.mxu0 0.0
        %1518 = vmatpush.msra.mxu0 0.0
        %1519 = vmatpush.msra.mxu0 0.0
        %1520 = vmatpush.msra.mxu0 0.0
        %1521 = vmatpush.msra.mxu0 0.0
        %1522 = vmatpush.msra.mxu0 0.0
        %1523 = vmatpush.msra.mxu0 0.0
        %1524 = vmatpush.msra.mxu0 0.0
        %1525 = vmatpush.msra.mxu0 0.0
        %1526 = vmatpush.msra.mxu0 0.0
        %1527 = vmatpush.msra.mxu0 0.0
        %1528 = vmatpush.msra.mxu0 0.0
        %1529 = vmatpush.msra.mxu0 %v1512
        %1530 = vmatpush.msra.mxu0 %v1511
        %1531 = vmatpush.msra.mxu0 %v1510
        %1532 = vmatpush.msra.mxu0 %v1509
        %1533 = vmatmul.f32.gmra.mxu0 %v1515
        %v1534 = vpop.f32.mrf.mxu0
        %v1535 = vadd.f32 %v1513, %v1534
        %1536 = vdwg.mxu0
        %v1537 = vmul.f32 %v1535, 0.5
        %v1538 = vrcp.pop 1.4142135
        %v1539 = vmul.f32 1.4142135, %v1538
        %v1540 = vsub.f32 1.0, %v1539
        %v1541 = vmul.f32 %v1538, %v1540
        %v1542 = vadd.f32 %v1538, %v1541
        %vm1543 = vweird.f32 %v1538
        %v1544 = vsel %vm1543, %v1538, %v1542
        %v1545 = vmul.f32 %v1535, %v1544
        %v1546 = vmul.f32 %v1545, %v1545
        %v1547 = vmin.f32 16.0, %v1546
        %v1548 = vmul.f32 %v1547, 2.1237322e-06
        %v1549 = vadd.f32 %v1548, 0.00028619796
        %v1550 = vmul.f32 %v1547, %v1549
        %v1551 = vadd.f32 %v1550, 0.0036580483
        %v1552 = vmul.f32 %v1547, %v1551
        %v1553 = vadd.f32 %v1552, 0.05243302
        %v1554 = vmul.f32 %v1547, %v1553
        %v1555 = vadd.f32 %v1554, 0.18741608
        %v1556 = vmul.f32 %v1547, %v1555
        %v1557 = vadd.f32 %v1556, 1.1283791
        %v1558 = vmul.f32 %v1545, %v1557
        %v1559 = vmul.f32 %v1547, 3.8918573e-05
        %v1560 = vadd.f32 %v1559, 0.001143296
        %v1561 = vmul.f32 %v1547, %v1560
        %v1562 = vadd.f32 %v1561, 0.014752088
        %v1563 = vmul.f32 %v1547, %v1562
        %v1564 = vadd.f32 %v1563, 0.112945676
        %v1565 = vmul.f32 %v1547, %v1564
        %v1566 = vadd.f32 %v1565, 0.4994258
        %v1567 = vmul.f32 %v1547, %v1566
        %v1568 = vadd.f32 %v1567, 1.0
        %v1569 = vrcp.pop %v1568
        %v1570 = vmul.f32 %v1568, %v1569
        %v1571 = vsub.f32 1.0, %v1570
        %v1572 = vmul.f32 %v1569, %v1571
        %v1573 = vadd.f32 %v1569, %v1572
        %vm1574 = vweird.f32 %v1568
        %vm1575 = vweird.f32 %v1569
        %vm1576 = vmor %vm1574, %vm1575
        %v1577 = vsel %vm1576, %v1569, %v1573
        %v1578 = vand.u32 2147483647, %v1568
        %vm1579 = vcmp.eq.f32.partialorder %v1578, 8.507059e+37
        %v1580 = vand.u32 %v1568, 2147483648
        %v1581 = vor.u32 1.1754944e-38, %v1580
        %v1582 = vsel %vm1579, %v1581, %v1577
        %v1583 = vmul.f32 %v1558, %v1582
        %v1584 = vmin.f32 %v1583, 1.0
        %v1585 = vmax.f32 %v1584, -1.0
        %v1586 = vadd.f32 %v1585, 1.0
        %v1587 = vmul.f32 %v1537, %v1586
        %v1588 = vld [vmem:[%s27] sm:$0xff]
        %v1589 = vld [vmem:[%s27 + $0x8] sm:$0xff]
        %v1590 = vld [vmem:[%s27 + $0x10] sm:$0xff]
        %v1591 = vld [vmem:[%s27 + $0x18] sm:$0xff]
        %v1592 = vld [vmem:[%s27 + $0x20] sm:$0xff]
        %v1593 = vld [vmem:[%s27 + $0x28] sm:$0xff]
        %v1594 = vld [vmem:[%s27 + $0x30] sm:$0xff]
        %v1595 = vld [vmem:[%s27 + $0x38] sm:$0xff]
        %v1596 = vperm.slane %v1028, 0
        %vm1597 = vcmask 523264
        %v1599 = vsel %vm1597, %v1587, 0
        %1601 = vmatpush.msra.mxu0 0.0
        %1602 = vmatpush.msra.mxu0 0.0
        %1603 = vmatpush.msra.mxu0 0.0
        %1604 = vmatpush.msra.mxu0 0.0
        %1605 = vmatpush.msra.mxu0 0.0
        %1606 = vmatpush.msra.mxu0 0.0
        %1607 = vmatpush.msra.mxu0 0.0
        %1608 = vmatpush.msra.mxu0 0.0
        %1609 = vmatpush.msra.mxu0 %v1595
        %1610 = vmatpush.msra.mxu0 %v1594
        %1611 = vmatpush.msra.mxu0 %v1593
        %1612 = vmatpush.msra.mxu0 %v1592
        %1613 = vmatpush.msra.mxu0 %v1591
        %1614 = vmatpush.msra.mxu0 %v1590
        %1615 = vmatpush.msra.mxu0 %v1589
        %1616 = vmatpush.msra.mxu0 %v1588
        %1617 = vmatmul.f32.gmra.mxu0 %v1599
        %v1618 = vpop.f32.mrf.mxu0
        %v1619 = vadd.f32 %v1596, %v1618
        %1620 = vdwg.mxu0
        %v1621 = vadd.f32 %v1619, %v1508
        %v1622 = vsel %vm1042, %v1621, 0.0
        %1623 = vadd.xlane.f32.xlu0 %v1622
        %v1624 = vpop.xlane.xlu0 %1623
        %v1625 = vmul.f32 %v1624, %v1052
        %v1626 = vsub.f32 %v1621, %v1625
        %v1627 = vmul.f32 %v1626, %v1626
        %v1628 = vsel %vm1042, %v1627, 0.0
        %1629 = vadd.xlane.f32.xlu0 %v1628
        %v1630 = vpop.xlane.xlu0 %1629
        %v1631 = vmul.f32 %v1630, %v1052
        %v1632 = vadd.f32 %v1631, 1e-12
        %v1633 = vrsqrt.pop %v1632
        %v1634 = vmul.f32 %v1633, %v1632
        %v1635 = vmul.f32 %v1634, %v1633
        %v1636 = vmul.f32 0.5, %v1635
        %v1637 = vsub.f32 1.5, %v1636
        %v1638 = vmul.f32 %v1633, %v1637
        %vm1639 = vweird.f32 %v1632
        %vm1640 = vweird.f32 %v1633
        %vm1641 = vmor %vm1639, %vm1640
        %v1642 = vsel %vm1641, %v1633, %v1638
        %v1643 = vmul.f32 %v1626, %v1642
        %v1644 = vperm.slane %v1029, 0
        %v1645 = vmul.f32 %v1643, %v1644
        %v1646 = vperm.slane %v1030, 0
        %v1647 = vadd.f32 %v1645, %v1646
        %s1648 = scalar_lea.vmem %s11, 32
        %v1649 = vld [vmem:[%s1648] sm:$0xff]
        %v1650 = vld [vmem:[%s1648 + $0x8] sm:$0xff]
        %v1651 = vld [vmem:[%s1648 + $0x10] sm:$0xff]
        %v1652 = vld [vmem:[%s1648 + $0x18] sm:$0xff]
        %v1653 = vperm.slane %v1023, 1
        %v1655 = vsel %vm1042, %v1647, 0
        %1657 = vmatpush.msra.mxu0 0.0
        %1658 = vmatpush.msra.mxu0 0.0
        %1659 = vmatpush.msra.mxu0 0.0
        %1660 = vmatpush.msra.mxu0 0.0
        %1661 = vmatpush.msra.mxu0 0.0
        %1662 = vmatpush.msra.mxu0 0.0
        %1663 = vmatpush.msra.mxu0 0.0
        %1664 = vmatpush.msra.mxu0 0.0
        %1665 = vmatpush.msra.mxu0 0.0
        %1666 = vmatpush.msra.mxu0 0.0
        %1667 = vmatpush.msra.mxu0 0.0
        %1668 = vmatpush.msra.mxu0 0.0
        %1669 = vmatpush.msra.mxu0 %v1652
        %1670 = vmatpush.msra.mxu0 %v1651
        %1671 = vmatpush.msra.mxu0 %v1650
        %1672 = vmatpush.msra.mxu0 %v1649
        %1673 = vmatmul.f32.gmra.mxu0 %v1655
        %v1674 = vpop.f32.mrf.mxu0
        %v1675 = vadd.f32 %v1653, %v1674
        %1676 = vdwg.mxu0
        %s1677 = scalar_lea.vmem %s15, 32
        %v1678 = vld [vmem:[%s1677] sm:$0xff]
        %v1679 = vld [vmem:[%s1677 + $0x8] sm:$0xff]
        %v1680 = vld [vmem:[%s1677 + $0x10] sm:$0xff]
        %v1681 = vld [vmem:[%s1677 + $0x18] sm:$0xff]
        %1683 = vrot.lane.b32.xlu0 %v1675, 96
        %v1684 = vpop.permute.xlu0 %1683
        %v1685 = vsel %vm1118, %v1675, 0
        %v1687 = vsel %vm1118, %v1684, 0
        %1689 = vmatpush.xpose.msra.mxu0 0.0
        %1690 = vmatpush.xpose.msra.mxu0 0.0
        %1691 = vmatpush.xpose.msra.mxu0 0.0
        %1692 = vmatpush.xpose.msra.mxu0 0.0
        %1693 = vmatpush.xpose.msra.mxu0 0.0
        %1694 = vmatpush.xpose.msra.mxu0 0.0
        %1695 = vmatpush.xpose.msra.mxu0 0.0
        %1696 = vmatpush.xpose.msra.mxu0 0.0
        %1697 = vmatpush.xpose.msra.mxu0 0.0
        %1698 = vmatpush.xpose.msra.mxu0 0.0
        %1699 = vmatpush.xpose.msra.mxu0 0.0
        %1700 = vmatpush.xpose.msra.mxu0 0.0
        %1701 = vmatpush.xpose.msra.mxu0 0.0
        %1702 = vmatpush.xpose.msra.mxu0 0.0
        %1703 = vmatpush.xpose.msra.mxu0 0.0
        %1704 = vmatpush.xpose.msra.mxu0 %v1687
        %1705 = vmatmul.f32.gmra.mxu0 %v1685
        %v1706 = vpop.f32.mrf.mxu0
        %v1707 = vadd.f32 0.0, %v1706
        %1708 = vdwg.mxu0
        %v1709 = vmul.f32 %v1707, 0.35355338
        %v1710 = vadd.f32 %v1709, %v1145
        %v1711 = vsel %vm1118, %v1710, -inf
        %1712 = vmax.xlane.f32.xlu0 %v1711
        %v1713 = vpop.xlane.xlu0 %1712
        %v1714 = vsub.f32 %v1710, %v1713
        %v1715 = vmul.f32 %v1714, 1.442695
        %v1716 = vpow.pop %v1715
        %v1717 = vsel %vm1118, %v1716, 0.0
        %1718 = vadd.xlane.f32.xlu0 %v1717
        %v1719 = vpop.xlane.xlu0 %1718
        %v1720 = vrcp.pop %v1719
        %v1721 = vmul.f32 %v1716, %v1720
        %1722 = vrot.lane.b32.xlu0 %v1675, 64
        %v1723 = vpop.permute.xlu0 %1722
        %v1726 = vsel %vm1118, %v1721, 0
        %1728 = vmatpush.msra.mxu0 0.0
        %1729 = vmatpush.msra.mxu0 0.0
        %1730 = vmatpush.msra.mxu0 0.0
        %1731 = vmatpush.msra.mxu0 0.0
        %1732 = vmatpush.msra.mxu0 0.0
        %1733 = vmatpush.msra.mxu0 0.0
        %1734 = vmatpush.msra.mxu0 0.0
        %1735 = vmatpush.msra.mxu0 0.0
        %1736 = vmatpush.msra.mxu0 0.0
        %1737 = vmatpush.msra.mxu0 0.0
        %1738 = vmatpush.msra.mxu0 0.0
        %1739 = vmatpush.msra.mxu0 0.0
        %1740 = vmatpush.msra.mxu0 0.0
        %1741 = vmatpush.msra.mxu0 0.0
        %1742 = vmatpush.msra.mxu0 0.0
        %1743 = vmatpush.msra.mxu0 %v1723
        %1744 = vmatmul.f32.gmra.mxu0 %v1726
        %v1745 = vpop.f32.mrf.mxu0
        %v1746 = vadd.f32 0.0, %v1745
        %1747 = vdwg.mxu0
        %1748 = vrot.lane.b32.xlu0 %v1675, 120
        %v1749 = vpop.permute.xlu0 %1748
        %1750 = vrot.lane.b32.xlu0 %v1675, 88
        %v1751 = vpop.permute.xlu0 %1750
        %v1752 = vsel %vm1118, %v1749, 0
        %v1754 = vsel %vm1118, %v1751, 0
        %1756 = vmatpush.xpose.msra.mxu0 0.0
        %1757 = vmatpush.xpose.msra.mxu0 0.0
        %1758 = vmatpush.xpose.msra.mxu0 0.0
        %1759 = vmatpush.xpose.msra.mxu0 0.0
        %1760 = vmatpush.xpose.msra.mxu0 0.0
        %1761 = vmatpush.xpose.msra.mxu0 0.0
        %1762 = vmatpush.xpose.msra.mxu0 0.0
        %1763 = vmatpush.xpose.msra.mxu0 0.0
        %1764 = vmatpush.xpose.msra.mxu0 0.0
        %1765 = vmatpush.xpose.msra.mxu0 0.0
        %1766 = vmatpush.xpose.msra.mxu0 0.0
        %1767 = vmatpush.xpose.msra.mxu0 0.0
        %1768 = vmatpush.xpose.msra.mxu0 0.0
        %1769 = vmatpush.xpose.msra.mxu0 0.0
        %1770 = vmatpush.xpose.msra.mxu0 0.0
        %1771 = vmatpush.xpose.msra.mxu0 %v1754
        %1772 = vmatmul.f32.gmra.mxu0 %v1752
        %v1773 = vpop.f32.mrf.mxu0
        %v1774 = vadd.f32 0.0, %v1773
        %1775 = vdwg.mxu0
        %v1776 = vmul.f32 %v1774, 0.35355338
        %v1777 = vadd.f32 %v1776, %v1145
        %v1778 = vsel %vm1118, %v1777, -inf
        %1779 = vmax.xlane.f32.xlu0 %v1778
        %v1780 = vpop.xlane.xlu0 %1779
        %v1781 = vsub.f32 %v1777, %v1780
        %v1782 = vmul.f32 %v1781, 1.442695
        %v1783 = vpow.pop %v1782
        %v1784 = vsel %vm1118, %v1783, 0.0
        %1785 = vadd.xlane.f32.xlu0 %v1784
        %v1786 = vpop.xlane.xlu0 %1785
        %v1787 = vrcp.pop %v1786
        %v1788 = vmul.f32 %v1783, %v1787
        %1789 = vrot.lane.b32.xlu0 %v1675, 56
        %v1790 = vpop.permute.xlu0 %1789
        %v1793 = vsel %vm1118, %v1788, 0
        %1795 = vmatpush.msra.mxu0 0.0
        %1796 = vmatpush.msra.mxu0 0.0
        %1797 = vmatpush.msra.mxu0 0.0
        %1798 = vmatpush.msra.mxu0 0.0
        %1799 = vmatpush.msra.mxu0 0.0
        %1800 = vmatpush.msra.mxu0 0.0
        %1801 = vmatpush.msra.mxu0 0.0
        %1802 = vmatpush.msra.mxu0 0.0
        %1803 = vmatpush.msra.mxu0 0.0
        %1804 = vmatpush.msra.mxu0 0.0
        %1805 = vmatpush.msra.mxu0 0.0
        %1806 = vmatpush.msra.mxu0 0.0
        %1807 = vmatpush.msra.mxu0 0.0
        %1808 = vmatpush.msra.mxu0 0.0
        %1809 = vmatpush.msra.mxu0 0.0
        %1810 = vmatpush.msra.mxu0 %v1790
        %1811 = vmatmul.f32.gmra.mxu0 %v1793
        %v1812 = vpop.f32.mrf.mxu0
        %v1813 = vadd.f32 0.0, %v1812
        %1814 = vdwg.mxu0
        %v1816 = vsel %vm1118, %v1813, 0
        %1818 = vmatpush.msra.mxu0 0.0
        %1819 = vmatpush.msra.mxu0 0.0
        %1820 = vmatpush.msra.mxu0 0.0
        %1821 = vmatpush.msra.mxu0 0.0
        %1822 = vmatpush.msra.mxu0 0.0
        %1823 = vmatpush.msra.mxu0 0.0
        %1824 = vmatpush.msra.mxu0 0.0
        %1825 = vmatpush.msra.mxu0 0.0
        %1826 = vmatpush.msra.mxu0 0.0
        %1827 = vmatpush.msra.mxu0 0.0
        %1828 = vmatpush.msra.mxu0 0.0
        %1829 = vmatpush.msra.mxu0 0.0
        %1830 = vmatpush.msra.mxu0 0.0
        %1831 = vmatpush.msra.mxu0 0.0
        %1832 = vmatpush.msra.mxu0 0.0
        %1833 = vmatpush.msra.mxu0 %v1679
        %1834 = vmatmul.f32.gmra.mxu0 %v1816
        %v1835 = vpop.f32.mrf.mxu0
        %v1836 = vadd.f32 0.0, %v1835
        %1837 = vdwg.mxu0
        %v1839 = vsel %vm1118, %v1746, 0
        %1841 = vmatpush.msra.mxu0 0.0
        %1842 = vmatpush.msra.mxu0 0.0
        %1843 = vmatpush.msra.mxu0 0.0
        %1844 = vmatpush.msra.mxu0 0.0
        %1845 = vmatpush.msra.mxu0 0.0
        %1846 = vmatpush.msra.mxu0 0.0
        %1847 = vmatpush.msra.mxu0 0.0
        %1848 = vmatpush.msra.mxu0 0.0
        %1849 = vmatpush.msra.mxu0 0.0
        %1850 = vmatpush.msra.mxu0 0.0
        %1851 = vmatpush.msra.mxu0 0.0
        %1852 = vmatpush.msra.mxu0 0.0
        %1853 = vmatpush.msra.mxu0 0.0
        %1854 = vmatpush.msra.mxu0 0.0
        %1855 = vmatpush.msra.mxu0 0.0
        %1856 = vmatpush.msra.mxu0 %v1678
        %1857 = vmatmul.f32.gmra.mxu0 %v1839
        %v1858 = vpop.f32.mrf.mxu0
        %v1859 = vadd.f32 %v1836, %v1858
        %1860 = vdwg.mxu0
        %1861 = vrot.lane.b32.xlu0 %v1675, 112
        %v1862 = vpop.permute.xlu0 %1861
        %1863 = vrot.lane.b32.xlu0 %v1675, 80
        %v1864 = vpop.permute.xlu0 %1863
        %v1865 = vsel %vm1118, %v1862, 0
        %v1867 = vsel %vm1118, %v1864, 0
        %1869 = vmatpush.xpose.msra.mxu0 0.0
        %1870 = vmatpush.xpose.msra.mxu0 0.0
        %1871 = vmatpush.xpose.msra.mxu0 0.0
        %1872 = vmatpush.xpose.msra.mxu0 0.0
        %1873 = vmatpush.xpose.msra.mxu0 0.0
        %1874 = vmatpush.xpose.msra.mxu0 0.0
        %1875 = vmatpush.xpose.msra.mxu0 0.0
        %1876 = vmatpush.xpose.msra.mxu0 0.0
        %1877 = vmatpush.xpose.msra.mxu0 0.0
        %1878 = vmatpush.xpose.msra.mxu0 0.0
        %1879 = vmatpush.xpose.msra.mxu0 0.0
        %1880 = vmatpush.xpose.msra.mxu0 0.0
        %1881 = vmatpush.xpose.msra.mxu0 0.0
        %1882 = vmatpush.xpose.msra.mxu0 0.0
        %1883 = vmatpush.xpose.msra.mxu0 0.0
        %1884 = vmatpush.xpose.msra.mxu0 %v1867
        %1885 = vmatmul.f32.gmra.mxu0 %v1865
        %v1886 = vpop.f32.mrf.mxu0
        %v1887 = vadd.f32 0.0, %v1886
        %1888 = vdwg.mxu0
        %v1889 = vmul.f32 %v1887, 0.35355338
        %v1890 = vadd.f32 %v1889, %v1145
        %v1891 = vsel %vm1118, %v1890, -inf
        %1892 = vmax.xlane.f32.xlu0 %v1891
        %v1893 = vpop.xlane.xlu0 %1892
        %v1894 = vsub.f32 %v1890, %v1893
        %v1895 = vmul.f32 %v1894, 1.442695
        %v1896 = vpow.pop %v1895
        %v1897 = vsel %vm1118, %v1896, 0.0
        %1898 = vadd.xlane.f32.xlu0 %v1897
        %v1899 = vpop.xlane.xlu0 %1898
        %v1900 = vrcp.pop %v1899
        %v1901 = vmul.f32 %v1896, %v1900
        %1902 = vrot.lane.b32.xlu0 %v1675, 48
        %v1903 = vpop.permute.xlu0 %1902
        %v1906 = vsel %vm1118, %v1901, 0
        %1908 = vmatpush.msra.mxu0 0.0
        %1909 = vmatpush.msra.mxu0 0.0
        %1910 = vmatpush.msra.mxu0 0.0
        %1911 = vmatpush.msra.mxu0 0.0
        %1912 = vmatpush.msra.mxu0 0.0
        %1913 = vmatpush.msra.mxu0 0.0
        %1914 = vmatpush.msra.mxu0 0.0
        %1915 = vmatpush.msra.mxu0 0.0
        %1916 = vmatpush.msra.mxu0 0.0
        %1917 = vmatpush.msra.mxu0 0.0
        %1918 = vmatpush.msra.mxu0 0.0
        %1919 = vmatpush.msra.mxu0 0.0
        %1920 = vmatpush.msra.mxu0 0.0
        %1921 = vmatpush.msra.mxu0 0.0
        %1922 = vmatpush.msra.mxu0 0.0
        %1923 = vmatpush.msra.mxu0 %v1903
        %1924 = vmatmul.f32.gmra.mxu0 %v1906
        %v1925 = vpop.f32.mrf.mxu0
        %v1926 = vadd.f32 0.0, %v1925
        %1927 = vdwg.mxu0
        %v1929 = vsel %vm1118, %v1926, 0
        %1931 = vmatpush.msra.mxu0 0.0
        %1932 = vmatpush.msra.mxu0 0.0
        %1933 = vmatpush.msra.mxu0 0.0
        %1934 = vmatpush.msra.mxu0 0.0
        %1935 = vmatpush.msra.mxu0 0.0
        %1936 = vmatpush.msra.mxu0 0.0
        %1937 = vmatpush.msra.mxu0 0.0
        %1938 = vmatpush.msra.mxu0 0.0
        %1939 = vmatpush.msra.mxu0 0.0
        %1940 = vmatpush.msra.mxu0 0.0
        %1941 = vmatpush.msra.mxu0 0.0
        %1942 = vmatpush.msra.mxu0 0.0
        %1943 = vmatpush.msra.mxu0 0.0
        %1944 = vmatpush.msra.mxu0 0.0
        %1945 = vmatpush.msra.mxu0 0.0
        %1946 = vmatpush.msra.mxu0 %v1680
        %1947 = vmatmul.f32.gmra.mxu0 %v1929
        %v1948 = vpop.f32.mrf.mxu0
        %v1949 = vadd.f32 0.0, %v1948
        %1950 = vdwg.mxu0
        %v1951 = vadd.f32 %v1859, %v1949
        %1952 = vrot.lane.b32.xlu0 %v1675, 104
        %v1953 = vpop.permute.xlu0 %1952
        %1954 = vrot.lane.b32.xlu0 %v1675, 72
        %v1955 = vpop.permute.xlu0 %1954
        %v1956 = vsel %vm1118, %v1953, 0
        %v1958 = vsel %vm1118, %v1955, 0
        %1960 = vmatpush.xpose.msra.mxu0 0.0
        %1961 = vmatpush.xpose.msra.mxu0 0.0
        %1962 = vmatpush.xpose.msra.mxu0 0.0
        %1963 = vmatpush.xpose.msra.mxu0 0.0
        %1964 = vmatpush.xpose.msra.mxu0 0.0
        %1965 = vmatpush.xpose.msra.mxu0 0.0
        %1966 = vmatpush.xpose.msra.mxu0 0.0
        %1967 = vmatpush.xpose.msra.mxu0 0.0
        %1968 = vmatpush.xpose.msra.mxu0 0.0
        %1969 = vmatpush.xpose.msra.mxu0 0.0
        %1970 = vmatpush.xpose.msra.mxu0 0.0
        %1971 = vmatpush.xpose.msra.mxu0 0.0
        %1972 = vmatpush.xpose.msra.mxu0 0.0
        %1973 = vmatpush.xpose.msra.mxu0 0.0
        %1974 = vmatpush.xpose.msra.mxu0 0.0
        %1975 = vmatpush.xpose.msra.mxu0 %v1958
        %1976 = vmatmul.f32.gmra.mxu0 %v1956
        %v1977 = vpop.f32.mrf.mxu0
        %v1978 = vadd.f32 0.0, %v1977
        %1979 = vdwg.mxu0
        %v1980 = vmul.f32 %v1978, 0.35355338
        %v1981 = vadd.f32 %v1980, %v1145
        %v1982 = vsel %vm1118, %v1981, -inf
        %1983 = vmax.xlane.f32.xlu0 %v1982
        %v1984 = vpop.xlane.xlu0 %1983
        %v1985 = vsub.f32 %v1981, %v1984
        %v1986 = vmul.f32 %v1985, 1.442695
        %v1987 = vpow.pop %v1986
        %v1988 = vsel %vm1118, %v1987, 0.0
        %1989 = vadd.xlane.f32.xlu0 %v1988
        %v1990 = vpop.xlane.xlu0 %1989
        %v1991 = vrcp.pop %v1990
        %v1992 = vmul.f32 %v1987, %v1991
        %1993 = vrot.lane.b32.xlu0 %v1675, 40
        %v1994 = vpop.permute.xlu0 %1993
        %v1997 = vsel %vm1118, %v1992, 0
        %1999 = vmatpush.msra.mxu0 0.0
        %2000 = vmatpush.msra.mxu0 0.0
        %2001 = vmatpush.msra.mxu0 0.0
        %2002 = vmatpush.msra.mxu0 0.0
        %2003 = vmatpush.msra.mxu0 0.0
        %2004 = vmatpush.msra.mxu0 0.0
        %2005 = vmatpush.msra.mxu0 0.0
        %2006 = vmatpush.msra.mxu0 0.0
        %2007 = vmatpush.msra.mxu0 0.0
        %2008 = vmatpush.msra.mxu0 0.0
        %2009 = vmatpush.msra.mxu0 0.0
        %2010 = vmatpush.msra.mxu0 0.0
        %2011 = vmatpush.msra.mxu0 0.0
        %2012 = vmatpush.msra.mxu0 0.0
        %2013 = vmatpush.msra.mxu0 0.0
        %2014 = vmatpush.msra.mxu0 %v1994
        %2015 = vmatmul.f32.gmra.mxu0 %v1997
        %v2016 = vpop.f32.mrf.mxu0
        %v2017 = vadd.f32 0.0, %v2016
        %2018 = vdwg.mxu0
        %v2020 = vsel %vm1118, %v2017, 0
        %2022 = vmatpush.msra.mxu0 0.0
        %2023 = vmatpush.msra.mxu0 0.0
        %2024 = vmatpush.msra.mxu0 0.0
        %2025 = vmatpush.msra.mxu0 0.0
        %2026 = vmatpush.msra.mxu0 0.0
        %2027 = vmatpush.msra.mxu0 0.0
        %2028 = vmatpush.msra.mxu0 0.0
        %2029 = vmatpush.msra.mxu0 0.0
        %2030 = vmatpush.msra.mxu0 0.0
        %2031 = vmatpush.msra.mxu0 0.0
        %2032 = vmatpush.msra.mxu0 0.0
        %2033 = vmatpush.msra.mxu0 0.0
        %2034 = vmatpush.msra.mxu0 0.0
        %2035 = vmatpush.msra.mxu0 0.0
        %2036 = vmatpush.msra.mxu0 0.0
        %2037 = vmatpush.msra.mxu0 %v1681
        %2038 = vmatmul.f32.gmra.mxu0 %v2020
        %v2039 = vpop.f32.mrf.mxu0
        %v2040 = vadd.f32 0.0, %v2039
        %2041 = vdwg.mxu0
        %v2042 = vadd.f32 %v1951, %v2040
        %v2043 = vperm.slane %v1024, 1
        %v2044 = vadd.f32 %v2042, %v2043
        %v2045 = vadd.f32 %v2044, %v1647
        %v2046 = vsel %vm1042, %v2045, 0.0
        %2047 = vadd.xlane.f32.xlu0 %v2046
        %v2048 = vpop.xlane.xlu0 %2047
        %v2049 = vmul.f32 %v2048, %v1052
        %v2050 = vsub.f32 %v2045, %v2049
        %v2051 = vmul.f32 %v2050, %v2050
        %v2052 = vsel %vm1042, %v2051, 0.0
        %2053 = vadd.xlane.f32.xlu0 %v2052
        %v2054 = vpop.xlane.xlu0 %2053
        %v2055 = vmul.f32 %v2054, %v1052
        %v2056 = vadd.f32 %v2055, 1e-12
        %v2057 = vrsqrt.pop %v2056
        %v2058 = vmul.f32 %v2057, %v2056
        %v2059 = vmul.f32 %v2058, %v2057
        %v2060 = vmul.f32 0.5, %v2059
        %v2061 = vsub.f32 1.5, %v2060
        %v2062 = vmul.f32 %v2057, %v2061
        %vm2063 = vweird.f32 %v2056
        %vm2064 = vweird.f32 %v2057
        %vm2065 = vmor %vm2063, %vm2064
        %v2066 = vsel %vm2065, %v2057, %v2062
        %v2067 = vmul.f32 %v2050, %v2066
        %v2068 = vperm.slane %v1025, 1
        %v2069 = vmul.f32 %v2067, %v2068
        %v2070 = vperm.slane %v1026, 1
        %v2071 = vadd.f32 %v2069, %v2070
        %s2072 = scalar_lea.vmem %s23, 32
        %v2073 = vld [vmem:[%s2072] sm:$0xff]
        %v2074 = vld [vmem:[%s2072 + $0x8] sm:$0xff]
        %v2075 = vld [vmem:[%s2072 + $0x10] sm:$0xff]
        %v2076 = vld [vmem:[%s2072 + $0x18] sm:$0xff]
        %v2077 = vperm.slane %v1027, 1
        %v2079 = vsel %vm1042, %v2071, 0
        %2081 = vmatpush.msra.mxu0 0.0
        %2082 = vmatpush.msra.mxu0 0.0
        %2083 = vmatpush.msra.mxu0 0.0
        %2084 = vmatpush.msra.mxu0 0.0
        %2085 = vmatpush.msra.mxu0 0.0
        %2086 = vmatpush.msra.mxu0 0.0
        %2087 = vmatpush.msra.mxu0 0.0
        %2088 = vmatpush.msra.mxu0 0.0
        %2089 = vmatpush.msra.mxu0 0.0
        %2090 = vmatpush.msra.mxu0 0.0
        %2091 = vmatpush.msra.mxu0 0.0
        %2092 = vmatpush.msra.mxu0 0.0
        %2093 = vmatpush.msra.mxu0 %v2076
        %2094 = vmatpush.msra.mxu0 %v2075
        %2095 = vmatpush.msra.mxu0 %v2074
        %2096 = vmatpush.msra.mxu0 %v2073
        %2097 = vmatmul.f32.gmra.mxu0 %v2079
        %v2098 = vpop.f32.mrf.mxu0
        %v2099 = vadd.f32 %v2077, %v2098
        %2100 = vdwg.mxu0
        %v2101 = vmul.f32 %v2099, 0.5
        %v2102 = vmul.f32 %v2099, %v1544
        %v2103 = vmul.f32 %v2102, %v2102
        %v2104 = vmin.f32 16.0, %v2103
        %v2105 = vmul.f32 %v2104, 2.1237322e-06
        %v2106 = vadd.f32 %v2105, 0.00028619796
        %v2107 = vmul.f32 %v2104, %v2106
        %v2108 = vadd.f32 %v2107, 0.0036580483
        %v2109 = vmul.f32 %v2104, %v2108
        %v2110 = vadd.f32 %v2109, 0.05243302
        %v2111 = vmul.f32 %v2104, %v2110
        %v2112 = vadd.f32 %v2111, 0.18741608
        %v2113 = vmul.f32 %v2104, %v2112
        %v2114 = vadd.f32 %v2113, 1.1283791
        %v2115 = vmul.f32 %v2102, %v2114
        %v2116 = vmul.f32 %v2104, 3.8918573e-05
        %v2117 = vadd.f32 %v2116, 0.001143296
        %v2118 = vmul.f32 %v2104, %v2117
        %v2119 = vadd.f32 %v2118, 0.014752088
        %v2120 = vmul.f32 %v2104, %v2119
        %v2121 = vadd.f32 %v2120, 0.112945676
        %v2122 = vmul.f32 %v2104, %v2121
        %v2123 = vadd.f32 %v2122, 0.4994258
        %v2124 = vmul.f32 %v2104, %v2123
        %v2125 = vadd.f32 %v2124, 1.0
        %v2126 = vrcp.pop %v2125
        %v2127 = vmul.f32 %v2125, %v2126
        %v2128 = vsub.f32 1.0, %v2127
        %v2129 = vmul.f32 %v2126, %v2128
        %v2130 = vadd.f32 %v2126, %v2129
        %vm2131 = vweird.f32 %v2125
        %vm2132 = vweird.f32 %v2126
        %vm2133 = vmor %vm2131, %vm2132
        %v2134 = vsel %vm2133, %v2126, %v2130
        %v2135 = vand.u32 2147483647, %v2125
        %vm2136 = vcmp.eq.f32.partialorder %v2135, 8.507059e+37
        %v2137 = vand.u32 %v2125, 2147483648
        %v2138 = vor.u32 1.1754944e-38, %v2137
        %v2139 = vsel %vm2136, %v2138, %v2134
        %v2140 = vmul.f32 %v2115, %v2139
        %v2141 = vmin.f32 %v2140, 1.0
        %v2142 = vmax.f32 %v2141, -1.0
        %v2143 = vadd.f32 %v2142, 1.0
        %v2144 = vmul.f32 %v2101, %v2143
        %s2145 = scalar_lea.vmem %s27, 64
        %v2146 = vld [vmem:[%s2145] sm:$0xff]
        %v2147 = vld [vmem:[%s2145 + $0x8] sm:$0xff]
        %v2148 = vld [vmem:[%s2145 + $0x10] sm:$0xff]
        %v2149 = vld [vmem:[%s2145 + $0x18] sm:$0xff]
        %v2150 = vld [vmem:[%s2145 + $0x20] sm:$0xff]
        %v2151 = vld [vmem:[%s2145 + $0x28] sm:$0xff]
        %v2152 = vld [vmem:[%s2145 + $0x30] sm:$0xff]
        %v2153 = vld [vmem:[%s2145 + $0x38] sm:$0xff]
        %v2154 = vperm.slane %v1028, 1
        %v2156 = vsel %vm1597, %v2144, 0
        %2158 = vmatpush.msra.mxu0 0.0
        %2159 = vmatpush.msra.mxu0 0.0
        %2160 = vmatpush.msra.mxu0 0.0
        %2161 = vmatpush.msra.mxu0 0.0
        %2162 = vmatpush.msra.mxu0 0.0
        %2163 = vmatpush.msra.mxu0 0.0
        %2164 = vmatpush.msra.mxu0 0.0
        %2165 = vmatpush.msra.mxu0 0.0
        %2166 = vmatpush.msra.mxu0 %v2153
        %2167 = vmatpush.msra.mxu0 %v2152
        %2168 = vmatpush.msra.mxu0 %v2151
        %2169 = vmatpush.msra.mxu0 %v2150
        %2170 = vmatpush.msra.mxu0 %v2149
        %2171 = vmatpush.msra.mxu0 %v2148
        %2172 = vmatpush.msra.mxu0 %v2147
        %2173 = vmatpush.msra.mxu0 %v2146
        %2174 = vmatmul.f32.gmra.mxu0 %v2156
        %v2175 = vpop.f32.mrf.mxu0
        %v2176 = vadd.f32 %v2154, %v2175
        %2177 = vdwg.mxu0
        %v2178 = vadd.f32 %v2176, %v2071
        %v2179 = vsel %vm1042, %v2178, 0.0
        %2180 = vadd.xlane.f32.xlu0 %v2179
        %v2181 = vpop.xlane.xlu0 %2180
        %v2182 = vmul.f32 %v2181, %v1052
        %v2183 = vsub.f32 %v2178, %v2182
        %v2184 = vmul.f32 %v2183, %v2183
        %v2185 = vsel %vm1042, %v2184, 0.0
        %2186 = vadd.xlane.f32.xlu0 %v2185
        %v2187 = vpop.xlane.xlu0 %2186
        %v2188 = vmul.f32 %v2187, %v1052
        %v2189 = vadd.f32 %v2188, 1e-12
        %v2190 = vrsqrt.pop %v2189
        %v2191 = vmul.f32 %v2190, %v2189
        %v2192 = vmul.f32 %v2191, %v2190
        %v2193 = vmul.f32 0.5, %v2192
        %v2194 = vsub.f32 1.5, %v2193
        %v2195 = vmul.f32 %v2190, %v2194
        %vm2196 = vweird.f32 %v2189
        %vm2197 = vweird.f32 %v2190
        %vm2198 = vmor %vm2196, %vm2197
        %v2199 = vsel %vm2198, %v2190, %v2195
        %v2200 = vmul.f32 %v2183, %v2199
        %v2201 = vperm.slane %v1029, 1
        %v2202 = vmul.f32 %v2200, %v2201
        %v2203 = vperm.slane %v1030, 1
        %v2204 = vadd.f32 %v2202, %v2203
        %v2205 = vld [vmem:[%s5] sm:$0xff]
        %v2206 = vadd.f32 %v2204, %v2205
        %v2207 = vlaneseq
        %v2208 = vshrl.u32 %v2207, 7
        %v2209 = vlaneseq
        %v2210 = vand.u32 %v2209, 127
        %vm2211 = vcmp.le.s32.totalorder %v2210, %v2208
        %v2212 = vsel %vm2211, 0.0, -1e+09
        %v2213 = vsel %vm1042, %v2206, 0.0
        %2214 = vadd.xlane.f32.xlu0 %v2213
        %v2215 = vpop.xlane.xlu0 %2214
        %v2216 = vmul.f32 %v2215, %v1052
        %v2217 = vsub.f32 %v2206, %v2216
        %v2218 = vmul.f32 %v2217, %v2217
        %v2219 = vsel %vm1042, %v2218, 0.0
        %2220 = vadd.xlane.f32.xlu0 %v2219
        %v2221 = vpop.xlane.xlu0 %2220
        %v2222 = vmul.f32 %v2221, %v1052
        %v2223 = vadd.f32 %v2222, 1e-05
        %v2224 = vrsqrt.pop %v2223
        %v2225 = vmul.f32 %v2224, %v2223
        %v2226 = vmul.f32 %v2225, %v2224
        %v2227 = vmul.f32 0.5, %v2226
        %v2228 = vsub.f32 1.5, %v2227
        %v2229 = vmul.f32 %v2224, %v2228
        %vm2230 = vweird.f32 %v2223
        %vm2231 = vweird.f32 %v2224
        %vm2232 = vmor %vm2230, %vm2231
        %v2233 = vsel %vm2232, %v2224, %v2229
        %v2234 = vmul.f32 %v2217, %v2233
        %v2235 = vperm.slane %v1031, 0
        %v2236 = vmul.f32 %v2234, %v2235
        %v2237 = vperm.slane %v1032, 0
        %v2238 = vadd.f32 %v2236, %v2237
        %v2239 = vld [vmem:[%s39] sm:$0xff]
        %v2240 = vld [vmem:[%s39 + $0x8] sm:$0xff]
        %v2241 = vld [vmem:[%s39 + $0x10] sm:$0xff]
        %v2242 = vld [vmem:[%s39 + $0x18] sm:$0xff]
        %v2243 = vperm.slane %v1033, 0
        %v2245 = vsel %vm1042, %v2238, 0
        %2247 = vmatpush.msra.mxu0 0.0
        %2248 = vmatpush.msra.mxu0 0.0
        %2249 = vmatpush.msra.mxu0 0.0
        %2250 = vmatpush.msra.mxu0 0.0
        %2251 = vmatpush.msra.mxu0 0.0
        %2252 = vmatpush.msra.mxu0 0.0
        %2253 = vmatpush.msra.mxu0 0.0
        %2254 = vmatpush.msra.mxu0 0.0
        %2255 = vmatpush.msra.mxu0 0.0
        %2256 = vmatpush.msra.mxu0 0.0
        %2257 = vmatpush.msra.mxu0 0.0
        %2258 = vmatpush.msra.mxu0 0.0
        %2259 = vmatpush.msra.mxu0 %v2242
        %2260 = vmatpush.msra.mxu0 %v2241
        %2261 = vmatpush.msra.mxu0 %v2240
        %2262 = vmatpush.msra.mxu0 %v2239
        %2263 = vmatmul.f32.gmra.mxu0 %v2245
        %v2264 = vpop.f32.mrf.mxu0
        %v2265 = vadd.f32 %v2243, %v2264
        %2266 = vdwg.mxu0
        %v2267 = vld [vmem:[%s43] sm:$0xff]
        %v2268 = vld [vmem:[%s43 + $0x8] sm:$0xff]
        %v2269 = vld [vmem:[%s43 + $0x10] sm:$0xff]
        %v2270 = vld [vmem:[%s43 + $0x18] sm:$0xff]
        %2272 = vrot.lane.b32.xlu0 %v2265, 96
        %v2273 = vpop.permute.xlu0 %2272
        %v2274 = vsel %vm1118, %v2265, 0
        %v2276 = vsel %vm1118, %v2273, 0
        %2278 = vmatpush.xpose.msra.mxu0 0.0
        %2279 = vmatpush.xpose.msra.mxu0 0.0
        %2280 = vmatpush.xpose.msra.mxu0 0.0
        %2281 = vmatpush.xpose.msra.mxu0 0.0
        %2282 = vmatpush.xpose.msra.mxu0 0.0
        %2283 = vmatpush.xpose.msra.mxu0 0.0
        %2284 = vmatpush.xpose.msra.mxu0 0.0
        %2285 = vmatpush.xpose.msra.mxu0 0.0
        %2286 = vmatpush.xpose.msra.mxu0 0.0
        %2287 = vmatpush.xpose.msra.mxu0 0.0
        %2288 = vmatpush.xpose.msra.mxu0 0.0
        %2289 = vmatpush.xpose.msra.mxu0 0.0
        %2290 = vmatpush.xpose.msra.mxu0 0.0
        %2291 = vmatpush.xpose.msra.mxu0 0.0
        %2292 = vmatpush.xpose.msra.mxu0 0.0
        %2293 = vmatpush.xpose.msra.mxu0 %v2276
        %2294 = vmatmul.f32.gmra.mxu0 %v2274
        %v2295 = vpop.f32.mrf.mxu0
        %v2296 = vadd.f32 0.0, %v2295
        %2297 = vdwg.mxu0
        %v2298 = vmul.f32 %v2296, 0.35355338
        %v2299 = vadd.f32 %v2298, %v2212
        %v2300 = vsel %vm1118, %v2299, -inf
        %2301 = vmax.xlane.f32.xlu0 %v2300
        %v2302 = vpop.xlane.xlu0 %2301
        %v2303 = vsub.f32 %v2299, %v2302
        %v2304 = vmul.f32 %v2303, 1.442695
        %v2305 = vpow.pop %v2304
        %v2306 = vsel %vm1118, %v2305, 0.0
        %2307 = vadd.xlane.f32.xlu0 %v2306
        %v2308 = vpop.xlane.xlu0 %2307
        %v2309 = vrcp.pop %v2308
        %v2310 = vmul.f32 %v2305, %v2309
        %2311 = vrot.lane.b32.xlu0 %v2265, 64
        %v2312 = vpop.permute.xlu0 %2311
        %v2315 = vsel %vm1118, %v2310, 0
        %2317 = vmatpush.msra.mxu0 0.0
        %2318 = vmatpush.msra.mxu0 0.0
        %2319 = vmatpush.msra.mxu0 0.0
        %2320 = vmatpush.msra.mxu0 0.0
        %2321 = vmatpush.msra.mxu0 0.0
        %2322 = vmatpush.msra.mxu0 0.0
        %2323 = vmatpush.msra.mxu0 0.0
        %2324 = vmatpush.msra.mxu0 0.0
        %2325 = vmatpush.msra.mxu0 0.0
        %2326 = vmatpush.msra.mxu0 0.0
        %2327 = vmatpush.msra.mxu0 0.0
        %2328 = vmatpush.msra.mxu0 0.0
        %2329 = vmatpush.msra.mxu0 0.0
        %2330 = vmatpush.msra.mxu0 0.0
        %2331 = vmatpush.msra.mxu0 0.0
        %2332 = vmatpush.msra.mxu0 %v2312
        %2333 = vmatmul.f32.gmra.mxu0 %v2315
        %v2334 = vpop.f32.mrf.mxu0
        %v2335 = vadd.f32 0.0, %v2334
        %2336 = vdwg.mxu0
        %2337 = vrot.lane.b32.xlu0 %v2265, 120
        %v2338 = vpop.permute.xlu0 %2337
        %2339 = vrot.lane.b32.xlu0 %v2265, 88
        %v2340 = vpop.permute.xlu0 %2339
        %v2341 = vsel %vm1118, %v2338, 0
        %v2343 = vsel %vm1118, %v2340, 0
        %2345 = vmatpush.xpose.msra.mxu0 0.0
        %2346 = vmatpush.xpose.msra.mxu0 0.0
        %2347 = vmatpush.xpose.msra.mxu0 0.0
        %2348 = vmatpush.xpose.msra.mxu0 0.0
        %2349 = vmatpush.xpose.msra.mxu0 0.0
        %2350 = vmatpush.xpose.msra.mxu0 0.0
        %2351 = vmatpush.xpose.msra.mxu0 0.0
        %2352 = vmatpush.xpose.msra.mxu0 0.0
        %2353 = vmatpush.xpose.msra.mxu0 0.0
        %2354 = vmatpush.xpose.msra.mxu0 0.0
        %2355 = vmatpush.xpose.msra.mxu0 0.0
        %2356 = vmatpush.xpose.msra.mxu0 0.0
        %2357 = vmatpush.xpose.msra.mxu0 0.0
        %2358 = vmatpush.xpose.msra.mxu0 0.0
        %2359 = vmatpush.xpose.msra.mxu0 0.0
        %2360 = vmatpush.xpose.msra.mxu0 %v2343
        %2361 = vmatmul.f32.gmra.mxu0 %v2341
        %v2362 = vpop.f32.mrf.mxu0
        %v2363 = vadd.f32 0.0, %v2362
        %2364 = vdwg.mxu0
        %v2365 = vmul.f32 %v2363, 0.35355338
        %v2366 = vadd.f32 %v2365, %v2212
        %v2367 = vsel %vm1118, %v2366, -inf
        %2368 = vmax.xlane.f32.xlu0 %v2367
        %v2369 = vpop.xlane.xlu0 %2368
        %v2370 = vsub.f32 %v2366, %v2369
        %v2371 = vmul.f32 %v2370, 1.442695
        %v2372 = vpow.pop %v2371
        %v2373 = vsel %vm1118, %v2372, 0.0
        %2374 = vadd.xlane.f32.xlu0 %v2373
        %v2375 = vpop.xlane.xlu0 %2374
        %v2376 = vrcp.pop %v2375
        %v2377 = vmul.f32 %v2372, %v2376
        %2378 = vrot.lane.b32.xlu0 %v2265, 56
        %v2379 = vpop.permute.xlu0 %2378
        %v2382 = vsel %vm1118, %v2377, 0
        %2384 = vmatpush.msra.mxu0 0.0
        %2385 = vmatpush.msra.mxu0 0.0
        %2386 = vmatpush.msra.mxu0 0.0
        %2387 = vmatpush.msra.mxu0 0.0
        %2388 = vmatpush.msra.mxu0 0.0
        %2389 = vmatpush.msra.mxu0 0.0
        %2390 = vmatpush.msra.mxu0 0.0
        %2391 = vmatpush.msra.mxu0 0.0
        %2392 = vmatpush.msra.mxu0 0.0
        %2393 = vmatpush.msra.mxu0 0.0
        %2394 = vmatpush.msra.mxu0 0.0
        %2395 = vmatpush.msra.mxu0 0.0
        %2396 = vmatpush.msra.mxu0 0.0
        %2397 = vmatpush.msra.mxu0 0.0
        %2398 = vmatpush.msra.mxu0 0.0
        %2399 = vmatpush.msra.mxu0 %v2379
        %2400 = vmatmul.f32.gmra.mxu0 %v2382
        %v2401 = vpop.f32.mrf.mxu0
        %v2402 = vadd.f32 0.0, %v2401
        %2403 = vdwg.mxu0
        %v2405 = vsel %vm1118, %v2402, 0
        %2407 = vmatpush.msra.mxu0 0.0
        %2408 = vmatpush.msra.mxu0 0.0
        %2409 = vmatpush.msra.mxu0 0.0
        %2410 = vmatpush.msra.mxu0 0.0
        %2411 = vmatpush.msra.mxu0 0.0
        %2412 = vmatpush.msra.mxu0 0.0
        %2413 = vmatpush.msra.mxu0 0.0
        %2414 = vmatpush.msra.mxu0 0.0
        %2415 = vmatpush.msra.mxu0 0.0
        %2416 = vmatpush.msra.mxu0 0.0
        %2417 = vmatpush.msra.mxu0 0.0
        %2418 = vmatpush.msra.mxu0 0.0
        %2419 = vmatpush.msra.mxu0 0.0
        %2420 = vmatpush.msra.mxu0 0.0
        %2421 = vmatpush.msra.mxu0 0.0
        %2422 = vmatpush.msra.mxu0 %v2268
        %2423 = vmatmul.f32.gmra.mxu0 %v2405
        %v2424 = vpop.f32.mrf.mxu0
        %v2425 = vadd.f32 0.0, %v2424
        %2426 = vdwg.mxu0
        %v2428 = vsel %vm1118, %v2335, 0
        %2430 = vmatpush.msra.mxu0 0.0
        %2431 = vmatpush.msra.mxu0 0.0
        %2432 = vmatpush.msra.mxu0 0.0
        %2433 = vmatpush.msra.mxu0 0.0
        %2434 = vmatpush.msra.mxu0 0.0
        %2435 = vmatpush.msra.mxu0 0.0
        %2436 = vmatpush.msra.mxu0 0.0
        %2437 = vmatpush.msra.mxu0 0.0
        %2438 = vmatpush.msra.mxu0 0.0
        %2439 = vmatpush.msra.mxu0 0.0
        %2440 = vmatpush.msra.mxu0 0.0
        %2441 = vmatpush.msra.mxu0 0.0
        %2442 = vmatpush.msra.mxu0 0.0
        %2443 = vmatpush.msra.mxu0 0.0
        %2444 = vmatpush.msra.mxu0 0.0
        %2445 = vmatpush.msra.mxu0 %v2267
        %2446 = vmatmul.f32.gmra.mxu0 %v2428
        %v2447 = vpop.f32.mrf.mxu0
        %v2448 = vadd.f32 %v2425, %v2447
        %2449 = vdwg.mxu0
        %2450 = vrot.lane.b32.xlu0 %v2265, 112
        %v2451 = vpop.permute.xlu0 %2450
        %2452 = vrot.lane.b32.xlu0 %v2265, 80
        %v2453 = vpop.permute.xlu0 %2452
        %v2454 = vsel %vm1118, %v2451, 0
        %v2456 = vsel %vm1118, %v2453, 0
        %2458 = vmatpush.xpose.msra.mxu0 0.0
        %2459 = vmatpush.xpose.msra.mxu0 0.0
        %2460 = vmatpush.xpose.msra.mxu0 0.0
        %2461 = vmatpush.xpose.msra.mxu0 0.0
        %2462 = vmatpush.xpose.msra.mxu0 0.0
        %2463 = vmatpush.xpose.msra.mxu0 0.0
        %2464 = vmatpush.xpose.msra.mxu0 0.0
        %2465 = vmatpush.xpose.msra.mxu0 0.0
        %2466 = vmatpush.xpose.msra.mxu0 0.0
        %2467 = vmatpush.xpose.msra.mxu0 0.0
        %2468 = vmatpush.xpose.msra.mxu0 0.0
        %2469 = vmatpush.xpose.msra.mxu0 0.0
        %2470 = vmatpush.xpose.msra.mxu0 0.0
        %2471 = vmatpush.xpose.msra.mxu0 0.0
        %2472 = vmatpush.xpose.msra.mxu0 0.0
        %2473 = vmatpush.xpose.msra.mxu0 %v2456
        %2474 = vmatmul.f32.gmra.mxu0 %v2454
        %v2475 = vpop.f32.mrf.mxu0
        %v2476 = vadd.f32 0.0, %v2475
        %2477 = vdwg.mxu0
        %v2478 = vmul.f32 %v2476, 0.35355338
        %v2479 = vadd.f32 %v2478, %v2212
        %v2480 = vsel %vm1118, %v2479, -inf
        %2481 = vmax.xlane.f32.xlu0 %v2480
        %v2482 = vpop.xlane.xlu0 %2481
        %v2483 = vsub.f32 %v2479, %v2482
        %v2484 = vmul.f32 %v2483, 1.442695
        %v2485 = vpow.pop %v2484
        %v2486 = vsel %vm1118, %v2485, 0.0
        %2487 = vadd.xlane.f32.xlu0 %v2486
        %v2488 = vpop.xlane.xlu0 %2487
        %v2489 = vrcp.pop %v2488
        %v2490 = vmul.f32 %v2485, %v2489
        %2491 = vrot.lane.b32.xlu0 %v2265, 48
        %v2492 = vpop.permute.xlu0 %2491
        %v2495 = vsel %vm1118, %v2490, 0
        %2497 = vmatpush.msra.mxu0 0.0
        %2498 = vmatpush.msra.mxu0 0.0
        %2499 = vmatpush.msra.mxu0 0.0
        %2500 = vmatpush.msra.mxu0 0.0
        %2501 = vmatpush.msra.mxu0 0.0
        %2502 = vmatpush.msra.mxu0 0.0
        %2503 = vmatpush.msra.mxu0 0.0
        %2504 = vmatpush.msra.mxu0 0.0
        %2505 = vmatpush.msra.mxu0 0.0
        %2506 = vmatpush.msra.mxu0 0.0
        %2507 = vmatpush.msra.mxu0 0.0
        %2508 = vmatpush.msra.mxu0 0.0
        %2509 = vmatpush.msra.mxu0 0.0
        %2510 = vmatpush.msra.mxu0 0.0
        %2511 = vmatpush.msra.mxu0 0.0
        %2512 = vmatpush.msra.mxu0 %v2492
        %2513 = vmatmul.f32.gmra.mxu0 %v2495
        %v2514 = vpop.f32.mrf.mxu0
        %v2515 = vadd.f32 0.0, %v2514
        %2516 = vdwg.mxu0
        %v2518 = vsel %vm1118, %v2515, 0
        %2520 = vmatpush.msra.mxu0 0.0
        %2521 = vmatpush.msra.mxu0 0.0
        %2522 = vmatpush.msra.mxu0 0.0
        %2523 = vmatpush.msra.mxu0 0.0
        %2524 = vmatpush.msra.mxu0 0.0
        %2525 = vmatpush.msra.mxu0 0.0
        %2526 = vmatpush.msra.mxu0 0.0
        %2527 = vmatpush.msra.mxu0 0.0
        %2528 = vmatpush.msra.mxu0 0.0
        %2529 = vmatpush.msra.mxu0 0.0
        %2530 = vmatpush.msra.mxu0 0.0
        %2531 = vmatpush.msra.mxu0 0.0
        %2532 = vmatpush.msra.mxu0 0.0
        %2533 = vmatpush.msra.mxu0 0.0
        %2534 = vmatpush.msra.mxu0 0.0
        %2535 = vmatpush.msra.mxu0 %v2269
        %2536 = vmatmul.f32.gmra.mxu0 %v2518
        %v2537 = vpop.f32.mrf.mxu0
        %v2538 = vadd.f32 0.0, %v2537
        %2539 = vdwg.mxu0
        %v2540 = vadd.f32 %v2448, %v2538
        %2541 = vrot.lane.b32.xlu0 %v2265, 104
        %v2542 = vpop.permute.xlu0 %2541
        %2543 = vrot.lane.b32.xlu0 %v2265, 72
        %v2544 = vpop.permute.xlu0 %2543
        %v2545 = vsel %vm1118, %v2542, 0
        %v2547 = vsel %vm1118, %v2544, 0
        %2549 = vmatpush.xpose.msra.mxu0 0.0
        %2550 = vmatpush.xpose.msra.mxu0 0.0
        %2551 = vmatpush.xpose.msra.mxu0 0.0
        %2552 = vmatpush.xpose.msra.mxu0 0.0
        %2553 = vmatpush.xpose.msra.mxu0 0.0
        %2554 = vmatpush.xpose.msra.mxu0 0.0
        %2555 = vmatpush.xpose.msra.mxu0 0.0
        %2556 = vmatpush.xpose.msra.mxu0 0.0
        %2557 = vmatpush.xpose.msra.mxu0 0.0
        %2558 = vmatpush.xpose.msra.mxu0 0.0
        %2559 = vmatpush.xpose.msra.mxu0 0.0
        %2560 = vmatpush.xpose.msra.mxu0 0.0
        %2561 = vmatpush.xpose.msra.mxu0 0.0
        %2562 = vmatpush.xpose.msra.mxu0 0.0
        %2563 = vmatpush.xpose.msra.mxu0 0.0
        %2564 = vmatpush.xpose.msra.mxu0 %v2547
        %2565 = vmatmul.f32.gmra.mxu0 %v2545
        %v2566 = vpop.f32.mrf.mxu0
        %v2567 = vadd.f32 0.0, %v2566
        %2568 = vdwg.mxu0
        %v2569 = vmul.f32 %v2567, 0.35355338
        %v2570 = vadd.f32 %v2569, %v2212
        %v2571 = vsel %vm1118, %v2570, -inf
        %2572 = vmax.xlane.f32.xlu0 %v2571
        %v2573 = vpop.xlane.xlu0 %2572
        %v2574 = vsub.f32 %v2570, %v2573
        %v2575 = vmul.f32 %v2574, 1.442695
        %v2576 = vpow.pop %v2575
        %v2577 = vsel %vm1118, %v2576, 0.0
        %2578 = vadd.xlane.f32.xlu0 %v2577
        %v2579 = vpop.xlane.xlu0 %2578
        %v2580 = vrcp.pop %v2579
        %v2581 = vmul.f32 %v2576, %v2580
        %2582 = vrot.lane.b32.xlu0 %v2265, 40
        %v2583 = vpop.permute.xlu0 %2582
        %v2586 = vsel %vm1118, %v2581, 0
        %2588 = vmatpush.msra.mxu0 0.0
        %2589 = vmatpush.msra.mxu0 0.0
        %2590 = vmatpush.msra.mxu0 0.0
        %2591 = vmatpush.msra.mxu0 0.0
        %2592 = vmatpush.msra.mxu0 0.0
        %2593 = vmatpush.msra.mxu0 0.0
        %2594 = vmatpush.msra.mxu0 0.0
        %2595 = vmatpush.msra.mxu0 0.0
        %2596 = vmatpush.msra.mxu0 0.0
        %2597 = vmatpush.msra.mxu0 0.0
        %2598 = vmatpush.msra.mxu0 0.0
        %2599 = vmatpush.msra.mxu0 0.0
        %2600 = vmatpush.msra.mxu0 0.0
        %2601 = vmatpush.msra.mxu0 0.0
        %2602 = vmatpush.msra.mxu0 0.0
        %2603 = vmatpush.msra.mxu0 %v2583
        %2604 = vmatmul.f32.gmra.mxu0 %v2586
        %v2605 = vpop.f32.mrf.mxu0
        %v2606 = vadd.f32 0.0, %v2605
        %2607 = vdwg.mxu0
        %v2609 = vsel %vm1118, %v2606, 0
        %2611 = vmatpush.msra.mxu0 0.0
        %2612 = vmatpush.msra.mxu0 0.0
        %2613 = vmatpush.msra.mxu0 0.0
        %2614 = vmatpush.msra.mxu0 0.0
        %2615 = vmatpush.msra.mxu0 0.0
        %2616 = vmatpush.msra.mxu0 0.0
        %2617 = vmatpush.msra.mxu0 0.0
        %2618 = vmatpush.msra.mxu0 0.0
        %2619 = vmatpush.msra.mxu0 0.0
        %2620 = vmatpush.msra.mxu0 0.0
        %2621 = vmatpush.msra.mxu0 0.0
        %2622 = vmatpush.msra.mxu0 0.0
        %2623 = vmatpush.msra.mxu0 0.0
        %2624 = vmatpush.msra.mxu0 0.0
        %2625 = vmatpush.msra.mxu0 0.0
        %2626 = vmatpush.msra.mxu0 %v2270
        %2627 = vmatmul.f32.gmra.mxu0 %v2609
        %v2628 = vpop.f32.mrf.mxu0
        %v2629 = vadd.f32 0.0, %v2628
        %2630 = vdwg.mxu0
        %v2631 = vadd.f32 %v2540, %v2629
        %v2632 = vperm.slane %v1034, 0
        %v2633 = vadd.f32 %v2631, %v2632
        %v2634 = vadd.f32 %v2206, %v2633
        %v2635 = vsel %vm1042, %v2634, 0.0
        %2636 = vadd.xlane.f32.xlu0 %v2635
        %v2637 = vpop.xlane.xlu0 %2636
        %v2638 = vmul.f32 %v2637, %v1052
        %v2639 = vsub.f32 %v2634, %v2638
        %v2640 = vmul.f32 %v2639, %v2639
        %v2641 = vsel %vm1042, %v2640, 0.0
        %2642 = vadd.xlane.f32.xlu0 %v2641
        %v2643 = vpop.xlane.xlu0 %2642
        %v2644 = vmul.f32 %v2643, %v1052
        %v2645 = vadd.f32 %v2644, 1e-05
        %v2646 = vrsqrt.pop %v2645
        %v2647 = vmul.f32 %v2646, %v2645
        %v2648 = vmul.f32 %v2647, %v2646
        %v2649 = vmul.f32 0.5, %v2648
        %v2650 = vsub.f32 1.5, %v2649
        %v2651 = vmul.f32 %v2646, %v2650
        %vm2652 = vweird.f32 %v2645
        %vm2653 = vweird.f32 %v2646
        %vm2654 = vmor %vm2652, %vm2653
        %v2655 = vsel %vm2654, %v2646, %v2651
        %v2656 = vmul.f32 %v2639, %v2655
        %v2657 = vperm.slane %v1035, 0
        %v2658 = vmul.f32 %v2656, %v2657
        %v2659 = vperm.slane %v1036, 0
        %v2660 = vadd.f32 %v2658, %v2659
        %v2661 = vld [vmem:[%s51] sm:$0xff]
        %v2662 = vld [vmem:[%s51 + $0x8] sm:$0xff]
        %v2663 = vld [vmem:[%s51 + $0x10] sm:$0xff]
        %v2664 = vld [vmem:[%s51 + $0x18] sm:$0xff]
        %v2665 = vperm.slane %v1037, 0
        %v2667 = vsel %vm1042, %v2660, 0
        %2669 = vmatpush.msra.mxu0 0.0
        %2670 = vmatpush.msra.mxu0 0.0
        %2671 = vmatpush.msra.mxu0 0.0
        %2672 = vmatpush.msra.mxu0 0.0
        %2673 = vmatpush.msra.mxu0 0.0
        %2674 = vmatpush.msra.mxu0 0.0
        %2675 = vmatpush.msra.mxu0 0.0
        %2676 = vmatpush.msra.mxu0 0.0
        %2677 = vmatpush.msra.mxu0 0.0
        %2678 = vmatpush.msra.mxu0 0.0
        %2679 = vmatpush.msra.mxu0 0.0
        %2680 = vmatpush.msra.mxu0 0.0
        %2681 = vmatpush.msra.mxu0 %v2664
        %2682 = vmatpush.msra.mxu0 %v2663
        %2683 = vmatpush.msra.mxu0 %v2662
        %2684 = vmatpush.msra.mxu0 %v2661
        %2685 = vmatmul.f32.gmra.mxu0 %v2667
        %v2686 = vpop.f32.mrf.mxu0
        %v2687 = vadd.f32 %v2665, %v2686
        %2688 = vdwg.mxu0
        %v2689 = vmul.f32 %v2687, 0.5
        %v2690 = vmul.f32 %v2687, 0.044715
        %v2691 = vmul.f32 %v2690, %v2687
        %v2692 = vmul.f32 %v2691, %v2687
        %v2693 = vadd.f32 %v2687, %v2692
        %v2694 = vmul.f32 %v2693, 0.7978845
        %v2695 = vtanh.pop %v2694
        %v2696 = vadd.f32 %v2695, 1.0
        %v2697 = vmul.f32 %v2689, %v2696
        %v2698 = vld [vmem:[%s55] sm:$0xff]
        %v2699 = vld [vmem:[%s55 + $0x8] sm:$0xff]
        %v2700 = vld [vmem:[%s55 + $0x10] sm:$0xff]
        %v2701 = vld [vmem:[%s55 + $0x18] sm:$0xff]
        %v2702 = vld [vmem:[%s55 + $0x20] sm:$0xff]
        %v2703 = vld [vmem:[%s55 + $0x28] sm:$0xff]
        %v2704 = vld [vmem:[%s55 + $0x30] sm:$0xff]
        %v2705 = vld [vmem:[%s55 + $0x38] sm:$0xff]
        %v2706 = vperm.slane %v1038, 0
        %v2708 = vsel %vm1597, %v2697, 0
        %2710 = vmatpush.msra.mxu0 0.0
        %2711 = vmatpush.msra.mxu0 0.0
        %2712 = vmatpush.msra.mxu0 0.0
        %2713 = vmatpush.msra.mxu0 0.0
        %2714 = vmatpush.msra.mxu0 0.0
        %2715 = vmatpush.msra.mxu0 0.0
        %2716 = vmatpush.msra.mxu0 0.0
        %2717 = vmatpush.msra.mxu0 0.0
        %2718 = vmatpush.msra.mxu0 %v2705
        %2719 = vmatpush.msra.mxu0 %v2704
        %2720 = vmatpush.msra.mxu0 %v2703
        %2721 = vmatpush.msra.mxu0 %v2702
        %2722 = vmatpush.msra.mxu0 %v2701
        %2723 = vmatpush.msra.mxu0 %v2700
        %2724 = vmatpush.msra.mxu0 %v2699
        %2725 = vmatpush.msra.mxu0 %v2698
        %2726 = vmatmul.f32.gmra.mxu0 %v2708
        %v2727 = vpop.f32.mrf.mxu0
        %v2728 = vadd.f32 %v2706, %v2727
        %2729 = vdwg.mxu0
        %v2730 = vadd.f32 %v2634, %v2728
        %v2731 = vsel %vm1042, %v2730, 0.0
        %2732 = vadd.xlane.f32.xlu0 %v2731
        %v2733 = vpop.xlane.xlu0 %2732
        %v2734 = vmul.f32 %v2733, %v1052
        %v2735 = vsub.f32 %v2730, %v2734
        %v2736 = vmul.f32 %v2735, %v2735
        %v2737 = vsel %vm1042, %v2736, 0.0
        %2738 = vadd.xlane.f32.xlu0 %v2737
        %v2739 = vpop.xlane.xlu0 %2738
        %v2740 = vmul.f32 %v2739, %v1052
        %v2741 = vadd.f32 %v2740, 1e-05
        %v2742 = vrsqrt.pop %v2741
        %v2743 = vmul.f32 %v2742, %v2741
        %v2744 = vmul.f32 %v2743, %v2742
        %v2745 = vmul.f32 0.5, %v2744
        %v2746 = vsub.f32 1.5, %v2745
        %v2747 = vmul.f32 %v2742, %v2746
        %vm2748 = vweird.f32 %v2741
        %vm2749 = vweird.f32 %v2742
        %vm2750 = vmor %vm2748, %vm2749
        %v2751 = vsel %vm2750, %v2742, %v2747
        %v2752 = vmul.f32 %v2735, %v2751
        %v2753 = vperm.slane %v1031, 1
        %v2754 = vmul.f32 %v2752, %v2753
        %v2755 = vperm.slane %v1032, 1
        %v2756 = vadd.f32 %v2754, %v2755
        %s2757 = scalar_lea.vmem %s39, 32
        %v2758 = vld [vmem:[%s2757] sm:$0xff]
        %v2759 = vld [vmem:[%s2757 + $0x8] sm:$0xff]
        %v2760 = vld [vmem:[%s2757 + $0x10] sm:$0xff]
        %v2761 = vld [vmem:[%s2757 + $0x18] sm:$0xff]
        %v2762 = vperm.slane %v1033, 1
        %v2764 = vsel %vm1042, %v2756, 0
        %2766 = vmatpush.msra.mxu0 0.0
        %2767 = vmatpush.msra.mxu0 0.0
        %2768 = vmatpush.msra.mxu0 0.0
        %2769 = vmatpush.msra.mxu0 0.0
        %2770 = vmatpush.msra.mxu0 0.0
        %2771 = vmatpush.msra.mxu0 0.0
        %2772 = vmatpush.msra.mxu0 0.0
        %2773 = vmatpush.msra.mxu0 0.0
        %2774 = vmatpush.msra.mxu0 0.0
        %2775 = vmatpush.msra.mxu0 0.0
        %2776 = vmatpush.msra.mxu0 0.0
        %2777 = vmatpush.msra.mxu0 0.0
        %2778 = vmatpush.msra.mxu0 %v2761
        %2779 = vmatpush.msra.mxu0 %v2760
        %2780 = vmatpush.msra.mxu0 %v2759
        %2781 = vmatpush.msra.mxu0 %v2758
        %2782 = vmatmul.f32.gmra.mxu0 %v2764
        %v2783 = vpop.f32.mrf.mxu0
        %v2784 = vadd.f32 %v2762, %v2783
        %2785 = vdwg.mxu0
        %s2786 = scalar_lea.vmem %s43, 32
        %v2787 = vld [vmem:[%s2786] sm:$0xff]
        %v2788 = vld [vmem:[%s2786 + $0x8] sm:$0xff]
        %v2789 = vld [vmem:[%s2786 + $0x10] sm:$0xff]
        %v2790 = vld [vmem:[%s2786 + $0x18] sm:$0xff]
        %2792 = vrot.lane.b32.xlu0 %v2784, 96
        %v2793 = vpop.permute.xlu0 %2792
        %v2794 = vsel %vm1118, %v2784, 0
        %v2796 = vsel %vm1118, %v2793, 0
        %2798 = vmatpush.xpose.msra.mxu0 0.0
        %2799 = vmatpush.xpose.msra.mxu0 0.0
        %2800 = vmatpush.xpose.msra.mxu0 0.0
        %2801 = vmatpush.xpose.msra.mxu0 0.0
        %2802 = vmatpush.xpose.msra.mxu0 0.0
        %2803 = vmatpush.xpose.msra.mxu0 0.0
        %2804 = vmatpush.xpose.msra.mxu0 0.0
        %2805 = vmatpush.xpose.msra.mxu0 0.0
        %2806 = vmatpush.xpose.msra.mxu0 0.0
        %2807 = vmatpush.xpose.msra.mxu0 0.0
        %2808 = vmatpush.xpose.msra.mxu0 0.0
        %2809 = vmatpush.xpose.msra.mxu0 0.0
        %2810 = vmatpush.xpose.msra.mxu0 0.0
        %2811 = vmatpush.xpose.msra.mxu0 0.0
        %2812 = vmatpush.xpose.msra.mxu0 0.0
        %2813 = vmatpush.xpose.msra.mxu0 %v2796
        %2814 = vmatmul.f32.gmra.mxu0 %v2794
        %v2815 = vpop.f32.mrf.mxu0
        %v2816 = vadd.f32 0.0, %v2815
        %2817 = vdwg.mxu0
        %v2818 = vmul.f32 %v2816, 0.35355338
        %v2819 = vadd.f32 %v2818, %v2212
        %v2820 = vsel %vm1118, %v2819, -inf
        %2821 = vmax.xlane.f32.xlu0 %v2820
        %v2822 = vpop.xlane.xlu0 %2821
        %v2823 = vsub.f32 %v2819, %v2822
        %v2824 = vmul.f32 %v2823, 1.442695
        %v2825 = vpow.pop %v2824
        %v2826 = vsel %vm1118, %v2825, 0.0
        %2827 = vadd.xlane.f32.xlu0 %v2826
        %v2828 = vpop.xlane.xlu0 %2827
        %v2829 = vrcp.pop %v2828
        %v2830 = vmul.f32 %v2825, %v2829
        %2831 = vrot.lane.b32.xlu0 %v2784, 64
        %v2832 = vpop.permute.xlu0 %2831
        %v2835 = vsel %vm1118, %v2830, 0
        %2837 = vmatpush.msra.mxu0 0.0
        %2838 = vmatpush.msra.mxu0 0.0
        %2839 = vmatpush.msra.mxu0 0.0
        %2840 = vmatpush.msra.mxu0 0.0
        %2841 = vmatpush.msra.mxu0 0.0
        %2842 = vmatpush.msra.mxu0 0.0
        %2843 = vmatpush.msra.mxu0 0.0
        %2844 = vmatpush.msra.mxu0 0.0
        %2845 = vmatpush.msra.mxu0 0.0
        %2846 = vmatpush.msra.mxu0 0.0
        %2847 = vmatpush.msra.mxu0 0.0
        %2848 = vmatpush.msra.mxu0 0.0
        %2849 = vmatpush.msra.mxu0 0.0
        %2850 = vmatpush.msra.mxu0 0.0
        %2851 = vmatpush.msra.mxu0 0.0
        %2852 = vmatpush.msra.mxu0 %v2832
        %2853 = vmatmul.f32.gmra.mxu0 %v2835
        %v2854 = vpop.f32.mrf.mxu0
        %v2855 = vadd.f32 0.0, %v2854
        %2856 = vdwg.mxu0
        %2857 = vrot.lane.b32.xlu0 %v2784, 120
        %v2858 = vpop.permute.xlu0 %2857
        %2859 = vrot.lane.b32.xlu0 %v2784, 88
        %v2860 = vpop.permute.xlu0 %2859
        %v2861 = vsel %vm1118, %v2858, 0
        %v2863 = vsel %vm1118, %v2860, 0
        %2865 = vmatpush.xpose.msra.mxu0 0.0
        %2866 = vmatpush.xpose.msra.mxu0 0.0
        %2867 = vmatpush.xpose.msra.mxu0 0.0
        %2868 = vmatpush.xpose.msra.mxu0 0.0
        %2869 = vmatpush.xpose.msra.mxu0 0.0
        %2870 = vmatpush.xpose.msra.mxu0 0.0
        %2871 = vmatpush.xpose.msra.mxu0 0.0
        %2872 = vmatpush.xpose.msra.mxu0 0.0
        %2873 = vmatpush.xpose.msra.mxu0 0.0
        %2874 = vmatpush.xpose.msra.mxu0 0.0
        %2875 = vmatpush.xpose.msra.mxu0 0.0
        %2876 = vmatpush.xpose.msra.mxu0 0.0
        %2877 = vmatpush.xpose.msra.mxu0 0.0
        %2878 = vmatpush.xpose.msra.mxu0 0.0
        %2879 = vmatpush.xpose.msra.mxu0 0.0
        %2880 = vmatpush.xpose.msra.mxu0 %v2863
        %2881 = vmatmul.f32.gmra.mxu0 %v2861
        %v2882 = vpop.f32.mrf.mxu0
        %v2883 = vadd.f32 0.0, %v2882
        %2884 = vdwg.mxu0
        %v2885 = vmul.f32 %v2883, 0.35355338
        %v2886 = vadd.f32 %v2885, %v2212
        %v2887 = vsel %vm1118, %v2886, -inf
        %2888 = vmax.xlane.f32.xlu0 %v2887
        %v2889 = vpop.xlane.xlu0 %2888
        %v2890 = vsub.f32 %v2886, %v2889
        %v2891 = vmul.f32 %v2890, 1.442695
        %v2892 = vpow.pop %v2891
        %v2893 = vsel %vm1118, %v2892, 0.0
        %2894 = vadd.xlane.f32.xlu0 %v2893
        %v2895 = vpop.xlane.xlu0 %2894
        %v2896 = vrcp.pop %v2895
        %v2897 = vmul.f32 %v2892, %v2896
        %2898 = vrot.lane.b32.xlu0 %v2784, 56
        %v2899 = vpop.permute.xlu0 %2898
        %v2902 = vsel %vm1118, %v2897, 0
        %2904 = vmatpush.msra.mxu0 0.0
        %2905 = vmatpush.msra.mxu0 0.0
        %2906 = vmatpush.msra.mxu0 0.0
        %2907 = vmatpush.msra.mxu0 0.0
        %2908 = vmatpush.msra.mxu0 0.0
        %2909 = vmatpush.msra.mxu0 0.0
        %2910 = vmatpush.msra.mxu0 0.0
        %2911 = vmatpush.msra.mxu0 0.0
        %2912 = vmatpush.msra.mxu0 0.0
        %2913 = vmatpush.msra.mxu0 0.0
        %2914 = vmatpush.msra.mxu0 0.0
        %2915 = vmatpush.msra.mxu0 0.0
        %2916 = vmatpush.msra.mxu0 0.0
        %2917 = vmatpush.msra.mxu0 0.0
        %2918 = vmatpush.msra.mxu0 0.0
        %2919 = vmatpush.msra.mxu0 %v2899
        %2920 = vmatmul.f32.gmra.mxu0 %v2902
        %v2921 = vpop.f32.mrf.mxu0
        %v2922 = vadd.f32 0.0, %v2921
        %2923 = vdwg.mxu0
        %v2925 = vsel %vm1118, %v2922, 0
        %2927 = vmatpush.msra.mxu0 0.0
        %2928 = vmatpush.msra.mxu0 0.0
        %2929 = vmatpush.msra.mxu0 0.0
        %2930 = vmatpush.msra.mxu0 0.0
        %2931 = vmatpush.msra.mxu0 0.0
        %2932 = vmatpush.msra.mxu0 0.0
        %2933 = vmatpush.msra.mxu0 0.0
        %2934 = vmatpush.msra.mxu0 0.0
        %2935 = vmatpush.msra.mxu0 0.0
        %2936 = vmatpush.msra.mxu0 0.0
        %2937 = vmatpush.msra.mxu0 0.0
        %2938 = vmatpush.msra.mxu0 0.0
        %2939 = vmatpush.msra.mxu0 0.0
        %2940 = vmatpush.msra.mxu0 0.0
        %2941 = vmatpush.msra.mxu0 0.0
        %2942 = vmatpush.msra.mxu0 %v2788
        %2943 = vmatmul.f32.gmra.mxu0 %v2925
        %v2944 = vpop.f32.mrf.mxu0
        %v2945 = vadd.f32 0.0, %v2944
        %2946 = vdwg.mxu0
        %v2948 = vsel %vm1118, %v2855, 0
        %2950 = vmatpush.msra.mxu0 0.0
        %2951 = vmatpush.msra.mxu0 0.0
        %2952 = vmatpush.msra.mxu0 0.0
        %2953 = vmatpush.msra.mxu0 0.0
        %2954 = vmatpush.msra.mxu0 0.0
        %2955 = vmatpush.msra.mxu0 0.0
        %2956 = vmatpush.msra.mxu0 0.0
        %2957 = vmatpush.msra.mxu0 0.0
        %2958 = vmatpush.msra.mxu0 0.0
        %2959 = vmatpush.msra.mxu0 0.0
        %2960 = vmatpush.msra.mxu0 0.0
        %2961 = vmatpush.msra.mxu0 0.0
        %2962 = vmatpush.msra.mxu0 0.0
        %2963 = vmatpush.msra.mxu0 0.0
        %2964 = vmatpush.msra.mxu0 0.0
        %2965 = vmatpush.msra.mxu0 %v2787
        %2966 = vmatmul.f32.gmra.mxu0 %v2948
        %v2967 = vpop.f32.mrf.mxu0
        %v2968 = vadd.f32 %v2945, %v2967
        %2969 = vdwg.mxu0
        %2970 = vrot.lane.b32.xlu0 %v2784, 112
        %v2971 = vpop.permute.xlu0 %2970
        %2972 = vrot.lane.b32.xlu0 %v2784, 80
        %v2973 = vpop.permute.xlu0 %2972
        %v2974 = vsel %vm1118, %v2971, 0
        %v2976 = vsel %vm1118, %v2973, 0
        %2978 = vmatpush.xpose.msra.mxu0 0.0
        %2979 = vmatpush.xpose.msra.mxu0 0.0
        %2980 = vmatpush.xpose.msra.mxu0 0.0
        %2981 = vmatpush.xpose.msra.mxu0 0.0
        %2982 = vmatpush.xpose.msra.mxu0 0.0
        %2983 = vmatpush.xpose.msra.mxu0 0.0
        %2984 = vmatpush.xpose.msra.mxu0 0.0
        %2985 = vmatpush.xpose.msra.mxu0 0.0
        %2986 = vmatpush.xpose.msra.mxu0 0.0
        %2987 = vmatpush.xpose.msra.mxu0 0.0
        %2988 = vmatpush.xpose.msra.mxu0 0.0
        %2989 = vmatpush.xpose.msra.mxu0 0.0
        %2990 = vmatpush.xpose.msra.mxu0 0.0
        %2991 = vmatpush.xpose.msra.mxu0 0.0
        %2992 = vmatpush.xpose.msra.mxu0 0.0
        %2993 = vmatpush.xpose.msra.mxu0 %v2976
        %2994 = vmatmul.f32.gmra.mxu0 %v2974
        %v2995 = vpop.f32.mrf.mxu0
        %v2996 = vadd.f32 0.0, %v2995
        %2997 = vdwg.mxu0
        %v2998 = vmul.f32 %v2996, 0.35355338
        %v2999 = vadd.f32 %v2998, %v2212
        %v3000 = vsel %vm1118, %v2999, -inf
        %3001 = vmax.xlane.f32.xlu0 %v3000
        %v3002 = vpop.xlane.xlu0 %3001
        %v3003 = vsub.f32 %v2999, %v3002
        %v3004 = vmul.f32 %v3003, 1.442695
        %v3005 = vpow.pop %v3004
        %v3006 = vsel %vm1118, %v3005, 0.0
        %3007 = vadd.xlane.f32.xlu0 %v3006
        %v3008 = vpop.xlane.xlu0 %3007
        %v3009 = vrcp.pop %v3008
        %v3010 = vmul.f32 %v3005, %v3009
        %3011 = vrot.lane.b32.xlu0 %v2784, 48
        %v3012 = vpop.permute.xlu0 %3011
        %v3015 = vsel %vm1118, %v3010, 0
        %3017 = vmatpush.msra.mxu0 0.0
        %3018 = vmatpush.msra.mxu0 0.0
        %3019 = vmatpush.msra.mxu0 0.0
        %3020 = vmatpush.msra.mxu0 0.0
        %3021 = vmatpush.msra.mxu0 0.0
        %3022 = vmatpush.msra.mxu0 0.0
        %3023 = vmatpush.msra.mxu0 0.0
        %3024 = vmatpush.msra.mxu0 0.0
        %3025 = vmatpush.msra.mxu0 0.0
        %3026 = vmatpush.msra.mxu0 0.0
        %3027 = vmatpush.msra.mxu0 0.0
        %3028 = vmatpush.msra.mxu0 0.0
        %3029 = vmatpush.msra.mxu0 0.0
        %3030 = vmatpush.msra.mxu0 0.0
        %3031 = vmatpush.msra.mxu0 0.0
        %3032 = vmatpush.msra.mxu0 %v3012
        %3033 = vmatmul.f32.gmra.mxu0 %v3015
        %v3034 = vpop.f32.mrf.mxu0
        %v3035 = vadd.f32 0.0, %v3034
        %3036 = vdwg.mxu0
        %v3038 = vsel %vm1118, %v3035, 0
        %3040 = vmatpush.msra.mxu0 0.0
        %3041 = vmatpush.msra.mxu0 0.0
        %3042 = vmatpush.msra.mxu0 0.0
        %3043 = vmatpush.msra.mxu0 0.0
        %3044 = vmatpush.msra.mxu0 0.0
        %3045 = vmatpush.msra.mxu0 0.0
        %3046 = vmatpush.msra.mxu0 0.0
        %3047 = vmatpush.msra.mxu0 0.0
        %3048 = vmatpush.msra.mxu0 0.0
        %3049 = vmatpush.msra.mxu0 0.0
        %3050 = vmatpush.msra.mxu0 0.0
        %3051 = vmatpush.msra.mxu0 0.0
        %3052 = vmatpush.msra.mxu0 0.0
        %3053 = vmatpush.msra.mxu0 0.0
        %3054 = vmatpush.msra.mxu0 0.0
        %3055 = vmatpush.msra.mxu0 %v2789
        %3056 = vmatmul.f32.gmra.mxu0 %v3038
        %v3057 = vpop.f32.mrf.mxu0
        %v3058 = vadd.f32 0.0, %v3057
        %3059 = vdwg.mxu0
        %v3060 = vadd.f32 %v2968, %v3058
        %3061 = vrot.lane.b32.xlu0 %v2784, 104
        %v3062 = vpop.permute.xlu0 %3061
        %3063 = vrot.lane.b32.xlu0 %v2784, 72
        %v3064 = vpop.permute.xlu0 %3063
        %v3065 = vsel %vm1118, %v3062, 0
        %v3067 = vsel %vm1118, %v3064, 0
        %3069 = vmatpush.xpose.msra.mxu0 0.0
        %3070 = vmatpush.xpose.msra.mxu0 0.0
        %3071 = vmatpush.xpose.msra.mxu0 0.0
        %3072 = vmatpush.xpose.msra.mxu0 0.0
        %3073 = vmatpush.xpose.msra.mxu0 0.0
        %3074 = vmatpush.xpose.msra.mxu0 0.0
        %3075 = vmatpush.xpose.msra.mxu0 0.0
        %3076 = vmatpush.xpose.msra.mxu0 0.0
        %3077 = vmatpush.xpose.msra.mxu0 0.0
        %3078 = vmatpush.xpose.msra.mxu0 0.0
        %3079 = vmatpush.xpose.msra.mxu0 0.0
        %3080 = vmatpush.xpose.msra.mxu0 0.0
        %3081 = vmatpush.xpose.msra.mxu0 0.0
        %3082 = vmatpush.xpose.msra.mxu0 0.0
        %3083 = vmatpush.xpose.msra.mxu0 0.0
        %3084 = vmatpush.xpose.msra.mxu0 %v3067
        %3085 = vmatmul.f32.gmra.mxu0 %v3065
        %v3086 = vpop.f32.mrf.mxu0
        %v3087 = vadd.f32 0.0, %v3086
        %3088 = vdwg.mxu0
        %v3089 = vmul.f32 %v3087, 0.35355338
        %v3090 = vadd.f32 %v3089, %v2212
        %v3091 = vsel %vm1118, %v3090, -inf
        %3092 = vmax.xlane.f32.xlu0 %v3091
        %v3093 = vpop.xlane.xlu0 %3092
        %v3094 = vsub.f32 %v3090, %v3093
        %v3095 = vmul.f32 %v3094, 1.442695
        %v3096 = vpow.pop %v3095
        %v3097 = vsel %vm1118, %v3096, 0.0
        %3098 = vadd.xlane.f32.xlu0 %v3097
        %v3099 = vpop.xlane.xlu0 %3098
        %v3100 = vrcp.pop %v3099
        %v3101 = vmul.f32 %v3096, %v3100
        %3102 = vrot.lane.b32.xlu0 %v2784, 40
        %v3103 = vpop.permute.xlu0 %3102
        %v3106 = vsel %vm1118, %v3101, 0
        %3108 = vmatpush.msra.mxu0 0.0
        %3109 = vmatpush.msra.mxu0 0.0
        %3110 = vmatpush.msra.mxu0 0.0
        %3111 = vmatpush.msra.mxu0 0.0
        %3112 = vmatpush.msra.mxu0 0.0
        %3113 = vmatpush.msra.mxu0 0.0
        %3114 = vmatpush.msra.mxu0 0.0
        %3115 = vmatpush.msra.mxu0 0.0
        %3116 = vmatpush.msra.mxu0 0.0
        %3117 = vmatpush.msra.mxu0 0.0
        %3118 = vmatpush.msra.mxu0 0.0
        %3119 = vmatpush.msra.mxu0 0.0
        %3120 = vmatpush.msra.mxu0 0.0
        %3121 = vmatpush.msra.mxu0 0.0
        %3122 = vmatpush.msra.mxu0 0.0
        %3123 = vmatpush.msra.mxu0 %v3103
        %3124 = vmatmul.f32.gmra.mxu0 %v3106
        %v3125 = vpop.f32.mrf.mxu0
        %v3126 = vadd.f32 0.0, %v3125
        %3127 = vdwg.mxu0
        %v3129 = vsel %vm1118, %v3126, 0
        %3131 = vmatpush.msra.mxu0 0.0
        %3132 = vmatpush.msra.mxu0 0.0
        %3133 = vmatpush.msra.mxu0 0.0
        %3134 = vmatpush.msra.mxu0 0.0
        %3135 = vmatpush.msra.mxu0 0.0
        %3136 = vmatpush.msra.mxu0 0.0
        %3137 = vmatpush.msra.mxu0 0.0
        %3138 = vmatpush.msra.mxu0 0.0
        %3139 = vmatpush.msra.mxu0 0.0
        %3140 = vmatpush.msra.mxu0 0.0
        %3141 = vmatpush.msra.mxu0 0.0
        %3142 = vmatpush.msra.mxu0 0.0
        %3143 = vmatpush.msra.mxu0 0.0
        %3144 = vmatpush.msra.mxu0 0.0
        %3145 = vmatpush.msra.mxu0 0.0
        %3146 = vmatpush.msra.mxu0 %v2790
        %3147 = vmatmul.f32.gmra.mxu0 %v3129
        %v3148 = vpop.f32.mrf.mxu0
        %v3149 = vadd.f32 0.0, %v3148
        %3150 = vdwg.mxu0
        %v3151 = vadd.f32 %v3060, %v3149
        %v3152 = vperm.slane %v1034, 1
        %v3153 = vadd.f32 %v3151, %v3152
        %v3154 = vadd.f32 %v2730, %v3153
        %v3155 = vsel %vm1042, %v3154, 0.0
        %3156 = vadd.xlane.f32.xlu0 %v3155
        %v3157 = vpop.xlane.xlu0 %3156
        %v3158 = vmul.f32 %v3157, %v1052
        %v3159 = vsub.f32 %v3154, %v3158
        %v3160 = vmul.f32 %v3159, %v3159
        %v3161 = vsel %vm1042, %v3160, 0.0
        %3162 = vadd.xlane.f32.xlu0 %v3161
        %v3163 = vpop.xlane.xlu0 %3162
        %v3164 = vmul.f32 %v3163, %v1052
        %v3165 = vadd.f32 %v3164, 1e-05
        %v3166 = vrsqrt.pop %v3165
        %v3167 = vmul.f32 %v3166, %v3165
        %v3168 = vmul.f32 %v3167, %v3166
        %v3169 = vmul.f32 0.5, %v3168
        %v3170 = vsub.f32 1.5, %v3169
        %v3171 = vmul.f32 %v3166, %v3170
        %vm3172 = vweird.f32 %v3165
        %vm3173 = vweird.f32 %v3166
        %vm3174 = vmor %vm3172, %vm3173
        %v3175 = vsel %vm3174, %v3166, %v3171
        %v3176 = vmul.f32 %v3159, %v3175
        %v3177 = vperm.slane %v1035, 1
        %v3178 = vmul.f32 %v3176, %v3177
        %v3179 = vperm.slane %v1036, 1
        %v3180 = vadd.f32 %v3178, %v3179
        %s3181 = scalar_lea.vmem %s51, 32
        %v3182 = vld [vmem:[%s3181] sm:$0xff]
        %v3183 = vld [vmem:[%s3181 + $0x8] sm:$0xff]
        %v3184 = vld [vmem:[%s3181 + $0x10] sm:$0xff]
        %v3185 = vld [vmem:[%s3181 + $0x18] sm:$0xff]
        %v3186 = vperm.slane %v1037, 1
        %v3188 = vsel %vm1042, %v3180, 0
        %3190 = vmatpush.msra.mxu0 0.0
        %3191 = vmatpush.msra.mxu0 0.0
        %3192 = vmatpush.msra.mxu0 0.0
        %3193 = vmatpush.msra.mxu0 0.0
        %3194 = vmatpush.msra.mxu0 0.0
        %3195 = vmatpush.msra.mxu0 0.0
        %3196 = vmatpush.msra.mxu0 0.0
        %3197 = vmatpush.msra.mxu0 0.0
        %3198 = vmatpush.msra.mxu0 0.0
        %3199 = vmatpush.msra.mxu0 0.0
        %3200 = vmatpush.msra.mxu0 0.0
        %3201 = vmatpush.msra.mxu0 0.0
        %3202 = vmatpush.msra.mxu0 %v3185
        %3203 = vmatpush.msra.mxu0 %v3184
        %3204 = vmatpush.msra.mxu0 %v3183
        %3205 = vmatpush.msra.mxu0 %v3182
        %3206 = vmatmul.f32.gmra.mxu0 %v3188
        %v3207 = vpop.f32.mrf.mxu0
        %v3208 = vadd.f32 %v3186, %v3207
        %3209 = vdwg.mxu0
        %v3210 = vmul.f32 %v3208, 0.5
        %v3211 = vmul.f32 %v3208, 0.044715
        %v3212 = vmul.f32 %v3211, %v3208
        %v3213 = vmul.f32 %v3212, %v3208
        %v3214 = vadd.f32 %v3208, %v3213
        %v3215 = vmul.f32 %v3214, 0.7978845
        %v3216 = vtanh.pop %v3215
        %v3217 = vadd.f32 %v3216, 1.0
        %v3218 = vmul.f32 %v3210, %v3217
        %s3219 = scalar_lea.vmem %s55, 64
        %v3220 = vld [vmem:[%s3219] sm:$0xff]
        %v3221 = vld [vmem:[%s3219 + $0x8] sm:$0xff]
        %v3222 = vld [vmem:[%s3219 + $0x10] sm:$0xff]
        %v3223 = vld [vmem:[%s3219 + $0x18] sm:$0xff]
        %v3224 = vld [vmem:[%s3219 + $0x20] sm:$0xff]
        %v3225 = vld [vmem:[%s3219 + $0x28] sm:$0xff]
        %v3226 = vld [vmem:[%s3219 + $0x30] sm:$0xff]
        %v3227 = vld [vmem:[%s3219 + $0x38] sm:$0xff]
        %v3228 = vperm.slane %v1038, 1
        %v3230 = vsel %vm1597, %v3218, 0
        %3232 = vmatpush.msra.mxu0 0.0
        %3233 = vmatpush.msra.mxu0 0.0
        %3234 = vmatpush.msra.mxu0 0.0
        %3235 = vmatpush.msra.mxu0 0.0
        %3236 = vmatpush.msra.mxu0 0.0
        %3237 = vmatpush.msra.mxu0 0.0
        %3238 = vmatpush.msra.mxu0 0.0
        %3239 = vmatpush.msra.mxu0 0.0
        %3240 = vmatpush.msra.mxu0 %v3227
        %3241 = vmatpush.msra.mxu0 %v3226
        %3242 = vmatpush.msra.mxu0 %v3225
        %3243 = vmatpush.msra.mxu0 %v3224
        %3244 = vmatpush.msra.mxu0 %v3223
        %3245 = vmatpush.msra.mxu0 %v3222
        %3246 = vmatpush.msra.mxu0 %v3221
        %3247 = vmatpush.msra.mxu0 %v3220
        %3248 = vmatmul.f32.gmra.mxu0 %v3230
        %v3249 = vpop.f32.mrf.mxu0
        %v3250 = vadd.f32 %v3228, %v3249
        %3251 = vdwg.mxu0
        %v3252 = vadd.f32 %v3154, %v3250
        %v3253 = vld [vmem:[%s59] sm:$0x1]
        %v3254 = vld [vmem:[%s61] sm:$0x1]
        %v3255 = vsel %vm1042, %v3252, 0.0
        %3256 = vadd.xlane.f32.xlu0 %v3255
        %v3257 = vpop.xlane.xlu0 %3256
        %v3258 = vmul.f32 %v3257, %v1052
        %v3259 = vsub.f32 %v3252, %v3258
        %v3260 = vmul.f32 %v3259, %v3259
        %v3261 = vsel %vm1042, %v3260, 0.0
        %3262 = vadd.xlane.f32.xlu0 %v3261
        %v3263 = vpop.xlane.xlu0 %3262
        %v3264 = vmul.f32 %v3263, %v1052
        %v3265 = vadd.f32 %v3264, 1e-05
        %v3266 = vrsqrt.pop %v3265
        %v3267 = vmul.f32 %v3266, %v3265
        %v3268 = vmul.f32 %v3267, %v3266
        %v3269 = vmul.f32 0.5, %v3268
        %v3270 = vsub.f32 1.5, %v3269
        %v3271 = vmul.f32 %v3266, %v3270
        %vm3272 = vweird.f32 %v3265
        %vm3273 = vweird.f32 %v3266
        %vm3274 = vmor %vm3272, %vm3273
        %v3275 = vsel %vm3274, %v3266, %v3271
        %v3276 = vmul.f32 %v3259, %v3275
        %v3278 = vperm.slane %v3253, 0
        %v3280 = vmul.f32 %v3276, %v3278
        %v3282 = vperm.slane %v3254, 0
        %v3284 = vadd.f32 %v3280, %v3282
        %v3285 = vld [vmem:[%s63] sm:$0xff]
        %v3286 = vld [vmem:[%s63 + $0x8] sm:$0xff]
        %v3287 = vld [vmem:[%s63 + $0x10] sm:$0xff]
        %v3288 = vld [vmem:[%s63 + $0x18] sm:$0xff]
        %v3289 = vld [vmem:[%s65] sm:$0x1]
        %v3291 = vperm.slane %v3289, 0
        %v3294 = vsel %vm1042, %v3284, 0
        %3296 = vmatpush.msra.mxu0 0.0
        %3297 = vmatpush.msra.mxu0 0.0
        %3298 = vmatpush.msra.mxu0 0.0
        %3299 = vmatpush.msra.mxu0 0.0
        %3300 = vmatpush.msra.mxu0 0.0
        %3301 = vmatpush.msra.mxu0 0.0
        %3302 = vmatpush.msra.mxu0 0.0
        %3303 = vmatpush.msra.mxu0 0.0
        %3304 = vmatpush.msra.mxu0 0.0
        %3305 = vmatpush.msra.mxu0 0.0
        %3306 = vmatpush.msra.mxu0 0.0
        %3307 = vmatpush.msra.mxu0 0.0
        %3308 = vmatpush.msra.mxu0 %v3288
        %3309 = vmatpush.msra.mxu0 %v3287
        %3310 = vmatpush.msra.mxu0 %v3286
        %3311 = vmatpush.msra.mxu0 %v3285
        %3312 = vmatmul.f32.gmra.mxu0 %v3294
        %v3313 = vpop.f32.mrf.mxu0
        %v3314 = vadd.f32 %v3291, %v3313
        %3315 = vdwg.mxu0
        %vm3316 = vcmask 16384
        %3317 = vst.msk [vmem:[%s1015] sm:$0x1] %vm3316, %v3314
        %s3318 = sand.u32 %s792, 1
        %s3319 = scalar_lea.sflag [#allocation3], %s3318
        %s3320 = sand.u32 %s792, 1
        %s3321 = scalar_lea.vmem [#allocation2], %s3320
        // Predicated region
        $region153: #{bert_gpt2_classifier.1} parent=151 // pred_check
          %p3322 = pneg %p802
        $region154: #{bert_gpt2_classifier.1} parent=151 // pred_check_branch
          %3324 = sbr.rel (%p3322) target = $region156
        $region155: #{bert_gpt2_classifier.1} parent=151 // pred_region
          %3326 = vsyncadd %s3319, 0
          %s3327 = scalar_lea.hbm %s67, %s81
          %s3329 = sshll.u32 %s3321, 4
          %s3330 = int_to_ptr.vmem [resolvable:$true] %s3329
          %s3331 = sshll.u32 %s3327, 4
          %s3332 = int_to_ptr.hbm [resolvable:$true] %s3331
          %3334 = dma.vmem_to_hbm [thread:$0]  %s3330, 16, %s3332, %s3319
        $region156: #{bert_gpt2_classifier.1} parent=151 // pred_fallthru
          _
      $region152: #{bert_gpt2_classifier.1} parent=5 // pred_fallthru
        _
      %p3335 = scmp.le.s32.totalorder 2, %s76
      // Predicated region
      $region157: #{bert_gpt2_classifier.1} parent=5 // pred_check
        %p3336 = pneg %p3335
      $region158: #{bert_gpt2_classifier.1} parent=5 // pred_check_branch
        %3338 = sbr.rel (%p3336) target = $region160
      $region159: #{bert_gpt2_classifier.1} parent=5 // pred_region
        %s3339 = ssub.s32 %s76, 2
        // Predicated region
        $region161: #{bert_gpt2_classifier.1} parent=159 // pred_check
          %p3340 = pneg %p808
        $region162: #{bert_gpt2_classifier.1} parent=159 // pred_check_branch
          %3342 = sbr.rel (%p3340) target = $region164
        $region163: #{bert_gpt2_classifier.1} parent=159 // pred_region
          %s3343 = sand.u32 %s793, 1
          %s3344 = scalar_lea.sflag [#allocation3], %s3343
          %s3345 = sand.u32 %s793, 1
          %s3346 = scalar_lea.vmem [#allocation2], %s3345
          %3348 = dma.done %s3344, 16
        $region164: #{bert_gpt2_classifier.1} parent=159 // pred_fallthru
          _
      $region160: #{bert_gpt2_classifier.1} parent=5 // pred_fallthru
        _
    $region6: #{bert_gpt2_classifier.1} parent=1 // loop_footer
      %s80 = sadd.s32 1, %s76
    $region7: #{bert_gpt2_classifier.1} parent=1 // loop_footer_branch
      %75 = sbr.rel target = $region3
    $region8: #{bert_gpt2_classifier.1} parent=1 // loop_exit
      _
    %3349 = vsyncpa [#allocation3], 1
    %s3350 = scalar_lea.sflag [#allocation3], 1
    %3351 = vsyncpa %s3350, 1

</llo_original>
